<compile_context>
chip_gen: v7x
topology: tpu7x:2x2x1
jax: 0.10.0
libtpu: 0.0.40
codegen_flags: <defaults>
</compile_context>

<pallas_src>
import functools

import jax
import jax.numpy as jnp
from jax.experimental import pallas as pl
from jax.experimental.pallas import tpu as pltpu

Z_DIM = 64          # bottleneck_size (constructor arg z_dim; small for the demo)
HIDDEN = 512        # hidden_neurons (hard-coded in the module)
IN_DIM = 3          # input_size
OUT_DIM = 3         # dim_output
OUT_PAD = 128       # last_conv output padded to a full lane width
NUM_LAYERS = 2      # num_layers
BN_EPS = 1e-5

TM_DEFAULT = 4096   # row tile (points per grid step) -- sweep 2048..4096
TM_MAX = 4096       # cap so TM*tiles stay well under v7x's 64 MiB/TC VMEM
TM_MIN = 128


# ---------------------------------------------------------------------------
# Kernel
# ---------------------------------------------------------------------------
def _decoder_kernel(x_ref, lat_ref,
                    w1_ref, s1_ref, c1_ref,
                    w2_ref, c2_ref,
                    w3_ref, c3_ref,
                    w4_ref, c4_ref,
                    w5_ref, b5_ref,
                    o_ref, *, bf16_epilogue):
    x = x_ref[...]                                   # (TM, 3)  f32
    lat = lat_ref[...].astype(jnp.float32)           # (TM, Z)  bf16 -> f32

    # conv1 (3 -> Z) on the VPU: K=3 is too thin for the MXU.  BN1 scale is
    # folded into w1/c1; latent is added *before* BN1, so it only needs the
    # per-channel scale s1.  (Do NOT pre-scale latent in the wrapper.)
    h = (x[:, 0:1] * w1_ref[0:1, :]
         + x[:, 1:2] * w1_ref[1:2, :]
         + x[:, 2:3] * w1_ref[2:3, :]
         + lat * s1_ref[...]
         + c1_ref[...])
    h = jnp.maximum(h, 0.0).astype(jnp.bfloat16)     # packed operand for conv2

    def layer(h_bf16, w_ref, c_ref):
        # bf16 operands, f32 MXU accumulation, BN folded into w/c.
        y = jnp.dot(h_bf16, w_ref[...],
                    preferred_element_type=jnp.float32) + c_ref[...]
        if bf16_epilogue:
            # v6e/v7x: relu on packed bf16 (half the vregs / VMEM footprint).
            return jnp.maximum(y.astype(jnp.bfloat16), 0)
        # v5e (no bf16 VPU): relu in f32, then pack for the next matmul.
        return jnp.maximum(y, 0.0).astype(jnp.bfloat16)

    h = layer(h, w2_ref, c2_ref)      # conv2      (Z -> H)
    h = layer(h, w3_ref, c3_ref)      # conv_list[0]
    h = layer(h, w4_ref, c4_ref)      # conv_list[1]

    # last_conv (H -> 3, zero-padded to 128 columns), tanh, lane-dense store.
    y = jnp.dot(h, w5_ref[...], preferred_element_type=jnp.float32) + b5_ref[...]
    o_ref[...] = jnp.tanh(y).astype(o_ref.dtype)


# ---------------------------------------------------------------------------
# Parameters: raw (module-shaped) + BN folding / padding / bf16 casting
# ---------------------------------------------------------------------------
def init_raw_params(key):
    """Deterministic synthetic parameters with the same shapes as the module."""
    ks = jax.random.split(key, 26)
    it = iter(range(26))

    def conv(kin, kout):
        # torch Conv1d weight is (out, in, 1); stored transposed as (in, out).
        w = 0.1 * jax.random.normal(ks[next(it)], (kin, kout), jnp.float32)
        b = 0.1 * jax.random.normal(ks[next(it)], (kout,), jnp.float32)
        return w, b

    def bn(c):
        gamma = 1.0 + 0.1 * jax.random.normal(ks[next(it)], (c,), jnp.float32)
        beta = 0.1 * jax.random.normal(ks[next(it)], (c,), jnp.float32)
        mean = 0.1 * jax.random.normal(ks[next(it)], (c,), jnp.float32)
        var = jnp.abs(1.0 + 0.1 * jax.random.normal(ks[next(it)], (c,), jnp.float32))
        return gamma, beta, mean, var

    return {
        "conv1": conv(IN_DIM, Z_DIM), "bn1": bn(Z_DIM),
        "conv2": conv(Z_DIM, HIDDEN), "bn2": bn(HIDDEN),
        "conv3": conv(HIDDEN, HIDDEN), "bn3": bn(HIDDEN),
        "conv4": conv(HIDDEN, HIDDEN), "bn4": bn(HIDDEN),
        "last": conv(HIDDEN, OUT_DIM),
    }


def _bn_scale_shift(gamma, beta, mean, var):
    scale = gamma / jnp.sqrt(var + BN_EPS)
    shift = beta - mean * scale
    return scale, shift


def fold_params(raw):
    """Fold BN into conv weights/biases, pad last conv to 128 lanes, cast the
    big hidden-layer weights to bf16.  Returns the flat tuple the kernel uses.
    Resident (single-buffered) weight VMEM is ~1.25 MiB."""
    w1, b1 = raw["conv1"]
    s1, t1 = _bn_scale_shift(*raw["bn1"])
    w1f = w1 * s1[None, :]                       # conv1 stays f32 (VPU path)
    c1 = (b1 * s1 + t1)[None, :]

    def fold_bf16(conv, bn):
        w, b = conv
        s, t = _bn_scale_shift(*bn)
        return (w * s[None, :]).astype(jnp.bfloat16), (b * s + t)[None, :]

    w2f, c2 = fold_bf16(raw["conv2"], raw["bn2"])
    w3f, c3 = fold_bf16(raw["conv3"], raw["bn3"])
    w4f, c4 = fold_bf16(raw["conv4"], raw["bn4"])

    w5, b5 = raw["last"]
    w5p = jnp.zeros((HIDDEN, OUT_PAD), jnp.float32).at[:, :OUT_DIM].set(w5)
    w5p = w5p.astype(jnp.bfloat16)
    b5p = jnp.zeros((1, OUT_PAD), jnp.float32).at[0, :OUT_DIM].set(b5)

    return (w1f, s1[None, :], c1, w2f, c2, w3f, c3, w4f, c4, w5p, b5p)


# ---------------------------------------------------------------------------
# Wrapper
# ---------------------------------------------------------------------------
def _cdiv(a, b):
    return -(-a // b)


def _round_up(n, m):
    return ((n + m - 1) // m) * m


def _choose_tiling(m, tm_req):
    """Row-tile / grid selection.

    Guarantees:  tm is a multiple of 128, m_pad = tm * steps >= m, and (when the
    problem has >= 256 rows) steps >= 2 and even, so a v7x megacore gets both
    TensorCores busy with balanced work."""
    m128 = _round_up(max(m, 1), 128)
    tm_req = max(TM_MIN, min(tm_req, TM_MAX))
    steps = max(1, _cdiv(m128, tm_req))
    if m128 >= 2 * TM_MIN:
        steps = max(steps, 2)
        if steps % 2:
            steps += 1
    tm = _round_up(_cdiv(m128, steps), 128)
    return tm, tm * steps, steps


def _bf16_vpu_available():
    """bf16 element-wise epilogue only on chips with a bf16 VPU (v6e / v7x)."""
    try:
        kind = jax.devices()[0].device_kind.lower()
    except Exception:
        return True
    return not any(tag in kind for tag in ("v2", "v3", "v4", "v5"))


@functools.partial(jax.jit, static_argnames=("tm", "out_dtype", "bf16_epilogue"))
def _mapping_impl(latent, x, kparams, *, tm, out_dtype, bf16_epilogue):
    B, N, _ = x.shape
    M = B * N
    x2 = x.reshape(M, IN_DIM).astype(jnp.float32)
    # latent travels as bf16: halves the biggest input stream + its VMEM buffers.
    lat2 = latent.reshape(M, Z_DIM).astype(jnp.bfloat16)

    tm, m_pad, steps = _choose_tiling(M, tm)
    if m_pad != M:
        pad = m_pad - M
        x2 = jnp.pad(x2, ((0, pad), (0, 0)))
        lat2 = jnp.pad(lat2, ((0, pad), (0, 0)))

    def row_spec(c):
        return pl.BlockSpec((tm, c), lambda i: (i, 0))

    # Weights/biases are grid-invariant (constant index_map): single-buffer them.
    param_specs = [
        pl.BlockSpec(p.shape, lambda i: (0, 0), pipeline_mode=pl.Buffered(1))
        for p in kparams
    ]

    flops = 2 * m_pad * (IN_DIM * Z_DIM + Z_DIM * HIDDEN
                         + NUM_LAYERS * HIDDEN * HIDDEN + HIDDEN * OUT_PAD)
    param_bytes = sum(int(p.size) * p.dtype.itemsize for p in kparams)
    out_itemsize = jnp.dtype(out_dtype).itemsize
    bytes_accessed = (m_pad * IN_DIM * 4            # x in (f32)
                      + m_pad * Z_DIM * 2           # latent in (bf16)
                      + m_pad * OUT_PAD * out_itemsize
                      + param_bytes)

    kernel = functools.partial(_decoder_kernel, bf16_epilogue=bf16_epilogue)

    out = pl.pallas_call(
        kernel,
        out_shape=jax.ShapeDtypeStruct((m_pad, OUT_PAD), out_dtype),
        grid_spec=pltpu.PrefetchScalarGridSpec(
            num_scalar_prefetch=0,
            grid=(steps,),
            in_specs=[row_spec(IN_DIM), row_spec(Z_DIM)] + param_specs,
            out_specs=pl.BlockSpec((tm, OUT_PAD), lambda i: (i, 0)),
        ),
        compiler_params=pltpu.CompilerParams(
            dimension_semantics=("parallel",),
            # ~25 MiB peak at TM=4096; 48 MiB leaves headroom on v7x's 64 MiB/TC
            # and overrides v5e's 16 MiB scoped default.
            vmem_limit_bytes=48 * 1024 * 1024,
        ),
        cost_estimate=pl.CostEstimate(
            flops=flops,
            transcendentals=m_pad * OUT_PAD,   # tanh
            bytes_accessed=bytes_accessed,
        ),
    )(x2, lat2, *kparams)

    # TODO(synk): consumers that can take the padded (m_pad, 128) slab (or a
    # bf16 out_dtype) directly avoid this extra HBM slice pass (~10% on v6e).
    return out[:M, :OUT_DIM].reshape(B, N, OUT_DIM)


def mapping_2d_to_3d(latent, x, kparams, *, tm=TM_DEFAULT,
                     out_dtype=jnp.float32, bf16_epilogue=None):
    """latent: (B, N, Z_DIM), x: (B, N, 3)  ->  (B, N, 3)."""
    if bf16_epilogue is None:
        bf16_epilogue = _bf16_vpu_available()
    return _mapping_impl(latent, x, kparams, tm=tm, out_dtype=out_dtype,
                         bf16_epilogue=bool(bf16_epilogue))


# ---------------------------------------------------------------------------
# References
# ---------------------------------------------------------------------------
def reference_f32(latent, x, raw):
    """Module semantics in pure f32 JAX (conv1d(k=1) == matmul, BN inference)."""
    B, N, _ = x.shape
    x2 = x.reshape(-1, IN_DIM)
    lat2 = latent.reshape(-1, Z_DIM)
    w1, b1 = raw["conv1"]
    s1, t1 = _bn_scale_shift(*raw["bn1"])
    h = x2 @ w1 + b1[None, :] + lat2
    h = jnp.maximum(h * s1[None, :] + t1[None, :], 0.0)
    for cname, bname in (("conv2", "bn2"), ("conv3", "bn3"), ("conv4", "bn4")):
        w, b = raw[cname]
        s, t = _bn_scale_shift(*raw[bname])
        h = jnp.maximum((h @ w + b[None, :]) * s[None, :] + t[None, :], 0.0)
    w5, b5 = raw["last"]
    return jnp.tanh(h @ w5 + b5[None, :]).reshape(B, N, OUT_DIM)


def reference_kernel_math(latent, x, kp):
    """Same folded / bf16 math as the kernel, expressed with plain XLA ops."""
    w1f, s1, c1, w2f, c2, w3f, c3, w4f, c4, w5p, b5p = kp
    B, N, _ = x.shape
    x2 = x.reshape(-1, IN_DIM).astype(jnp.float32)
    lat2 = latent.reshape(-1, Z_DIM).astype(jnp.bfloat16).astype(jnp.float32)
    # conv1 exactly as the kernel does it (f32 VPU FMAs, not an XLA dot).
    h = (x2[:, 0:1] * w1f[0:1, :] + x2[:, 1:2] * w1f[1:2, :]
         + x2[:, 2:3] * w1f[2:3, :] + lat2 * s1 + c1)
    h = jnp.maximum(h, 0.0).astype(jnp.bfloat16)

    def layer(h_bf16, w, c):
        y = jnp.dot(h_bf16, w, preferred_element_type=jnp.float32) + c
        return jnp.maximum(y, 0.0).astype(jnp.bfloat16)

    h = layer(h, w2f, c2)
    h = layer(h, w3f, c3)
    h = layer(h, w4f, c4)
    y = jnp.tanh(jnp.dot(h, w5p, preferred_element_type=jnp.float32) + b5p)
    return y[:, :OUT_DIM].reshape(B, N, OUT_DIM)


# ---------------------------------------------------------------------------
if __name__ == "__main__":
    key = jax.random.PRNGKey(0)
    k_p, k_x, k_l = jax.random.split(key, 3)

    B, N = 2, 128
    x = jax.random.normal(k_x, (B, N, IN_DIM), jnp.float32)
    latent = jax.random.normal(k_l, (B, N, Z_DIM), jnp.float32)

    raw = init_raw_params(k_p)
    kp = fold_params(raw)

    out = jax.block_until_ready(mapping_2d_to_3d(latent, x, kp))
    assert out.shape == (B, N, OUT_DIM)

    # Exact-math check (same bf16 operands / f32 accumulation as the kernel).
    ref_bits = reference_kernel_math(latent, x, kp)
    assert jnp.allclose(out, ref_bits, atol=2e-3, rtol=2e-3), \
        "mismatch vs bf16-emulated reference"

    # Semantic check vs the full-f32 module math (loose: bf16 weights/latent).
    ref_mod = reference_f32(latent, x, raw)
    assert jnp.allclose(out, ref_mod, atol=1e-1, rtol=1e-1), \
        "mismatch vs f32 module reference"

    print("KERNEL_OK")
</pallas_src>

<mosaic_0001>
module attributes {stable_mosaic.version = 11 : i64} {
  func.func @_decoder_kernel(%arg0: i32, %arg1: memref<128x3xf32, #tpu.memory_space<vmem>>, %arg2: memref<128x64xbf16, #tpu.memory_space<vmem>>, %arg3: memref<3x64xf32, #tpu.memory_space<vmem>>, %arg4: memref<1x64xf32, #tpu.memory_space<vmem>>, %arg5: memref<1x64xf32, #tpu.memory_space<vmem>>, %arg6: memref<64x512xbf16, #tpu.memory_space<vmem>>, %arg7: memref<1x512xf32, #tpu.memory_space<vmem>>, %arg8: memref<512x512xbf16, #tpu.memory_space<vmem>>, %arg9: memref<1x512xf32, #tpu.memory_space<vmem>>, %arg10: memref<512x512xbf16, #tpu.memory_space<vmem>>, %arg11: memref<1x512xf32, #tpu.memory_space<vmem>>, %arg12: memref<512x128xbf16, #tpu.memory_space<vmem>>, %arg13: memref<1x128xf32, #tpu.memory_space<vmem>>, %arg14: memref<128x128xf32, #tpu.memory_space<vmem>>) attributes {dimension_semantics = [#tpu.dimension_semantics<parallel>], iteration_bounds = array<i64: 2>, scalar_prefetch = 0 : i64, scratch_operands = 0 : i64, tpu.core_type = #tpu.core_type<tc>, window_params = [{transform_indices = @transform_0, window_bounds = array<i64: 128, 3>}, {transform_indices = @transform_1, window_bounds = array<i64: 128, 64>}, {pipeline_mode = #tpu.pipeline_mode<synchronous>, transform_indices = @transform_2, window_bounds = array<i64: 3, 64>}, {pipeline_mode = #tpu.pipeline_mode<synchronous>, transform_indices = @transform_3, window_bounds = array<i64: 1, 64>}, {pipeline_mode = #tpu.pipeline_mode<synchronous>, transform_indices = @transform_4, window_bounds = array<i64: 1, 64>}, {pipeline_mode = #tpu.pipeline_mode<synchronous>, transform_indices = @transform_5, window_bounds = array<i64: 64, 512>}, {pipeline_mode = #tpu.pipeline_mode<synchronous>, transform_indices = @transform_6, window_bounds = array<i64: 1, 512>}, {pipeline_mode = #tpu.pipeline_mode<synchronous>, transform_indices = @transform_7, window_bounds = array<i64: 512, 512>}, {pipeline_mode = #tpu.pipeline_mode<synchronous>, transform_indices = @transform_8, window_bounds = array<i64: 1, 512>}, {pipeline_mode = #tpu.pipeline_mode<synchronous>, transform_indices = @transform_9, window_bounds = array<i64: 512, 512>}, {pipeline_mode = #tpu.pipeline_mode<synchronous>, transform_indices = @transform_10, window_bounds = array<i64: 1, 512>}, {pipeline_mode = #tpu.pipeline_mode<synchronous>, transform_indices = @transform_11, window_bounds = array<i64: 512, 128>}, {pipeline_mode = #tpu.pipeline_mode<synchronous>, transform_indices = @transform_12, window_bounds = array<i64: 1, 128>}, {transform_indices = @transform_13, window_bounds = array<i64: 128, 128>}]} {
    %c0 = arith.constant 0 : index
    %c0_0 = arith.constant 0 : index
    %0 = vector.load %arg1[%c0, %c0_0] : memref<128x3xf32, #tpu.memory_space<vmem>>, vector<128x3xf32>
    %c0_1 = arith.constant 0 : index
    %c0_2 = arith.constant 0 : index
    %1 = vector.load %arg2[%c0_1, %c0_2] : memref<128x64xbf16, #tpu.memory_space<vmem>>, vector<128x64xbf16>
    %2 = arith.extf %1 : vector<128x64xbf16> to vector<128x64xf32>
    %3 = vector.extract_strided_slice %0 {offsets = [0, 0], sizes = [128, 1], strides = [1, 1]} : vector<128x3xf32> to vector<128x1xf32>
    %c0_3 = arith.constant 0 : index
    %c0_4 = arith.constant 0 : index
    %4 = vector.load %arg3[%c0_3, %c0_4] : memref<3x64xf32, #tpu.memory_space<vmem>>, vector<1x64xf32>
    %5 = vector.broadcast %3 : vector<128x1xf32> to vector<128x64xf32>
    %6 = vector.broadcast %4 : vector<1x64xf32> to vector<128x64xf32>
    %7 = arith.mulf %5, %6 : vector<128x64xf32>
    %8 = vector.extract_strided_slice %0 {offsets = [0, 1], sizes = [128, 1], strides = [1, 1]} : vector<128x3xf32> to vector<128x1xf32>
    %c1 = arith.constant 1 : index
    %c0_5 = arith.constant 0 : index
    %9 = vector.load %arg3[%c1, %c0_5] : memref<3x64xf32, #tpu.memory_space<vmem>>, vector<1x64xf32>
    %10 = vector.broadcast %8 : vector<128x1xf32> to vector<128x64xf32>
    %11 = vector.broadcast %9 : vector<1x64xf32> to vector<128x64xf32>
    %12 = arith.mulf %10, %11 : vector<128x64xf32>
    %13 = arith.addf %7, %12 : vector<128x64xf32>
    %14 = vector.extract_strided_slice %0 {offsets = [0, 2], sizes = [128, 1], strides = [1, 1]} : vector<128x3xf32> to vector<128x1xf32>
    %c2 = arith.constant 2 : index
    %c0_6 = arith.constant 0 : index
    %15 = vector.load %arg3[%c2, %c0_6] : memref<3x64xf32, #tpu.memory_space<vmem>>, vector<1x64xf32>
    %16 = vector.broadcast %14 : vector<128x1xf32> to vector<128x64xf32>
    %17 = vector.broadcast %15 : vector<1x64xf32> to vector<128x64xf32>
    %18 = arith.mulf %16, %17 : vector<128x64xf32>
    %19 = arith.addf %13, %18 : vector<128x64xf32>
    %c0_7 = arith.constant 0 : index
    %c0_8 = arith.constant 0 : index
    %20 = vector.load %arg4[%c0_7, %c0_8] : memref<1x64xf32, #tpu.memory_space<vmem>>, vector<1x64xf32>
    %21 = vector.broadcast %20 : vector<1x64xf32> to vector<128x64xf32>
    %22 = arith.mulf %2, %21 : vector<128x64xf32>
    %23 = arith.addf %19, %22 : vector<128x64xf32>
    %c0_9 = arith.constant 0 : index
    %c0_10 = arith.constant 0 : index
    %24 = vector.load %arg5[%c0_9, %c0_10] : memref<1x64xf32, #tpu.memory_space<vmem>>, vector<1x64xf32>
    %25 = vector.broadcast %24 : vector<1x64xf32> to vector<128x64xf32>
    %26 = arith.addf %23, %25 : vector<128x64xf32>
    %cst = arith.constant 0.000000e+00 : f32
    %27 = vector.broadcast %cst : f32 to vector<128x64xf32>
    %28 = arith.maximumf %26, %27 : vector<128x64xf32>
    %29 = arith.truncf %28 : vector<128x64xf32> to vector<128x64xbf16>
    %c0_11 = arith.constant 0 : index
    %c0_12 = arith.constant 0 : index
    %30 = vector.load %arg6[%c0_11, %c0_12] : memref<64x512xbf16, #tpu.memory_space<vmem>>, vector<64x512xbf16>
    %cst_13 = arith.constant dense<0.000000e+00> : vector<128x512xf32>
    %31 = tpu.matmul %29, %30, %cst_13 {dimension_numbers = #tpu.dot_dimension_numbers<[1], [0], [0], [1], [0, 0, 1, 1], [], []>} : vector<128x64xbf16>, vector<64x512xbf16>, vector<128x512xf32> -> vector<128x512xf32>
    %c0_14 = arith.constant 0 : index
    %c0_15 = arith.constant 0 : index
    %32 = vector.load %arg7[%c0_14, %c0_15] : memref<1x512xf32, #tpu.memory_space<vmem>>, vector<1x512xf32>
    %33 = vector.broadcast %32 : vector<1x512xf32> to vector<128x512xf32>
    %34 = arith.addf %31, %33 : vector<128x512xf32>
    %35 = arith.truncf %34 : vector<128x512xf32> to vector<128x512xbf16>
    %cst_16 = arith.constant 0.000000e+00 : bf16
    %36 = vector.broadcast %cst_16 : bf16 to vector<128x512xbf16>
    %37 = arith.maximumf %35, %36 : vector<128x512xbf16>
    %c0_17 = arith.constant 0 : index
    %c0_18 = arith.constant 0 : index
    %38 = vector.load %arg8[%c0_17, %c0_18] : memref<512x512xbf16, #tpu.memory_space<vmem>>, vector<512x512xbf16>
    %cst_19 = arith.constant dense<0.000000e+00> : vector<128x512xf32>
    %39 = tpu.matmul %37, %38, %cst_19 {dimension_numbers = #tpu.dot_dimension_numbers<[1], [0], [0], [1], [0, 0, 1, 1], [], []>} : vector<128x512xbf16>, vector<512x512xbf16>, vector<128x512xf32> -> vector<128x512xf32>
    %c0_20 = arith.constant 0 : index
    %c0_21 = arith.constant 0 : index
    %40 = vector.load %arg9[%c0_20, %c0_21] : memref<1x512xf32, #tpu.memory_space<vmem>>, vector<1x512xf32>
    %41 = vector.broadcast %40 : vector<1x512xf32> to vector<128x512xf32>
    %42 = arith.addf %39, %41 : vector<128x512xf32>
    %43 = arith.truncf %42 : vector<128x512xf32> to vector<128x512xbf16>
    %cst_22 = arith.constant 0.000000e+00 : bf16
    %44 = vector.broadcast %cst_22 : bf16 to vector<128x512xbf16>
    %45 = arith.maximumf %43, %44 : vector<128x512xbf16>
    %c0_23 = arith.constant 0 : index
    %c0_24 = arith.constant 0 : index
    %46 = vector.load %arg10[%c0_23, %c0_24] : memref<512x512xbf16, #tpu.memory_space<vmem>>, vector<512x512xbf16>
    %cst_25 = arith.constant dense<0.000000e+00> : vector<128x512xf32>
    %47 = tpu.matmul %45, %46, %cst_25 {dimension_numbers = #tpu.dot_dimension_numbers<[1], [0], [0], [1], [0, 0, 1, 1], [], []>} : vector<128x512xbf16>, vector<512x512xbf16>, vector<128x512xf32> -> vector<128x512xf32>
    %c0_26 = arith.constant 0 : index
    %c0_27 = arith.constant 0 : index
    %48 = vector.load %arg11[%c0_26, %c0_27] : memref<1x512xf32, #tpu.memory_space<vmem>>, vector<1x512xf32>
    %49 = vector.broadcast %48 : vector<1x512xf32> to vector<128x512xf32>
    %50 = arith.addf %47, %49 : vector<128x512xf32>
    %51 = arith.truncf %50 : vector<128x512xf32> to vector<128x512xbf16>
    %cst_28 = arith.constant 0.000000e+00 : bf16
    %52 = vector.broadcast %cst_28 : bf16 to vector<128x512xbf16>
    %53 = arith.maximumf %51, %52 : vector<128x512xbf16>
    %c0_29 = arith.constant 0 : index
    %c0_30 = arith.constant 0 : index
    %54 = vector.load %arg12[%c0_29, %c0_30] : memref<512x128xbf16, #tpu.memory_space<vmem>>, vector<512x128xbf16>
    %cst_31 = arith.constant dense<0.000000e+00> : vector<128x128xf32>
    %55 = tpu.matmul %53, %54, %cst_31 {dimension_numbers = #tpu.dot_dimension_numbers<[1], [0], [0], [1], [0, 0, 1, 1], [], []>} : vector<128x512xbf16>, vector<512x128xbf16>, vector<128x128xf32> -> vector<128x128xf32>
    %c0_32 = arith.constant 0 : index
    %c0_33 = arith.constant 0 : index
    %56 = vector.load %arg13[%c0_32, %c0_33] : memref<1x128xf32, #tpu.memory_space<vmem>>, vector<1x128xf32>
    %57 = vector.broadcast %56 : vector<1x128xf32> to vector<128x128xf32>
    %58 = arith.addf %55, %57 : vector<128x128xf32>
    %59 = math.tanh %58 : vector<128x128xf32>
    %c0_34 = arith.constant 0 : index
    %c0_35 = arith.constant 0 : index
    %60 = vector.load %arg14[%c0_34, %c0_35] : memref<128x128xf32, #tpu.memory_space<vmem>>, vector<128x128xf32>
    tpu.vector_store %arg14[%c0_34, %c0_35], %59 {strides = array<i32>} : memref<128x128xf32, #tpu.memory_space<vmem>>, vector<128x128xf32>,
    return
  }
  func.func @transform_0(%arg0: i32) -> (i32, i32) {
    %c0_i32 = arith.constant 0 : i32
    %c0_i32_0 = arith.constant 0 : i32
    return %arg0, %c0_i32 : i32, i32
  }
  func.func @transform_1(%arg0: i32) -> (i32, i32) {
    %c0_i32 = arith.constant 0 : i32
    %c0_i32_0 = arith.constant 0 : i32
    return %arg0, %c0_i32 : i32, i32
  }
  func.func @transform_2(%arg0: i32) -> (i32, i32) {
    %c0_i32 = arith.constant 0 : i32
    %c0_i32_0 = arith.constant 0 : i32
    %c0_i32_1 = arith.constant 0 : i32
    return %c0_i32, %c0_i32_0 : i32, i32
  }
  func.func @transform_3(%arg0: i32) -> (i32, i32) {
    %c0_i32 = arith.constant 0 : i32
    %c0_i32_0 = arith.constant 0 : i32
    %c0_i32_1 = arith.constant 0 : i32
    return %c0_i32, %c0_i32_0 : i32, i32
  }
  func.func @transform_4(%arg0: i32) -> (i32, i32) {
    %c0_i32 = arith.constant 0 : i32
    %c0_i32_0 = arith.constant 0 : i32
    %c0_i32_1 = arith.constant 0 : i32
    return %c0_i32, %c0_i32_0 : i32, i32
  }
  func.func @transform_5(%arg0: i32) -> (i32, i32) {
    %c0_i32 = arith.constant 0 : i32
    %c0_i32_0 = arith.constant 0 : i32
    %c0_i32_1 = arith.constant 0 : i32
    return %c0_i32, %c0_i32_0 : i32, i32
  }
  func.func @transform_6(%arg0: i32) -> (i32, i32) {
    %c0_i32 = arith.constant 0 : i32
    %c0_i32_0 = arith.constant 0 : i32
    %c0_i32_1 = arith.constant 0 : i32
    return %c0_i32, %c0_i32_0 : i32, i32
  }
  func.func @transform_7(%arg0: i32) -> (i32, i32) {
    %c0_i32 = arith.constant 0 : i32
    %c0_i32_0 = arith.constant 0 : i32
    %c0_i32_1 = arith.constant 0 : i32
    return %c0_i32, %c0_i32_0 : i32, i32
  }
  func.func @transform_8(%arg0: i32) -> (i32, i32) {
    %c0_i32 = arith.constant 0 : i32
    %c0_i32_0 = arith.constant 0 : i32
    %c0_i32_1 = arith.constant 0 : i32
    return %c0_i32, %c0_i32_0 : i32, i32
  }
  func.func @transform_9(%arg0: i32) -> (i32, i32) {
    %c0_i32 = arith.constant 0 : i32
    %c0_i32_0 = arith.constant 0 : i32
    %c0_i32_1 = arith.constant 0 : i32
    return %c0_i32, %c0_i32_0 : i32, i32
  }
  func.func @transform_10(%arg0: i32) -> (i32, i32) {
    %c0_i32 = arith.constant 0 : i32
    %c0_i32_0 = arith.constant 0 : i32
    %c0_i32_1 = arith.constant 0 : i32
    return %c0_i32, %c0_i32_0 : i32, i32
  }
  func.func @transform_11(%arg0: i32) -> (i32, i32) {
    %c0_i32 = arith.constant 0 : i32
    %c0_i32_0 = arith.constant 0 : i32
    %c0_i32_1 = arith.constant 0 : i32
    return %c0_i32, %c0_i32_0 : i32, i32
  }
  func.func @transform_12(%arg0: i32) -> (i32, i32) {
    %c0_i32 = arith.constant 0 : i32
    %c0_i32_0 = arith.constant 0 : i32
    %c0_i32_1 = arith.constant 0 : i32
    return %c0_i32, %c0_i32_0 : i32, i32
  }
  func.func @transform_13(%arg0: i32) -> (i32, i32) {
    %c0_i32 = arith.constant 0 : i32
    %c0_i32_0 = arith.constant 0 : i32
    return %arg0, %c0_i32 : i32, i32
  }
}

</mosaic_0001>

<llo_original>
// kernel: _mapping_impl.1
$region0: #{_mapping_impl.1}
  #allocation0 [shape = 'u32[]', space=smem, size = 0x4, offset = 0x4, fixed_abs, tag = 'smem constant byte address 0x4 - core index']
  #allocation1 [shape = 'u32[144,128]{1,0:T(1,128)}', space=vmem, size = 0x12000, scoped, tag = 'internal scratch']
  %s0 = inlined_call_operand.vmem [shape: f32[256,3], index: 0, kind: input, shape index: {}]
  %s1 = inlined_call_operand.vmem [shape: bf16[256,64], index: 1, kind: input, shape index: {}]
  %s2 = inlined_call_operand.vmem [shape: f32[3,64], index: 2, kind: input, shape index: {}]
  %s3 = inlined_call_operand.vmem [shape: f32[1,64], index: 3, kind: input, shape index: {}]
  %s4 = inlined_call_operand.vmem [shape: f32[1,64], index: 4, kind: input, shape index: {}]
  %s5 = inlined_call_operand.vmem [shape: bf16[64,512], index: 5, kind: input, shape index: {}]
  %s6 = inlined_call_operand.vmem [shape: f32[1,512], index: 6, kind: input, shape index: {}]
  %s7 = inlined_call_operand.hbm [shape: bf16[512,512], index: 7, kind: input, shape index: {}]
  %s8 = inlined_call_operand.vmem [shape: f32[1,512], index: 8, kind: input, shape index: {}]
  %s9 = inlined_call_operand.hbm [shape: bf16[512,512], index: 9, kind: input, shape index: {}]
  %s10 = inlined_call_operand.vmem [shape: f32[1,512], index: 10, kind: input, shape index: {}]
  %s11 = inlined_call_operand.vmem [shape: bf16[512,128], index: 11, kind: input, shape index: {}]
  %s12 = inlined_call_operand.vmem [shape: f32[1,128], index: 12, kind: input, shape index: {}]
  %s13 = inlined_call_operand.vmem [shape: f32[256,128], index: 13, kind: output, shape index: {}]
  %s14 = sld [smem:[#allocation0]]
  $region93: #{_mapping_impl.1} parent=0
    _
  %s16 = ssub.s32 1, %s14
  %s17 = scalar_select 0, %s16, %s14
  $region1: #{_mapping_impl.1} parent=0
    #allocation2 [shape = 'u8[524288]{0}', space=vmem, size = 0x80000, scoped, tag = 'input window, operand 7, single buffered']
    #allocation3 [shape = 's32[2]{0}', space=sflag, size = 0x8, scoped, tag = 'scoped memory for _mapping_impl.1']
    #allocation4 [shape = 'u8[524288]{0}', space=vmem, size = 0x80000, scoped, tag = 'input window, operand 9, single buffered']
    #allocation5 [shape = 's32[1]{0}', space=sflag, size = 0x4, scoped, tag = 'scoped memory for _mapping_impl.1']
    %18 = vsyncpa [#allocation3], 0
    %19 = vsyncpa [#allocation5], 0
    loop: start=0, step=1, limit=4
    $region2: #{_mapping_impl.1} parent=1 // loop_pre_header
      _
    $region3: #{_mapping_impl.1} parent=1 // loop_header
      %s21 = sphi 0, %s25
      %p22 = scmp.ge.s32.totalorder %s21, 4
      %s31 = sphi 0, %s33
      %s34 = sphi 0, %s31
      %s35 = sphi 0, %s34
      %s51 = sphi 0, %s35
      %s57 = sphi 0, %s59
      %s60 = sphi 0, %s57
      %s61 = sphi 0, %s60
      %s77 = sphi 0, %s61
      %s81 = sphi 0, %s81
      %s83 = sphi 0, %s81
      %s84 = sphi 0, %s83
      %s98 = sphi 0, %s84
      %s102 = sphi 0, %s102
      %s104 = sphi 0, %s102
      %s105 = sphi 0, %s104
      %s119 = sphi 0, %s105
      %s123 = sphi 0, %s123
      %s125 = sphi 0, %s123
      %s126 = sphi 0, %s125
      %s140 = sphi 0, %s126
      %s144 = sphi 0, %s144
      %s146 = sphi 0, %s144
      %s147 = sphi 0, %s146
      %s161 = sphi 0, %s147
      %s165 = sphi 0, %s165
      %s167 = sphi 0, %s165
      %s168 = sphi 0, %s167
      %s182 = sphi 0, %s168
      %s186 = sphi 0, %s186
      %s188 = sphi 0, %s186
      %s189 = sphi 0, %s188
      %s203 = sphi 0, %s189
      %s207 = sphi 0, %s207
      %s209 = sphi 0, %s207
      %s210 = sphi 0, %s209
      %s224 = sphi 0, %s210
      %s228 = sphi 0, %s228
      %s230 = sphi 0, %s228
      %s231 = sphi 0, %s230
      %s245 = sphi 0, %s231
      %s249 = sphi 0, %s249
      %s251 = sphi 0, %s249
      %s252 = sphi 0, %s251
      %s266 = sphi 0, %s252
      %s270 = sphi 0, %s270
      %s272 = sphi 0, %s270
      %s273 = sphi 0, %s272
      %s287 = sphi 0, %s273
      %s291 = sphi 0, %s291
      %s293 = sphi 0, %s291
      %s294 = sphi 0, %s293
      %s308 = sphi 0, %s294
      %s314 = sphi 0, %s316
      %s317 = sphi 0, %s314
      %s318 = sphi 0, %s317
      %s334 = sphi 0, %s318
    $region4: #{_mapping_impl.1} parent=1 // loop_header_branch
      %24 = sbr.rel (%p22) target = $region8
    $region5: #{_mapping_impl.1} parent=1 // loop_body
      %s26 = ssub.s32 %s21, 1
      %s27 = ssub.s32 %s21, 2
      %s28 = sadd.s32 %s21, 1
      %s29 = ssub.s32 %s21, %s28
      %p30 = scmp.eq.s32.totalorder %s29, 0
      %s32 = sadd.s32 %s31, 1
      %s33 = scalar_select %p30, %s31, %s32
      %p36 = pneg %p30
      %p37 = scmp.eq.s32.totalorder %s21, 1
      %p38 = por %p36, %p37
      %p39 = scmp.ne.s32.totalorder %s31, %s34
      %p40 = scmp.eq.s32.totalorder %s21, 0
      %p41 = por %p39, %p40
      %p42 = scmp.ne.s32.totalorder %s31, %s34
      %p43 = scmp.eq.s32.totalorder %s26, 1
      %p44 = por %p42, %p43
      %p45 = scmp.ne.s32.totalorder %s34, %s35
      %p46 = scmp.eq.s32.totalorder %s26, 0
      %p47 = por %p45, %p46
      %p48 = scmp.ne.s32.totalorder %s34, %s35
      %p49 = scmp.eq.s32.totalorder %s27, 1
      %p50 = por %p48, %p49
      %p52 = scmp.ne.s32.totalorder %s35, %s51
      %p53 = scmp.eq.s32.totalorder %s27, 0
      %p54 = por %p52, %p53
      %s55 = ssub.s32 %s21, %s28
      %p56 = scmp.eq.s32.totalorder %s55, 0
      %s58 = sadd.s32 %s57, 1
      %s59 = scalar_select %p56, %s57, %s58
      %p62 = pneg %p56
      %p63 = scmp.eq.s32.totalorder %s21, 1
      %p64 = por %p62, %p63
      %p65 = scmp.ne.s32.totalorder %s57, %s60
      %p66 = scmp.eq.s32.totalorder %s21, 0
      %p67 = por %p65, %p66
      %p68 = scmp.ne.s32.totalorder %s57, %s60
      %p69 = scmp.eq.s32.totalorder %s26, 1
      %p70 = por %p68, %p69
      %p71 = scmp.ne.s32.totalorder %s60, %s61
      %p72 = scmp.eq.s32.totalorder %s26, 0
      %p73 = por %p71, %p72
      %p74 = scmp.ne.s32.totalorder %s60, %s61
      %p75 = scmp.eq.s32.totalorder %s27, 1
      %p76 = por %p74, %p75
      %p78 = scmp.ne.s32.totalorder %s61, %s77
      %p79 = scmp.eq.s32.totalorder %s27, 0
      %p80 = por %p78, %p79
      %s82 = sadd.s32 %s81, 1
      %p85 = scmp.eq.s32.totalorder %s21, 1
      %p86 = scmp.ne.s32.totalorder %s81, %s83
      %p87 = scmp.eq.s32.totalorder %s21, 0
      %p88 = por %p86, %p87
      %p89 = scmp.ne.s32.totalorder %s81, %s83
      %p90 = scmp.eq.s32.totalorder %s26, 1
      %p91 = por %p89, %p90
      %p92 = scmp.ne.s32.totalorder %s83, %s84
      %p93 = scmp.eq.s32.totalorder %s26, 0
      %p94 = por %p92, %p93
      %p95 = scmp.ne.s32.totalorder %s83, %s84
      %p96 = scmp.eq.s32.totalorder %s27, 1
      %p97 = por %p95, %p96
      %p99 = scmp.ne.s32.totalorder %s84, %s98
      %p100 = scmp.eq.s32.totalorder %s27, 0
      %p101 = por %p99, %p100
      %s103 = sadd.s32 %s102, 1
      %p106 = scmp.eq.s32.totalorder %s21, 1
      %p107 = scmp.ne.s32.totalorder %s102, %s104
      %p108 = scmp.eq.s32.totalorder %s21, 0
      %p109 = por %p107, %p108
      %p110 = scmp.ne.s32.totalorder %s102, %s104
      %p111 = scmp.eq.s32.totalorder %s26, 1
      %p112 = por %p110, %p111
      %p113 = scmp.ne.s32.totalorder %s104, %s105
      %p114 = scmp.eq.s32.totalorder %s26, 0
      %p115 = por %p113, %p114
      %p116 = scmp.ne.s32.totalorder %s104, %s105
      %p117 = scmp.eq.s32.totalorder %s27, 1
      %p118 = por %p116, %p117
      %p120 = scmp.ne.s32.totalorder %s105, %s119
      %p121 = scmp.eq.s32.totalorder %s27, 0
      %p122 = por %p120, %p121
      %s124 = sadd.s32 %s123, 1
      %p127 = scmp.eq.s32.totalorder %s21, 1
      %p128 = scmp.ne.s32.totalorder %s123, %s125
      %p129 = scmp.eq.s32.totalorder %s21, 0
      %p130 = por %p128, %p129
      %p131 = scmp.ne.s32.totalorder %s123, %s125
      %p132 = scmp.eq.s32.totalorder %s26, 1
      %p133 = por %p131, %p132
      %p134 = scmp.ne.s32.totalorder %s125, %s126
      %p135 = scmp.eq.s32.totalorder %s26, 0
      %p136 = por %p134, %p135
      %p137 = scmp.ne.s32.totalorder %s125, %s126
      %p138 = scmp.eq.s32.totalorder %s27, 1
      %p139 = por %p137, %p138
      %p141 = scmp.ne.s32.totalorder %s126, %s140
      %p142 = scmp.eq.s32.totalorder %s27, 0
      %p143 = por %p141, %p142
      %s145 = sadd.s32 %s144, 1
      %p148 = scmp.eq.s32.totalorder %s21, 1
      %p149 = scmp.ne.s32.totalorder %s144, %s146
      %p150 = scmp.eq.s32.totalorder %s21, 0
      %p151 = por %p149, %p150
      %p152 = scmp.ne.s32.totalorder %s144, %s146
      %p153 = scmp.eq.s32.totalorder %s26, 1
      %p154 = por %p152, %p153
      %p155 = scmp.ne.s32.totalorder %s146, %s147
      %p156 = scmp.eq.s32.totalorder %s26, 0
      %p157 = por %p155, %p156
      %p158 = scmp.ne.s32.totalorder %s146, %s147
      %p159 = scmp.eq.s32.totalorder %s27, 1
      %p160 = por %p158, %p159
      %p162 = scmp.ne.s32.totalorder %s147, %s161
      %p163 = scmp.eq.s32.totalorder %s27, 0
      %p164 = por %p162, %p163
      %s166 = sadd.s32 %s165, 1
      %p169 = scmp.eq.s32.totalorder %s21, 1
      %p170 = scmp.ne.s32.totalorder %s165, %s167
      %p171 = scmp.eq.s32.totalorder %s21, 0
      %p172 = por %p170, %p171
      %p173 = scmp.ne.s32.totalorder %s165, %s167
      %p174 = scmp.eq.s32.totalorder %s26, 1
      %p175 = por %p173, %p174
      %p176 = scmp.ne.s32.totalorder %s167, %s168
      %p177 = scmp.eq.s32.totalorder %s26, 0
      %p178 = por %p176, %p177
      %p179 = scmp.ne.s32.totalorder %s167, %s168
      %p180 = scmp.eq.s32.totalorder %s27, 1
      %p181 = por %p179, %p180
      %p183 = scmp.ne.s32.totalorder %s168, %s182
      %p184 = scmp.eq.s32.totalorder %s27, 0
      %p185 = por %p183, %p184
      %s187 = sadd.s32 %s186, 1
      %p190 = scmp.eq.s32.totalorder %s21, 1
      %p191 = scmp.ne.s32.totalorder %s186, %s188
      %p192 = scmp.eq.s32.totalorder %s21, 0
      %p193 = por %p191, %p192
      %p194 = scmp.ne.s32.totalorder %s186, %s188
      %p195 = scmp.eq.s32.totalorder %s26, 1
      %p196 = por %p194, %p195
      %p197 = scmp.ne.s32.totalorder %s188, %s189
      %p198 = scmp.eq.s32.totalorder %s26, 0
      %p199 = por %p197, %p198
      %p200 = scmp.ne.s32.totalorder %s188, %s189
      %p201 = scmp.eq.s32.totalorder %s27, 1
      %p202 = por %p200, %p201
      %p204 = scmp.ne.s32.totalorder %s189, %s203
      %p205 = scmp.eq.s32.totalorder %s27, 0
      %p206 = por %p204, %p205
      %s208 = sadd.s32 %s207, 1
      %p211 = scmp.eq.s32.totalorder %s21, 1
      %p212 = scmp.ne.s32.totalorder %s207, %s209
      %p213 = scmp.eq.s32.totalorder %s21, 0
      %p214 = por %p212, %p213
      %p215 = scmp.ne.s32.totalorder %s207, %s209
      %p216 = scmp.eq.s32.totalorder %s26, 1
      %p217 = por %p215, %p216
      %p218 = scmp.ne.s32.totalorder %s209, %s210
      %p219 = scmp.eq.s32.totalorder %s26, 0
      %p220 = por %p218, %p219
      %p221 = scmp.ne.s32.totalorder %s209, %s210
      %p222 = scmp.eq.s32.totalorder %s27, 1
      %p223 = por %p221, %p222
      %p225 = scmp.ne.s32.totalorder %s210, %s224
      %p226 = scmp.eq.s32.totalorder %s27, 0
      %p227 = por %p225, %p226
      %s229 = sadd.s32 %s228, 1
      %p232 = scmp.eq.s32.totalorder %s21, 1
      %p233 = scmp.ne.s32.totalorder %s228, %s230
      %p234 = scmp.eq.s32.totalorder %s21, 0
      %p235 = por %p233, %p234
      %p236 = scmp.ne.s32.totalorder %s228, %s230
      %p237 = scmp.eq.s32.totalorder %s26, 1
      %p238 = por %p236, %p237
      %p239 = scmp.ne.s32.totalorder %s230, %s231
      %p240 = scmp.eq.s32.totalorder %s26, 0
      %p241 = por %p239, %p240
      %p242 = scmp.ne.s32.totalorder %s230, %s231
      %p243 = scmp.eq.s32.totalorder %s27, 1
      %p244 = por %p242, %p243
      %p246 = scmp.ne.s32.totalorder %s231, %s245
      %p247 = scmp.eq.s32.totalorder %s27, 0
      %p248 = por %p246, %p247
      %s250 = sadd.s32 %s249, 1
      %p253 = scmp.eq.s32.totalorder %s21, 1
      %p254 = scmp.ne.s32.totalorder %s249, %s251
      %p255 = scmp.eq.s32.totalorder %s21, 0
      %p256 = por %p254, %p255
      %p257 = scmp.ne.s32.totalorder %s249, %s251
      %p258 = scmp.eq.s32.totalorder %s26, 1
      %p259 = por %p257, %p258
      %p260 = scmp.ne.s32.totalorder %s251, %s252
      %p261 = scmp.eq.s32.totalorder %s26, 0
      %p262 = por %p260, %p261
      %p263 = scmp.ne.s32.totalorder %s251, %s252
      %p264 = scmp.eq.s32.totalorder %s27, 1
      %p265 = por %p263, %p264
      %p267 = scmp.ne.s32.totalorder %s252, %s266
      %p268 = scmp.eq.s32.totalorder %s27, 0
      %p269 = por %p267, %p268
      %s271 = sadd.s32 %s270, 1
      %p274 = scmp.eq.s32.totalorder %s21, 1
      %p275 = scmp.ne.s32.totalorder %s270, %s272
      %p276 = scmp.eq.s32.totalorder %s21, 0
      %p277 = por %p275, %p276
      %p278 = scmp.ne.s32.totalorder %s270, %s272
      %p279 = scmp.eq.s32.totalorder %s26, 1
      %p280 = por %p278, %p279
      %p281 = scmp.ne.s32.totalorder %s272, %s273
      %p282 = scmp.eq.s32.totalorder %s26, 0
      %p283 = por %p281, %p282
      %p284 = scmp.ne.s32.totalorder %s272, %s273
      %p285 = scmp.eq.s32.totalorder %s27, 1
      %p286 = por %p284, %p285
      %p288 = scmp.ne.s32.totalorder %s273, %s287
      %p289 = scmp.eq.s32.totalorder %s27, 0
      %p290 = por %p288, %p289
      %s292 = sadd.s32 %s291, 1
      %p295 = scmp.eq.s32.totalorder %s21, 1
      %p296 = scmp.ne.s32.totalorder %s291, %s293
      %p297 = scmp.eq.s32.totalorder %s21, 0
      %p298 = por %p296, %p297
      %p299 = scmp.ne.s32.totalorder %s291, %s293
      %p300 = scmp.eq.s32.totalorder %s26, 1
      %p301 = por %p299, %p300
      %p302 = scmp.ne.s32.totalorder %s293, %s294
      %p303 = scmp.eq.s32.totalorder %s26, 0
      %p304 = por %p302, %p303
      %p305 = scmp.ne.s32.totalorder %s293, %s294
      %p306 = scmp.eq.s32.totalorder %s27, 1
      %p307 = por %p305, %p306
      %p309 = scmp.ne.s32.totalorder %s294, %s308
      %p310 = scmp.eq.s32.totalorder %s27, 0
      %p311 = por %p309, %p310
      %s312 = ssub.s32 %s21, %s28
      %p313 = scmp.eq.s32.totalorder %s312, 0
      %s315 = sadd.s32 %s314, 1
      %s316 = scalar_select %p313, %s314, %s315
      %p319 = pneg %p313
      %p320 = scmp.eq.s32.totalorder %s21, 1
      %p321 = por %p319, %p320
      %p322 = scmp.ne.s32.totalorder %s314, %s317
      %p323 = scmp.eq.s32.totalorder %s21, 0
      %p324 = por %p322, %p323
      %p325 = scmp.ne.s32.totalorder %s314, %s317
      %p326 = scmp.eq.s32.totalorder %s26, 1
      %p327 = por %p325, %p326
      %p328 = scmp.ne.s32.totalorder %s317, %s318
      %p329 = scmp.eq.s32.totalorder %s26, 0
      %p330 = por %p328, %p329
      %p331 = scmp.ne.s32.totalorder %s317, %s318
      %p332 = scmp.eq.s32.totalorder %s27, 1
      %p333 = por %p331, %p332
      %p335 = scmp.ne.s32.totalorder %s318, %s334
      %p336 = scmp.eq.s32.totalorder %s27, 0
      %p337 = por %p335, %p336
      %p338 = scmp.le.s32.totalorder 1, %s21
      %p339 = scmp.lt.s32.totalorder %s21, 3
      %p340 = pnand %p338, %p339
      %p341 = pneg %p340
      // Predicated region
      $region9: #{_mapping_impl.1} parent=5 // pred_check
        _
      $region10: #{_mapping_impl.1} parent=5 // pred_check_branch
        %343 = sbr.rel (%p340) target = $region12
      $region11: #{_mapping_impl.1} parent=5 // pred_region
        %s344 = ssub.s32 %s21, 1
        // Predicated region
        $region13: #{_mapping_impl.1} parent=11 // pred_check
          %p345 = pneg %p94
        $region14: #{_mapping_impl.1} parent=11 // pred_check_branch
          %347 = sbr.rel (%p345) target = $region16
        $region15: #{_mapping_impl.1} parent=11 // pred_region
          _
        $region16: #{_mapping_impl.1} parent=11 // pred_fallthru
          _
        // Predicated region
        $region17: #{_mapping_impl.1} parent=11 // pred_check
          %p348 = pneg %p115
        $region18: #{_mapping_impl.1} parent=11 // pred_check_branch
          %350 = sbr.rel (%p348) target = $region20
        $region19: #{_mapping_impl.1} parent=11 // pred_region
          _
        $region20: #{_mapping_impl.1} parent=11 // pred_fallthru
          _
        // Predicated region
        $region21: #{_mapping_impl.1} parent=11 // pred_check
          %p351 = pneg %p136
        $region22: #{_mapping_impl.1} parent=11 // pred_check_branch
          %353 = sbr.rel (%p351) target = $region24
        $region23: #{_mapping_impl.1} parent=11 // pred_region
          _
        $region24: #{_mapping_impl.1} parent=11 // pred_fallthru
          _
        // Predicated region
        $region25: #{_mapping_impl.1} parent=11 // pred_check
          %p354 = pneg %p157
        $region26: #{_mapping_impl.1} parent=11 // pred_check_branch
          %356 = sbr.rel (%p354) target = $region28
        $region27: #{_mapping_impl.1} parent=11 // pred_region
          _
        $region28: #{_mapping_impl.1} parent=11 // pred_fallthru
          _
        // Predicated region
        $region29: #{_mapping_impl.1} parent=11 // pred_check
          %p357 = pneg %p178
        $region30: #{_mapping_impl.1} parent=11 // pred_check_branch
          %359 = sbr.rel (%p357) target = $region32
        $region31: #{_mapping_impl.1} parent=11 // pred_region
          _
        $region32: #{_mapping_impl.1} parent=11 // pred_fallthru
          _
        // Predicated region
        $region33: #{_mapping_impl.1} parent=11 // pred_check
          %p360 = pneg %p199
        $region34: #{_mapping_impl.1} parent=11 // pred_check_branch
          %362 = sbr.rel (%p360) target = $region36
        $region35: #{_mapping_impl.1} parent=11 // pred_region
          %s364 = ssub.s32 16384, 16384
          %365 = vsyncadd [#allocation3], %s364
          %s366 = sshll.u32 [#allocation2], 4
          %s367 = int_to_ptr.vmem [resolvable:$true] %s366
          %372 = dma.hbm_to_vmem [thread:$0]  %s7, 16384, %s367, [#allocation3], 256, 256, 16
        $region36: #{_mapping_impl.1} parent=11 // pred_fallthru
          _
        // Predicated region
        $region37: #{_mapping_impl.1} parent=11 // pred_check
          %p373 = pneg %p220
        $region38: #{_mapping_impl.1} parent=11 // pred_check_branch
          %375 = sbr.rel (%p373) target = $region40
        $region39: #{_mapping_impl.1} parent=11 // pred_region
          _
        $region40: #{_mapping_impl.1} parent=11 // pred_fallthru
          _
        // Predicated region
        $region41: #{_mapping_impl.1} parent=11 // pred_check
          %p376 = pneg %p241
        $region42: #{_mapping_impl.1} parent=11 // pred_check_branch
          %378 = sbr.rel (%p376) target = $region44
        $region43: #{_mapping_impl.1} parent=11 // pred_region
          %s380 = ssub.s32 16384, 16384
          %381 = vsyncadd [#allocation5], %s380
          %s382 = sshll.u32 [#allocation4], 4
          %s383 = int_to_ptr.vmem [resolvable:$true] %s382
          %388 = dma.hbm_to_vmem [thread:$0]  %s9, 16384, %s383, [#allocation5], 256, 256, 16
        $region44: #{_mapping_impl.1} parent=11 // pred_fallthru
          _
        // Predicated region
        $region45: #{_mapping_impl.1} parent=11 // pred_check
          %p389 = pneg %p262
        $region46: #{_mapping_impl.1} parent=11 // pred_check_branch
          %391 = sbr.rel (%p389) target = $region48
        $region47: #{_mapping_impl.1} parent=11 // pred_region
          _
        $region48: #{_mapping_impl.1} parent=11 // pred_fallthru
          _
        // Predicated region
        $region49: #{_mapping_impl.1} parent=11 // pred_check
          %p392 = pneg %p283
        $region50: #{_mapping_impl.1} parent=11 // pred_check_branch
          %394 = sbr.rel (%p392) target = $region52
        $region51: #{_mapping_impl.1} parent=11 // pred_region
          _
        $region52: #{_mapping_impl.1} parent=11 // pred_fallthru
          _
        // Predicated region
        $region53: #{_mapping_impl.1} parent=11 // pred_check
          %p395 = pneg %p304
        $region54: #{_mapping_impl.1} parent=11 // pred_check_branch
          %397 = sbr.rel (%p395) target = $region56
        $region55: #{_mapping_impl.1} parent=11 // pred_region
          _
        $region56: #{_mapping_impl.1} parent=11 // pred_fallthru
          _
      $region12: #{_mapping_impl.1} parent=5 // pred_fallthru
        _
      %p398 = scmp.lt.s32.totalorder %s21, 2
      // Predicated region
      $region57: #{_mapping_impl.1} parent=5 // pred_check
        %p399 = pneg %p398
      $region58: #{_mapping_impl.1} parent=5 // pred_check_branch
        %401 = sbr.rel (%p399) target = $region60
      $region59: #{_mapping_impl.1} parent=5 // pred_region
        // Predicated region
        $region61: #{_mapping_impl.1} parent=59 // pred_check
          %p402 = pneg %p41
        $region62: #{_mapping_impl.1} parent=59 // pred_check_branch
          %404 = sbr.rel (%p402) target = $region64
        $region63: #{_mapping_impl.1} parent=59 // pred_region
          %s405 = smul.u32 16, %s21
          %p406 = scmp.lt.s32.totalorder %s405, 31
          %s407 = scalar_select %p406, %s405, 31
          %s408 = smul.addr %s407, 8
          %s409 = scalar_lea.vmem %s0, %s408
          %s410 = smul.u32 16, %s21
        $region64: #{_mapping_impl.1} parent=59 // pred_fallthru
          _
        // Predicated region
        $region65: #{_mapping_impl.1} parent=59 // pred_check
          %p411 = pneg %p67
        $region66: #{_mapping_impl.1} parent=59 // pred_check_branch
          %413 = sbr.rel (%p411) target = $region68
        $region67: #{_mapping_impl.1} parent=59 // pred_region
          %s414 = smul.u32 16, %s21
          %p415 = scmp.lt.s32.totalorder %s414, 31
          %s416 = scalar_select %p415, %s414, 31
          %s417 = smul.addr %s416, 4
          %s418 = scalar_lea.vmem %s1, %s417
          %s419 = smul.u32 16, %s21
        $region68: #{_mapping_impl.1} parent=59 // pred_fallthru
          _
      $region60: #{_mapping_impl.1} parent=5 // pred_fallthru
        _
      %p420 = scmp.le.s32.totalorder 1, %s21
      %p421 = scmp.lt.s32.totalorder %s21, 3
      %p422 = pnand %p420, %p421
      %p423 = pneg %p422
      // Predicated region
      $region69: #{_mapping_impl.1} parent=5 // pred_check
        _
      $region70: #{_mapping_impl.1} parent=5 // pred_check_branch
        %425 = sbr.rel (%p422) target = $region72
      $region71: #{_mapping_impl.1} parent=5 // pred_region
        %s426 = ssub.s32 %s21, 1
        // Predicated region
        $region73: #{_mapping_impl.1} parent=71 // pred_check
          %p427 = pneg %p199
        $region74: #{_mapping_impl.1} parent=71 // pred_check_branch
          %429 = sbr.rel (%p427) target = $region76
        $region75: #{_mapping_impl.1} parent=71 // pred_region
          %430 = dma.done [#allocation3], 16384
        $region76: #{_mapping_impl.1} parent=71 // pred_fallthru
          _
        // Predicated region
        $region77: #{_mapping_impl.1} parent=71 // pred_check
          %p431 = pneg %p241
        $region78: #{_mapping_impl.1} parent=71 // pred_check_branch
          %433 = sbr.rel (%p431) target = $region80
        $region79: #{_mapping_impl.1} parent=71 // pred_region
          %434 = dma.done [#allocation5], 16384
        $region80: #{_mapping_impl.1} parent=71 // pred_fallthru
          _
        %s435 = smul.u32 16, %s26
        %p436 = scmp.lt.s32.totalorder %s435, 31
        %s437 = scalar_select %p436, %s435, 31
        %s438 = smul.addr %s437, 8
        %s439 = scalar_lea.vmem %s0, %s438
        %p440 = pneg %p47
        %p441 = pneg %p44
        %s442 = smul.u32 16, %s26
        %p443 = scmp.lt.s32.totalorder %s442, 31
        %s444 = scalar_select %p443, %s442, 31
        %s445 = smul.addr %s444, 4
        %s446 = scalar_lea.vmem %s1, %s445
        %p447 = pneg %p73
        %p448 = pneg %p70
        %p449 = pneg %p94
        %p450 = pneg %p91
        %p451 = pneg %p115
        %p452 = pneg %p112
        %p453 = pneg %p136
        %p454 = pneg %p133
        %p455 = pneg %p157
        %p456 = pneg %p154
        %p457 = pneg %p178
        %p458 = pneg %p175
        %p459 = pneg %p199
        %p460 = pneg %p196
        %p461 = pneg %p220
        %p462 = pneg %p217
        %p463 = pneg %p241
        %p464 = pneg %p238
        %p465 = pneg %p262
        %p466 = pneg %p259
        %p467 = pneg %p283
        %p468 = pneg %p280
        %p469 = pneg %p304
        %p470 = pneg %p301
        %p471 = pneg %p330
        %p472 = pneg %p327
        %s473 = smul.u32 16, %s26
        %p474 = scmp.lt.s32.totalorder %s473, 31
        %s475 = scalar_select %p474, %s473, 31
        %s476 = smul.addr %s475, 8
        %s477 = scalar_lea.vmem %s13, %s476
        %s478 = smul.u32 16, %s26
        %p479 = scmp.lt.s32.totalorder %s478, 31
        %s480 = scalar_select %p479, %s478, 31
        %s481 = smul.addr %s480, 8
        %s482 = scalar_lea.vmem %s0, %s481
        %s483 = smul.u32 16, %s26
        %s484 = smul.u32 16, %s26
        %p485 = scmp.lt.s32.totalorder %s484, 31
        %s486 = scalar_select %p485, %s484, 31
        %s487 = smul.addr %s486, 4
        %s488 = scalar_lea.vmem %s1, %s487
        %s489 = smul.u32 16, %s26
        %s490 = smul.u32 16, %s26
        %p491 = scmp.lt.s32.totalorder %s490, 31
        %s492 = scalar_select %p491, %s490, 31
        %s493 = smul.addr %s492, 8
        %s494 = scalar_lea.vmem %s13, %s493
        %s495 = smul.u32 16, %s26
        %v497 = vld [vmem:[%s482] sm:$0xff]
        %v498 = vld [vmem:[%s482 + $0x8] sm:$0xff]
        %v499 = vld [vmem:[%s482 + $0x10] sm:$0xff]
        %v500 = vld [vmem:[%s482 + $0x18] sm:$0xff]
        %v501 = vld [vmem:[%s482 + $0x20] sm:$0xff]
        %v502 = vld [vmem:[%s482 + $0x28] sm:$0xff]
        %v503 = vld [vmem:[%s482 + $0x30] sm:$0xff]
        %v504 = vld [vmem:[%s482 + $0x38] sm:$0xff]
        %v505 = vld [vmem:[%s482 + $0x40] sm:$0xff]
        %v506 = vld [vmem:[%s482 + $0x48] sm:$0xff]
        %v507 = vld [vmem:[%s482 + $0x50] sm:$0xff]
        %v508 = vld [vmem:[%s482 + $0x58] sm:$0xff]
        %v509 = vld [vmem:[%s482 + $0x60] sm:$0xff]
        %v510 = vld [vmem:[%s482 + $0x68] sm:$0xff]
        %v511 = vld [vmem:[%s482 + $0x70] sm:$0xff]
        %v512 = vld [vmem:[%s482 + $0x78] sm:$0xff]
        %v513 = vld [vmem:[%s488] sm:$0xf]
        %v514 = vld [vmem:[%s488 + $0x4] sm:$0xf]
        %v515 = vld [vmem:[%s488 + $0x8] sm:$0xf]
        %v516 = vld [vmem:[%s488 + $0xc] sm:$0xf]
        %v517 = vld [vmem:[%s488 + $0x10] sm:$0xf]
        %v518 = vld [vmem:[%s488 + $0x14] sm:$0xf]
        %v519 = vld [vmem:[%s488 + $0x18] sm:$0xf]
        %v520 = vld [vmem:[%s488 + $0x1c] sm:$0xf]
        %v521 = vld [vmem:[%s488 + $0x20] sm:$0xf]
        %v522 = vld [vmem:[%s488 + $0x24] sm:$0xf]
        %v523 = vld [vmem:[%s488 + $0x28] sm:$0xf]
        %v524 = vld [vmem:[%s488 + $0x2c] sm:$0xf]
        %v525 = vld [vmem:[%s488 + $0x30] sm:$0xf]
        %v526 = vld [vmem:[%s488 + $0x34] sm:$0xf]
        %v527 = vld [vmem:[%s488 + $0x38] sm:$0xf]
        %v528 = vld [vmem:[%s488 + $0x3c] sm:$0xf]
        %v529 = vunpack.c.l.bf16 %v513
        %v530 = vunpack.c.l.bf16 %v514
        %v531 = vunpack.c.l.bf16 %v515
        %v532 = vunpack.c.l.bf16 %v516
        %v533 = vunpack.c.l.bf16 %v517
        %v534 = vunpack.c.l.bf16 %v518
        %v535 = vunpack.c.l.bf16 %v519
        %v536 = vunpack.c.l.bf16 %v520
        %v537 = vunpack.c.l.bf16 %v521
        %v538 = vunpack.c.l.bf16 %v522
        %v539 = vunpack.c.l.bf16 %v523
        %v540 = vunpack.c.l.bf16 %v524
        %v541 = vunpack.c.l.bf16 %v525
        %v542 = vunpack.c.l.bf16 %v526
        %v543 = vunpack.c.l.bf16 %v527
        %v544 = vunpack.c.l.bf16 %v528
        %v545 = vld [vmem:[%s2] sm:$0x1]
        %547 = vset.pattern.permute.xlu0 0
        %548 = vperm.xlu0 %547, %v497
        %v549 = vpop.permute.xlu0 %548
        %552 = vset.pattern.permute.xlu0 0
        %553 = vperm.xlu0 %552, %v498
        %v554 = vpop.permute.xlu0 %553
        %557 = vset.pattern.permute.xlu0 0
        %558 = vperm.xlu0 %557, %v499
        %v559 = vpop.permute.xlu0 %558
        %562 = vset.pattern.permute.xlu0 0
        %563 = vperm.xlu0 %562, %v500
        %v564 = vpop.permute.xlu0 %563
        %567 = vset.pattern.permute.xlu0 0
        %568 = vperm.xlu0 %567, %v501
        %v569 = vpop.permute.xlu0 %568
        %572 = vset.pattern.permute.xlu0 0
        %573 = vperm.xlu0 %572, %v502
        %v574 = vpop.permute.xlu0 %573
        %577 = vset.pattern.permute.xlu0 0
        %578 = vperm.xlu0 %577, %v503
        %v579 = vpop.permute.xlu0 %578
        %582 = vset.pattern.permute.xlu0 0
        %583 = vperm.xlu0 %582, %v504
        %v584 = vpop.permute.xlu0 %583
        %587 = vset.pattern.permute.xlu0 0
        %588 = vperm.xlu0 %587, %v505
        %v589 = vpop.permute.xlu0 %588
        %592 = vset.pattern.permute.xlu0 0
        %593 = vperm.xlu0 %592, %v506
        %v594 = vpop.permute.xlu0 %593
        %597 = vset.pattern.permute.xlu0 0
        %598 = vperm.xlu0 %597, %v507
        %v599 = vpop.permute.xlu0 %598
        %602 = vset.pattern.permute.xlu0 0
        %603 = vperm.xlu0 %602, %v508
        %v604 = vpop.permute.xlu0 %603
        %607 = vset.pattern.permute.xlu0 0
        %608 = vperm.xlu0 %607, %v509
        %v609 = vpop.permute.xlu0 %608
        %612 = vset.pattern.permute.xlu0 0
        %613 = vperm.xlu0 %612, %v510
        %v614 = vpop.permute.xlu0 %613
        %617 = vset.pattern.permute.xlu0 0
        %618 = vperm.xlu0 %617, %v511
        %v619 = vpop.permute.xlu0 %618
        %622 = vset.pattern.permute.xlu0 0
        %623 = vperm.xlu0 %622, %v512
        %v624 = vpop.permute.xlu0 %623
        %v626 = vlaneseq
        %v627 = vshrl.u32 %v626, 7
        %v628 = vsub.s32 0, %v627
        %v629 = vrot.slane %v545, %v628
        %v630 = vmul.f32 %v549, %v629
        %v631 = vmul.f32 %v554, %v629
        %v632 = vmul.f32 %v559, %v629
        %v633 = vmul.f32 %v564, %v629
        %v634 = vmul.f32 %v569, %v629
        %v635 = vmul.f32 %v574, %v629
        %v636 = vmul.f32 %v579, %v629
        %v637 = vmul.f32 %v584, %v629
        %v638 = vmul.f32 %v589, %v629
        %v639 = vmul.f32 %v594, %v629
        %v640 = vmul.f32 %v599, %v629
        %v641 = vmul.f32 %v604, %v629
        %v642 = vmul.f32 %v609, %v629
        %v643 = vmul.f32 %v614, %v629
        %v644 = vmul.f32 %v619, %v629
        %v645 = vmul.f32 %v624, %v629
        %v646 = vld [vmem:[%s2 + $0x1] sm:$0x1]
        %647 = vset.pattern.permute.xlu0 1
        %648 = vperm.xlu0 %647, %v497
        %v649 = vpop.permute.xlu0 %648
        %651 = vset.pattern.permute.xlu0 1
        %652 = vperm.xlu0 %651, %v498
        %v653 = vpop.permute.xlu0 %652
        %655 = vset.pattern.permute.xlu0 1
        %656 = vperm.xlu0 %655, %v499
        %v657 = vpop.permute.xlu0 %656
        %659 = vset.pattern.permute.xlu0 1
        %660 = vperm.xlu0 %659, %v500
        %v661 = vpop.permute.xlu0 %660
        %663 = vset.pattern.permute.xlu0 1
        %664 = vperm.xlu0 %663, %v501
        %v665 = vpop.permute.xlu0 %664
        %667 = vset.pattern.permute.xlu0 1
        %668 = vperm.xlu0 %667, %v502
        %v669 = vpop.permute.xlu0 %668
        %671 = vset.pattern.permute.xlu0 1
        %672 = vperm.xlu0 %671, %v503
        %v673 = vpop.permute.xlu0 %672
        %675 = vset.pattern.permute.xlu0 1
        %676 = vperm.xlu0 %675, %v504
        %v677 = vpop.permute.xlu0 %676
        %679 = vset.pattern.permute.xlu0 1
        %680 = vperm.xlu0 %679, %v505
        %v681 = vpop.permute.xlu0 %680
        %683 = vset.pattern.permute.xlu0 1
        %684 = vperm.xlu0 %683, %v506
        %v685 = vpop.permute.xlu0 %684
        %687 = vset.pattern.permute.xlu0 1
        %688 = vperm.xlu0 %687, %v507
        %v689 = vpop.permute.xlu0 %688
        %691 = vset.pattern.permute.xlu0 1
        %692 = vperm.xlu0 %691, %v508
        %v693 = vpop.permute.xlu0 %692
        %695 = vset.pattern.permute.xlu0 1
        %696 = vperm.xlu0 %695, %v509
        %v697 = vpop.permute.xlu0 %696
        %699 = vset.pattern.permute.xlu0 1
        %700 = vperm.xlu0 %699, %v510
        %v701 = vpop.permute.xlu0 %700
        %703 = vset.pattern.permute.xlu0 1
        %704 = vperm.xlu0 %703, %v511
        %v705 = vpop.permute.xlu0 %704
        %707 = vset.pattern.permute.xlu0 1
        %708 = vperm.xlu0 %707, %v512
        %v709 = vpop.permute.xlu0 %708
        %v711 = vlaneseq
        %v712 = vshrl.u32 %v711, 7
        %v713 = vsub.s32 0, %v712
        %v714 = vrot.slane %v646, %v713
        %v715 = vmul.f32 %v649, %v714
        %v716 = vmul.f32 %v653, %v714
        %v717 = vmul.f32 %v657, %v714
        %v718 = vmul.f32 %v661, %v714
        %v719 = vmul.f32 %v665, %v714
        %v720 = vmul.f32 %v669, %v714
        %v721 = vmul.f32 %v673, %v714
        %v722 = vmul.f32 %v677, %v714
        %v723 = vmul.f32 %v681, %v714
        %v724 = vmul.f32 %v685, %v714
        %v725 = vmul.f32 %v689, %v714
        %v726 = vmul.f32 %v693, %v714
        %v727 = vmul.f32 %v697, %v714
        %v728 = vmul.f32 %v701, %v714
        %v729 = vmul.f32 %v705, %v714
        %v730 = vmul.f32 %v709, %v714
        %v731 = vadd.f32 %v630, %v715
        %v732 = vadd.f32 %v631, %v716
        %v733 = vadd.f32 %v632, %v717
        %v734 = vadd.f32 %v633, %v718
        %v735 = vadd.f32 %v634, %v719
        %v736 = vadd.f32 %v635, %v720
        %v737 = vadd.f32 %v636, %v721
        %v738 = vadd.f32 %v637, %v722
        %v739 = vadd.f32 %v638, %v723
        %v740 = vadd.f32 %v639, %v724
        %v741 = vadd.f32 %v640, %v725
        %v742 = vadd.f32 %v641, %v726
        %v743 = vadd.f32 %v642, %v727
        %v744 = vadd.f32 %v643, %v728
        %v745 = vadd.f32 %v644, %v729
        %v746 = vadd.f32 %v645, %v730
        %v747 = vld [vmem:[%s2 + $0x2] sm:$0x1]
        %748 = vset.pattern.permute.xlu0 2
        %749 = vperm.xlu0 %748, %v497
        %v750 = vpop.permute.xlu0 %749
        %752 = vset.pattern.permute.xlu0 2
        %753 = vperm.xlu0 %752, %v498
        %v754 = vpop.permute.xlu0 %753
        %756 = vset.pattern.permute.xlu0 2
        %757 = vperm.xlu0 %756, %v499
        %v758 = vpop.permute.xlu0 %757
        %760 = vset.pattern.permute.xlu0 2
        %761 = vperm.xlu0 %760, %v500
        %v762 = vpop.permute.xlu0 %761
        %764 = vset.pattern.permute.xlu0 2
        %765 = vperm.xlu0 %764, %v501
        %v766 = vpop.permute.xlu0 %765
        %768 = vset.pattern.permute.xlu0 2
        %769 = vperm.xlu0 %768, %v502
        %v770 = vpop.permute.xlu0 %769
        %772 = vset.pattern.permute.xlu0 2
        %773 = vperm.xlu0 %772, %v503
        %v774 = vpop.permute.xlu0 %773
        %776 = vset.pattern.permute.xlu0 2
        %777 = vperm.xlu0 %776, %v504
        %v778 = vpop.permute.xlu0 %777
        %780 = vset.pattern.permute.xlu0 2
        %781 = vperm.xlu0 %780, %v505
        %v782 = vpop.permute.xlu0 %781
        %784 = vset.pattern.permute.xlu0 2
        %785 = vperm.xlu0 %784, %v506
        %v786 = vpop.permute.xlu0 %785
        %788 = vset.pattern.permute.xlu0 2
        %789 = vperm.xlu0 %788, %v507
        %v790 = vpop.permute.xlu0 %789
        %792 = vset.pattern.permute.xlu0 2
        %793 = vperm.xlu0 %792, %v508
        %v794 = vpop.permute.xlu0 %793
        %796 = vset.pattern.permute.xlu0 2
        %797 = vperm.xlu0 %796, %v509
        %v798 = vpop.permute.xlu0 %797
        %800 = vset.pattern.permute.xlu0 2
        %801 = vperm.xlu0 %800, %v510
        %v802 = vpop.permute.xlu0 %801
        %804 = vset.pattern.permute.xlu0 2
        %805 = vperm.xlu0 %804, %v511
        %v806 = vpop.permute.xlu0 %805
        %808 = vset.pattern.permute.xlu0 2
        %809 = vperm.xlu0 %808, %v512
        %v810 = vpop.permute.xlu0 %809
        %v812 = vlaneseq
        %v813 = vshrl.u32 %v812, 7
        %v814 = vsub.s32 0, %v813
        %v815 = vrot.slane %v747, %v814
        %v816 = vmul.f32 %v750, %v815
        %v817 = vmul.f32 %v754, %v815
        %v818 = vmul.f32 %v758, %v815
        %v819 = vmul.f32 %v762, %v815
        %v820 = vmul.f32 %v766, %v815
        %v821 = vmul.f32 %v770, %v815
        %v822 = vmul.f32 %v774, %v815
        %v823 = vmul.f32 %v778, %v815
        %v824 = vmul.f32 %v782, %v815
        %v825 = vmul.f32 %v786, %v815
        %v826 = vmul.f32 %v790, %v815
        %v827 = vmul.f32 %v794, %v815
        %v828 = vmul.f32 %v798, %v815
        %v829 = vmul.f32 %v802, %v815
        %v830 = vmul.f32 %v806, %v815
        %v831 = vmul.f32 %v810, %v815
        %v832 = vadd.f32 %v731, %v816
        %v833 = vadd.f32 %v732, %v817
        %v834 = vadd.f32 %v733, %v818
        %v835 = vadd.f32 %v734, %v819
        %v836 = vadd.f32 %v735, %v820
        %v837 = vadd.f32 %v736, %v821
        %v838 = vadd.f32 %v737, %v822
        %v839 = vadd.f32 %v738, %v823
        %v840 = vadd.f32 %v739, %v824
        %v841 = vadd.f32 %v740, %v825
        %v842 = vadd.f32 %v741, %v826
        %v843 = vadd.f32 %v742, %v827
        %v844 = vadd.f32 %v743, %v828
        %v845 = vadd.f32 %v744, %v829
        %v846 = vadd.f32 %v745, %v830
        %v847 = vadd.f32 %v746, %v831
        %v848 = vld [vmem:[%s3] sm:$0x1]
        %v850 = vlaneseq
        %v851 = vshrl.u32 %v850, 7
        %v852 = vsub.s32 0, %v851
        %v853 = vrot.slane %v848, %v852
        %v855 = vmul.f32 %v529, %v853
        %v856 = vmul.f32 %v530, %v853
        %v857 = vmul.f32 %v531, %v853
        %v858 = vmul.f32 %v532, %v853
        %v859 = vmul.f32 %v533, %v853
        %v860 = vmul.f32 %v534, %v853
        %v861 = vmul.f32 %v535, %v853
        %v862 = vmul.f32 %v536, %v853
        %v863 = vmul.f32 %v537, %v853
        %v864 = vmul.f32 %v538, %v853
        %v865 = vmul.f32 %v539, %v853
        %v866 = vmul.f32 %v540, %v853
        %v867 = vmul.f32 %v541, %v853
        %v868 = vmul.f32 %v542, %v853
        %v869 = vmul.f32 %v543, %v853
        %v870 = vmul.f32 %v544, %v853
        %v871 = vadd.f32 %v832, %v855
        %v872 = vadd.f32 %v833, %v856
        %v873 = vadd.f32 %v834, %v857
        %v874 = vadd.f32 %v835, %v858
        %v875 = vadd.f32 %v836, %v859
        %v876 = vadd.f32 %v837, %v860
        %v877 = vadd.f32 %v838, %v861
        %v878 = vadd.f32 %v839, %v862
        %v879 = vadd.f32 %v840, %v863
        %v880 = vadd.f32 %v841, %v864
        %v881 = vadd.f32 %v842, %v865
        %v882 = vadd.f32 %v843, %v866
        %v883 = vadd.f32 %v844, %v867
        %v884 = vadd.f32 %v845, %v868
        %v885 = vadd.f32 %v846, %v869
        %v886 = vadd.f32 %v847, %v870
        %v887 = vld [vmem:[%s4] sm:$0x1]
        %v889 = vlaneseq
        %v890 = vshrl.u32 %v889, 7
        %v891 = vsub.s32 0, %v890
        %v892 = vrot.slane %v887, %v891
        %v894 = vadd.f32 %v871, %v892
        %v895 = vadd.f32 %v872, %v892
        %v896 = vadd.f32 %v873, %v892
        %v897 = vadd.f32 %v874, %v892
        %v898 = vadd.f32 %v875, %v892
        %v899 = vadd.f32 %v876, %v892
        %v900 = vadd.f32 %v877, %v892
        %v901 = vadd.f32 %v878, %v892
        %v902 = vadd.f32 %v879, %v892
        %v903 = vadd.f32 %v880, %v892
        %v904 = vadd.f32 %v881, %v892
        %v905 = vadd.f32 %v882, %v892
        %v906 = vadd.f32 %v883, %v892
        %v907 = vadd.f32 %v884, %v892
        %v908 = vadd.f32 %v885, %v892
        %v909 = vadd.f32 %v886, %v892
        %v910 = vmax.f32 %v894, 0.0
        %v911 = vmax.f32 %v895, 0.0
        %v912 = vmax.f32 %v896, 0.0
        %v913 = vmax.f32 %v897, 0.0
        %v914 = vmax.f32 %v898, 0.0
        %v915 = vmax.f32 %v899, 0.0
        %v916 = vmax.f32 %v900, 0.0
        %v917 = vmax.f32 %v901, 0.0
        %v918 = vmax.f32 %v902, 0.0
        %v919 = vmax.f32 %v903, 0.0
        %v920 = vmax.f32 %v904, 0.0
        %v921 = vmax.f32 %v905, 0.0
        %v922 = vmax.f32 %v906, 0.0
        %v923 = vmax.f32 %v907, 0.0
        %v924 = vmax.f32 %v908, 0.0
        %v925 = vmax.f32 %v909, 0.0
        %v926 = vpack.c.bf16 %v911, %v910
        %v927 = vpack.c.bf16 %v913, %v912
        %v928 = vpack.c.bf16 %v915, %v914
        %v929 = vpack.c.bf16 %v917, %v916
        %v930 = vpack.c.bf16 %v919, %v918
        %v931 = vpack.c.bf16 %v921, %v920
        %v932 = vpack.c.bf16 %v923, %v922
        %v933 = vpack.c.bf16 %v925, %v924
        %v934 = vld [vmem:[%s5] sm:$0xff]
        %v935 = vld [vmem:[%s5 + $0x8] sm:$0xff]
        %v936 = vld [vmem:[%s5 + $0x10] sm:$0xff]
        %v937 = vld [vmem:[%s5 + $0x18] sm:$0xff]
        %v938 = vld [vmem:[%s5 + $0x20] sm:$0xff]
        %v939 = vld [vmem:[%s5 + $0x28] sm:$0xff]
        %v940 = vld [vmem:[%s5 + $0x30] sm:$0xff]
        %v941 = vld [vmem:[%s5 + $0x38] sm:$0xff]
        %v942 = vld [vmem:[%s5 + $0x40] sm:$0xff]
        %v943 = vld [vmem:[%s5 + $0x48] sm:$0xff]
        %v944 = vld [vmem:[%s5 + $0x50] sm:$0xff]
        %v945 = vld [vmem:[%s5 + $0x58] sm:$0xff]
        %v946 = vld [vmem:[%s5 + $0x60] sm:$0xff]
        %v947 = vld [vmem:[%s5 + $0x68] sm:$0xff]
        %v948 = vld [vmem:[%s5 + $0x70] sm:$0xff]
        %v949 = vld [vmem:[%s5 + $0x78] sm:$0xff]
        %v950 = vld [vmem:[%s6] sm:$0xf]
        %v952 = vlaneseq
        %v953 = vshrl.u32 %v952, 7
        %v954 = vsub.s32 0, %v953
        %v955 = vrot.slane %v950, %v954
        %v956 = vlaneseq
        %v957 = vshrl.u32 %v956, 7
        %v958 = vsub.s32 1, %v957
        %v959 = vrot.slane %v950, %v958
        %v960 = vlaneseq
        %v961 = vshrl.u32 %v960, 7
        %v962 = vsub.s32 2, %v961
        %v963 = vrot.slane %v950, %v962
        %v964 = vlaneseq
        %v965 = vshrl.u32 %v964, 7
        %v966 = vsub.s32 3, %v965
        %v967 = vrot.slane %v950, %v966
        %v988 = vunpack.c.l.b16 %v934
        %v989 = vunpack.c.h.b16 %v934
        %v990 = vunpack.c.l.b16 %v935
        %v991 = vunpack.c.h.b16 %v935
        %v992 = vunpack.c.l.b16 %v936
        %v993 = vunpack.c.h.b16 %v936
        %v994 = vunpack.c.l.b16 %v937
        %v995 = vunpack.c.h.b16 %v937
        %v996 = vunpack.c.l.b16 %v938
        %v997 = vunpack.c.h.b16 %v938
        %v998 = vunpack.c.l.b16 %v939
        %v999 = vunpack.c.h.b16 %v939
        %v1000 = vunpack.c.l.b16 %v940
        %v1001 = vunpack.c.h.b16 %v940
        %v1002 = vunpack.c.l.b16 %v941
        %v1003 = vunpack.c.h.b16 %v941
        %v1004 = vunpack.c.l.b16 %v942
        %v1005 = vunpack.c.h.b16 %v942
        %v1006 = vunpack.c.l.b16 %v943
        %v1007 = vunpack.c.h.b16 %v943
        %v1008 = vunpack.c.l.b16 %v944
        %v1009 = vunpack.c.h.b16 %v944
        %v1010 = vunpack.c.l.b16 %v945
        %v1011 = vunpack.c.h.b16 %v945
        %v1012 = vunpack.c.l.b16 %v946
        %v1013 = vunpack.c.h.b16 %v946
        %v1014 = vunpack.c.l.b16 %v947
        %v1015 = vunpack.c.h.b16 %v947
        %v1016 = vunpack.c.l.b16 %v948
        %v1017 = vunpack.c.h.b16 %v948
        %v1018 = vunpack.c.l.b16 %v949
        %v1019 = vunpack.c.h.b16 %v949
        %v1020 = vpack.c.b16 %v992, %v988
        %v1021 = vpack.c.b16 %v993, %v989
        %v1022 = vpack.c.b16 %v994, %v990
        %v1023 = vpack.c.b16 %v995, %v991
        %v1024 = vpack.c.b16 %v1000, %v996
        %v1025 = vpack.c.b16 %v1001, %v997
        %v1026 = vpack.c.b16 %v1002, %v998
        %v1027 = vpack.c.b16 %v1003, %v999
        %v1028 = vpack.c.b16 %v1008, %v1004
        %v1029 = vpack.c.b16 %v1009, %v1005
        %v1030 = vpack.c.b16 %v1010, %v1006
        %v1031 = vpack.c.b16 %v1011, %v1007
        %v1032 = vpack.c.b16 %v1016, %v1012
        %v1033 = vpack.c.b16 %v1017, %v1013
        %v1034 = vpack.c.b16 %v1018, %v1014
        %v1035 = vpack.c.b16 %v1019, %v1015
        %vm1052 = vcmask 523264
        %v1054 = vsel %vm1052, %v926, 0
        %v1057 = vsel %vm1052, %v927, 0
        %v1060 = vsel %vm1052, %v928, 0
        %v1063 = vsel %vm1052, %v929, 0
        %v1066 = vsel %vm1052, %v930, 0
        %v1069 = vsel %vm1052, %v931, 0
        %v1072 = vsel %vm1052, %v932, 0
        %v1075 = vsel %vm1052, %v933, 0
        %1077 = vmatprep.subr.bf16.mxu0 %v1021
        %1078 = vmatpush1.bf16.msra.mxu0 %v1020
        %1079 = vmatprep.subr.bf16.mxu0 %v1025
        %1080 = vmatpush1.bf16.msra.mxu0 %v1024
        %1081 = vmatprep.subr.bf16.mxu0 %v1029
        %1082 = vmatpush1.bf16.msra.mxu0 %v1028
        %1083 = vmatprep.subr.bf16.mxu0 %v1033
        %1084 = vmatpush1.bf16.msra.mxu0 %v1032
        %1085 = vmatprep.subr.bf16.mxu0 0
        %1086 = vmatpush1.bf16.msra.mxu0 0
        %1087 = vmatprep.subr.bf16.mxu0 0
        %1088 = vmatpush1.bf16.msra.mxu0 0
        %1089 = vmatprep.subr.bf16.mxu0 0
        %1090 = vmatpush1.bf16.msra.mxu0 0
        %1091 = vmatprep.subr.bf16.mxu0 0
        %1092 = vmatpush1.bf16.msra.mxu0 0
        %1093 = vmatprep.subr.bf16.mxu0 0
        %1094 = vmatpush1.bf16.msra.mxu0 0
        %1095 = vmatprep.subr.bf16.mxu0 0
        %1096 = vmatpush1.bf16.msra.mxu0 0
        %1097 = vmatprep.subr.bf16.mxu0 0
        %1098 = vmatpush1.bf16.msra.mxu0 0
        %1099 = vmatprep.subr.bf16.mxu0 0
        %1100 = vmatpush1.bf16.msra.mxu0 0
        %1101 = vmatprep.subr.bf16.mxu0 0
        %1102 = vmatpush1.bf16.msra.mxu0 0
        %1103 = vmatprep.subr.bf16.mxu0 0
        %1104 = vmatpush1.bf16.msra.mxu0 0
        %1105 = vmatprep.subr.bf16.mxu0 0
        %1106 = vmatpush1.bf16.msra.mxu0 0
        %1107 = vmatprep.subr.bf16.mxu0 0
        %1108 = vmatpush1.bf16.msra.mxu0 0
        %1109 = vmatprep.mubr.bf16.mxu0 0
        %1110 = vmatmul.mubr.bf16.gmra.mrb[0].mxu0 %v1054
        %v1111 = vpop.f32.mrb[0].mxu0
        %v1112 = vadd.f32 %v955, %v1111
        %v1113 = vpop.f32.mrb[0].mxu0
        %v1114 = vadd.f32 %v959, %v1113
        %v1115 = vpop.f32.mrb[0].mxu0
        %v1116 = vadd.f32 %v955, %v1115
        %v1117 = vpop.f32.mrb[0].mxu0
        %v1118 = vadd.f32 %v959, %v1117
        %1119 = vmatprep.mubr.bf16.mxu0 0
        %1120 = vmatmul.mubr.bf16.gmra.mrb[0].mxu0 %v1057
        %v1121 = vpop.f32.mrb[0].mxu0
        %v1122 = vadd.f32 %v955, %v1121
        %v1123 = vpop.f32.mrb[0].mxu0
        %v1124 = vadd.f32 %v959, %v1123
        %v1125 = vpop.f32.mrb[0].mxu0
        %v1126 = vadd.f32 %v955, %v1125
        %v1127 = vpop.f32.mrb[0].mxu0
        %v1128 = vadd.f32 %v959, %v1127
        %1129 = vmatprep.mubr.bf16.mxu0 0
        %1130 = vmatmul.mubr.bf16.gmra.mrb[0].mxu0 %v1060
        %v1131 = vpop.f32.mrb[0].mxu0
        %v1132 = vadd.f32 %v955, %v1131
        %v1133 = vpop.f32.mrb[0].mxu0
        %v1134 = vadd.f32 %v959, %v1133
        %v1135 = vpop.f32.mrb[0].mxu0
        %v1136 = vadd.f32 %v955, %v1135
        %v1137 = vpop.f32.mrb[0].mxu0
        %v1138 = vadd.f32 %v959, %v1137
        %1139 = vmatprep.mubr.bf16.mxu0 0
        %1140 = vmatmul.mubr.bf16.gmra.mrb[0].mxu0 %v1063
        %v1141 = vpop.f32.mrb[0].mxu0
        %v1142 = vadd.f32 %v955, %v1141
        %v1143 = vpop.f32.mrb[0].mxu0
        %v1144 = vadd.f32 %v959, %v1143
        %v1145 = vpop.f32.mrb[0].mxu0
        %v1146 = vadd.f32 %v955, %v1145
        %v1147 = vpop.f32.mrb[0].mxu0
        %v1148 = vadd.f32 %v959, %v1147
        %1149 = vmatprep.mubr.bf16.mxu0 0
        %1150 = vmatmul.mubr.bf16.gmra.mrb[0].mxu0 %v1066
        %v1151 = vpop.f32.mrb[0].mxu0
        %v1152 = vadd.f32 %v955, %v1151
        %v1153 = vpop.f32.mrb[0].mxu0
        %v1154 = vadd.f32 %v959, %v1153
        %v1155 = vpop.f32.mrb[0].mxu0
        %v1156 = vadd.f32 %v955, %v1155
        %v1157 = vpop.f32.mrb[0].mxu0
        %v1158 = vadd.f32 %v959, %v1157
        %1159 = vmatprep.mubr.bf16.mxu0 0
        %1160 = vmatmul.mubr.bf16.gmra.mrb[0].mxu0 %v1069
        %v1161 = vpop.f32.mrb[0].mxu0
        %v1162 = vadd.f32 %v955, %v1161
        %v1163 = vpop.f32.mrb[0].mxu0
        %v1164 = vadd.f32 %v959, %v1163
        %v1165 = vpop.f32.mrb[0].mxu0
        %v1166 = vadd.f32 %v955, %v1165
        %v1167 = vpop.f32.mrb[0].mxu0
        %v1168 = vadd.f32 %v959, %v1167
        %1169 = vmatprep.mubr.bf16.mxu0 0
        %1170 = vmatmul.mubr.bf16.gmra.mrb[0].mxu0 %v1072
        %v1171 = vpop.f32.mrb[0].mxu0
        %v1172 = vadd.f32 %v955, %v1171
        %v1173 = vpop.f32.mrb[0].mxu0
        %v1174 = vadd.f32 %v959, %v1173
        %v1175 = vpop.f32.mrb[0].mxu0
        %v1176 = vadd.f32 %v955, %v1175
        %v1177 = vpop.f32.mrb[0].mxu0
        %v1178 = vadd.f32 %v959, %v1177
        %1179 = vmatprep.mubr.bf16.mxu0 0
        %1180 = vmatmul.mubr.bf16.gmra.mrb[0].mxu0 %v1075
        %v1181 = vpop.f32.mrb[0].mxu0
        %v1182 = vadd.f32 %v955, %v1181
        %v1183 = vpop.f32.mrb[0].mxu0
        %v1184 = vadd.f32 %v959, %v1183
        %v1185 = vpop.f32.mrb[0].mxu0
        %v1186 = vadd.f32 %v955, %v1185
        %v1187 = vpop.f32.mrb[0].mxu0
        %v1188 = vadd.f32 %v959, %v1187
        %1189 = vdwg.mxu0
        %1190 = vmatprep.subr.bf16.mxu0 %v1023
        %1191 = vmatpush1.bf16.msra.mxu0 %v1022
        %1192 = vmatprep.subr.bf16.mxu0 %v1027
        %1193 = vmatpush1.bf16.msra.mxu0 %v1026
        %1194 = vmatprep.subr.bf16.mxu0 %v1031
        %1195 = vmatpush1.bf16.msra.mxu0 %v1030
        %1196 = vmatprep.subr.bf16.mxu0 %v1035
        %1197 = vmatpush1.bf16.msra.mxu0 %v1034
        %1198 = vmatprep.subr.bf16.mxu0 0
        %1199 = vmatpush1.bf16.msra.mxu0 0
        %1200 = vmatprep.subr.bf16.mxu0 0
        %1201 = vmatpush1.bf16.msra.mxu0 0
        %1202 = vmatprep.subr.bf16.mxu0 0
        %1203 = vmatpush1.bf16.msra.mxu0 0
        %1204 = vmatprep.subr.bf16.mxu0 0
        %1205 = vmatpush1.bf16.msra.mxu0 0
        %1206 = vmatprep.subr.bf16.mxu0 0
        %1207 = vmatpush1.bf16.msra.mxu0 0
        %1208 = vmatprep.subr.bf16.mxu0 0
        %1209 = vmatpush1.bf16.msra.mxu0 0
        %1210 = vmatprep.subr.bf16.mxu0 0
        %1211 = vmatpush1.bf16.msra.mxu0 0
        %1212 = vmatprep.subr.bf16.mxu0 0
        %1213 = vmatpush1.bf16.msra.mxu0 0
        %1214 = vmatprep.subr.bf16.mxu0 0
        %1215 = vmatpush1.bf16.msra.mxu0 0
        %1216 = vmatprep.subr.bf16.mxu0 0
        %1217 = vmatpush1.bf16.msra.mxu0 0
        %1218 = vmatprep.subr.bf16.mxu0 0
        %1219 = vmatpush1.bf16.msra.mxu0 0
        %1220 = vmatprep.subr.bf16.mxu0 0
        %1221 = vmatpush1.bf16.msra.mxu0 0
        %1222 = vmatprep.mubr.bf16.mxu0 0
        %1223 = vmatmul.mubr.bf16.gmra.mrb[0].mxu0 %v1054
        %v1224 = vpop.f32.mrb[0].mxu0
        %v1225 = vadd.f32 %v963, %v1224
        %v1226 = vpop.f32.mrb[0].mxu0
        %v1227 = vadd.f32 %v967, %v1226
        %v1228 = vpop.f32.mrb[0].mxu0
        %v1229 = vadd.f32 %v963, %v1228
        %v1230 = vpop.f32.mrb[0].mxu0
        %v1231 = vadd.f32 %v967, %v1230
        %1232 = vmatprep.mubr.bf16.mxu0 0
        %1233 = vmatmul.mubr.bf16.gmra.mrb[0].mxu0 %v1057
        %v1234 = vpop.f32.mrb[0].mxu0
        %v1235 = vadd.f32 %v963, %v1234
        %v1236 = vpop.f32.mrb[0].mxu0
        %v1237 = vadd.f32 %v967, %v1236
        %v1238 = vpop.f32.mrb[0].mxu0
        %v1239 = vadd.f32 %v963, %v1238
        %v1240 = vpop.f32.mrb[0].mxu0
        %v1241 = vadd.f32 %v967, %v1240
        %1242 = vmatprep.mubr.bf16.mxu0 0
        %1243 = vmatmul.mubr.bf16.gmra.mrb[0].mxu0 %v1060
        %v1244 = vpop.f32.mrb[0].mxu0
        %v1245 = vadd.f32 %v963, %v1244
        %v1246 = vpop.f32.mrb[0].mxu0
        %v1247 = vadd.f32 %v967, %v1246
        %v1248 = vpop.f32.mrb[0].mxu0
        %v1249 = vadd.f32 %v963, %v1248
        %v1250 = vpop.f32.mrb[0].mxu0
        %v1251 = vadd.f32 %v967, %v1250
        %1252 = vmatprep.mubr.bf16.mxu0 0
        %1253 = vmatmul.mubr.bf16.gmra.mrb[0].mxu0 %v1063
        %v1254 = vpop.f32.mrb[0].mxu0
        %v1255 = vadd.f32 %v963, %v1254
        %v1256 = vpop.f32.mrb[0].mxu0
        %v1257 = vadd.f32 %v967, %v1256
        %v1258 = vpop.f32.mrb[0].mxu0
        %v1259 = vadd.f32 %v963, %v1258
        %v1260 = vpop.f32.mrb[0].mxu0
        %v1261 = vadd.f32 %v967, %v1260
        %1262 = vmatprep.mubr.bf16.mxu0 0
        %1263 = vmatmul.mubr.bf16.gmra.mrb[0].mxu0 %v1066
        %v1264 = vpop.f32.mrb[0].mxu0
        %v1265 = vadd.f32 %v963, %v1264
        %v1266 = vpop.f32.mrb[0].mxu0
        %v1267 = vadd.f32 %v967, %v1266
        %v1268 = vpop.f32.mrb[0].mxu0
        %v1269 = vadd.f32 %v963, %v1268
        %v1270 = vpop.f32.mrb[0].mxu0
        %v1271 = vadd.f32 %v967, %v1270
        %1272 = vmatprep.mubr.bf16.mxu0 0
        %1273 = vmatmul.mubr.bf16.gmra.mrb[0].mxu0 %v1069
        %v1274 = vpop.f32.mrb[0].mxu0
        %v1275 = vadd.f32 %v963, %v1274
        %v1276 = vpop.f32.mrb[0].mxu0
        %v1277 = vadd.f32 %v967, %v1276
        %v1278 = vpop.f32.mrb[0].mxu0
        %v1279 = vadd.f32 %v963, %v1278
        %v1280 = vpop.f32.mrb[0].mxu0
        %v1281 = vadd.f32 %v967, %v1280
        %1282 = vmatprep.mubr.bf16.mxu0 0
        %1283 = vmatmul.mubr.bf16.gmra.mrb[0].mxu0 %v1072
        %v1284 = vpop.f32.mrb[0].mxu0
        %v1285 = vadd.f32 %v963, %v1284
        %v1286 = vpop.f32.mrb[0].mxu0
        %v1287 = vadd.f32 %v967, %v1286
        %v1288 = vpop.f32.mrb[0].mxu0
        %v1289 = vadd.f32 %v963, %v1288
        %v1290 = vpop.f32.mrb[0].mxu0
        %v1291 = vadd.f32 %v967, %v1290
        %1292 = vmatprep.mubr.bf16.mxu0 0
        %1293 = vmatmul.mubr.bf16.gmra.mrb[0].mxu0 %v1075
        %v1294 = vpop.f32.mrb[0].mxu0
        %v1295 = vadd.f32 %v963, %v1294
        %v1296 = vpop.f32.mrb[0].mxu0
        %v1297 = vadd.f32 %v967, %v1296
        %v1298 = vpop.f32.mrb[0].mxu0
        %v1299 = vadd.f32 %v963, %v1298
        %v1300 = vpop.f32.mrb[0].mxu0
        %v1301 = vadd.f32 %v967, %v1300
        %1302 = vdwg.mxu0
        %v1303 = vpack.c.bf16 %v1116, %v1112
        %v1304 = vpack.c.bf16 %v1118, %v1114
        %v1305 = vpack.c.bf16 %v1229, %v1225
        %v1306 = vpack.c.bf16 %v1231, %v1227
        %v1307 = vpack.c.bf16 %v1126, %v1122
        %v1308 = vpack.c.bf16 %v1128, %v1124
        %v1309 = vpack.c.bf16 %v1239, %v1235
        %v1310 = vpack.c.bf16 %v1241, %v1237
        %v1311 = vpack.c.bf16 %v1136, %v1132
        %v1312 = vpack.c.bf16 %v1138, %v1134
        %v1313 = vpack.c.bf16 %v1249, %v1245
        %v1314 = vpack.c.bf16 %v1251, %v1247
        %v1315 = vpack.c.bf16 %v1146, %v1142
        %v1316 = vpack.c.bf16 %v1148, %v1144
        %v1317 = vpack.c.bf16 %v1259, %v1255
        %v1318 = vpack.c.bf16 %v1261, %v1257
        %v1319 = vpack.c.bf16 %v1156, %v1152
        %v1320 = vpack.c.bf16 %v1158, %v1154
        %v1321 = vpack.c.bf16 %v1269, %v1265
        %v1322 = vpack.c.bf16 %v1271, %v1267
        %v1323 = vpack.c.bf16 %v1166, %v1162
        %v1324 = vpack.c.bf16 %v1168, %v1164
        %v1325 = vpack.c.bf16 %v1279, %v1275
        %v1326 = vpack.c.bf16 %v1281, %v1277
        %v1327 = vpack.c.bf16 %v1176, %v1172
        %v1328 = vpack.c.bf16 %v1178, %v1174
        %v1329 = vpack.c.bf16 %v1289, %v1285
        %v1330 = vpack.c.bf16 %v1291, %v1287
        %v1331 = vpack.c.bf16 %v1186, %v1182
        %v1332 = vpack.c.bf16 %v1188, %v1184
        %v1333 = vpack.c.bf16 %v1299, %v1295
        %v1334 = vpack.c.bf16 %v1301, %v1297
        %v1335 = vmax.bf16 %v1303, 0
        %v1336 = vmax.bf16 %v1304, 0
        %v1337 = vmax.bf16 %v1305, 0
        %v1338 = vmax.bf16 %v1306, 0
        %v1339 = vmax.bf16 %v1307, 0
        %v1340 = vmax.bf16 %v1308, 0
        %v1341 = vmax.bf16 %v1309, 0
        %v1342 = vmax.bf16 %v1310, 0
        %v1343 = vmax.bf16 %v1311, 0
        %v1344 = vmax.bf16 %v1312, 0
        %v1345 = vmax.bf16 %v1313, 0
        %v1346 = vmax.bf16 %v1314, 0
        %v1347 = vmax.bf16 %v1315, 0
        %v1348 = vmax.bf16 %v1316, 0
        %v1349 = vmax.bf16 %v1317, 0
        %v1350 = vmax.bf16 %v1318, 0
        %v1351 = vmax.bf16 %v1319, 0
        %v1352 = vmax.bf16 %v1320, 0
        %v1353 = vmax.bf16 %v1321, 0
        %v1354 = vmax.bf16 %v1322, 0
        %v1355 = vmax.bf16 %v1323, 0
        %v1356 = vmax.bf16 %v1324, 0
        %v1357 = vmax.bf16 %v1325, 0
        %v1358 = vmax.bf16 %v1326, 0
        %v1359 = vmax.bf16 %v1327, 0
        %v1360 = vmax.bf16 %v1328, 0
        %v1361 = vmax.bf16 %v1329, 0
        %v1362 = vmax.bf16 %v1330, 0
        %v1363 = vmax.bf16 %v1331, 0
        %v1364 = vmax.bf16 %v1332, 0
        %v1365 = vmax.bf16 %v1333, 0
        %v1366 = vmax.bf16 %v1334, 0
        %v1367 = vld [vmem:[#allocation2] sm:$0xff]
        %v1368 = vld [vmem:[#allocation2 + $0x8] sm:$0xff]
        %v1369 = vld [vmem:[#allocation2 + $0x10] sm:$0xff]
        %v1370 = vld [vmem:[#allocation2 + $0x18] sm:$0xff]
        %v1371 = vld [vmem:[#allocation2 + $0x20] sm:$0xff]
        %v1372 = vld [vmem:[#allocation2 + $0x28] sm:$0xff]
        %v1373 = vld [vmem:[#allocation2 + $0x30] sm:$0xff]
        %v1374 = vld [vmem:[#allocation2 + $0x38] sm:$0xff]
        %v1375 = vld [vmem:[#allocation2 + $0x40] sm:$0xff]
        %v1376 = vld [vmem:[#allocation2 + $0x48] sm:$0xff]
        %v1377 = vld [vmem:[#allocation2 + $0x50] sm:$0xff]
        %v1378 = vld [vmem:[#allocation2 + $0x58] sm:$0xff]
        %v1379 = vld [vmem:[#allocation2 + $0x60] sm:$0xff]
        %v1380 = vld [vmem:[#allocation2 + $0x68] sm:$0xff]
        %v1381 = vld [vmem:[#allocation2 + $0x70] sm:$0xff]
        %v1382 = vld [vmem:[#allocation2 + $0x78] sm:$0xff]
        %v1383 = vld [vmem:[#allocation2 + $0x80] sm:$0xff]
        %v1384 = vld [vmem:[#allocation2 + $0x88] sm:$0xff]
        %v1385 = vld [vmem:[#allocation2 + $0x90] sm:$0xff]
        %v1386 = vld [vmem:[#allocation2 + $0x98] sm:$0xff]
        %v1387 = vld [vmem:[#allocation2 + $0xa0] sm:$0xff]
        %v1388 = vld [vmem:[#allocation2 + $0xa8] sm:$0xff]
        %v1389 = vld [vmem:[#allocation2 + $0xb0] sm:$0xff]
        %v1390 = vld [vmem:[#allocation2 + $0xb8] sm:$0xff]
        %v1391 = vld [vmem:[#allocation2 + $0xc0] sm:$0xff]
        %v1392 = vld [vmem:[#allocation2 + $0xc8] sm:$0xff]
        %v1393 = vld [vmem:[#allocation2 + $0xd0] sm:$0xff]
        %v1394 = vld [vmem:[#allocation2 + $0xd8] sm:$0xff]
        %v1395 = vld [vmem:[#allocation2 + $0xe0] sm:$0xff]
        %v1396 = vld [vmem:[#allocation2 + $0xe8] sm:$0xff]
        %v1397 = vld [vmem:[#allocation2 + $0xf0] sm:$0xff]
        %v1398 = vld [vmem:[#allocation2 + $0xf8] sm:$0xff]
        %v1399 = vld [vmem:[#allocation2 + $0x100] sm:$0xff]
        %v1400 = vld [vmem:[#allocation2 + $0x108] sm:$0xff]
        %v1401 = vld [vmem:[#allocation2 + $0x110] sm:$0xff]
        %v1402 = vld [vmem:[#allocation2 + $0x118] sm:$0xff]
        %v1403 = vld [vmem:[#allocation2 + $0x120] sm:$0xff]
        %v1404 = vld [vmem:[#allocation2 + $0x128] sm:$0xff]
        %v1405 = vld [vmem:[#allocation2 + $0x130] sm:$0xff]
        %v1406 = vld [vmem:[#allocation2 + $0x138] sm:$0xff]
        %v1407 = vld [vmem:[#allocation2 + $0x140] sm:$0xff]
        %v1408 = vld [vmem:[#allocation2 + $0x148] sm:$0xff]
        %v1409 = vld [vmem:[#allocation2 + $0x150] sm:$0xff]
        %v1410 = vld [vmem:[#allocation2 + $0x158] sm:$0xff]
        %v1411 = vld [vmem:[#allocation2 + $0x160] sm:$0xff]
        %v1412 = vld [vmem:[#allocation2 + $0x168] sm:$0xff]
        %v1413 = vld [vmem:[#allocation2 + $0x170] sm:$0xff]
        %v1414 = vld [vmem:[#allocation2 + $0x178] sm:$0xff]
        %v1415 = vld [vmem:[#allocation2 + $0x180] sm:$0xff]
        %v1416 = vld [vmem:[#allocation2 + $0x188] sm:$0xff]
        %v1417 = vld [vmem:[#allocation2 + $0x190] sm:$0xff]
        %v1418 = vld [vmem:[#allocation2 + $0x198] sm:$0xff]
        %v1419 = vld [vmem:[#allocation2 + $0x1a0] sm:$0xff]
        %v1420 = vld [vmem:[#allocation2 + $0x1a8] sm:$0xff]
        %v1421 = vld [vmem:[#allocation2 + $0x1b0] sm:$0xff]
        %v1422 = vld [vmem:[#allocation2 + $0x1b8] sm:$0xff]
        %v1423 = vld [vmem:[#allocation2 + $0x1c0] sm:$0xff]
        %v1424 = vld [vmem:[#allocation2 + $0x1c8] sm:$0xff]
        %v1425 = vld [vmem:[#allocation2 + $0x1d0] sm:$0xff]
        %v1426 = vld [vmem:[#allocation2 + $0x1d8] sm:$0xff]
        %v1427 = vld [vmem:[#allocation2 + $0x1e0] sm:$0xff]
        %v1428 = vld [vmem:[#allocation2 + $0x1e8] sm:$0xff]
        %v1429 = vld [vmem:[#allocation2 + $0x1f0] sm:$0xff]
        %v1430 = vld [vmem:[#allocation2 + $0x1f8] sm:$0xff]
        %v1431 = vld [vmem:[#allocation2 + $0x200] sm:$0xff]
        %v1432 = vld [vmem:[#allocation2 + $0x208] sm:$0xff]
        %v1433 = vld [vmem:[#allocation2 + $0x210] sm:$0xff]
        %v1434 = vld [vmem:[#allocation2 + $0x218] sm:$0xff]
        %v1435 = vld [vmem:[#allocation2 + $0x220] sm:$0xff]
        %v1436 = vld [vmem:[#allocation2 + $0x228] sm:$0xff]
        %v1437 = vld [vmem:[#allocation2 + $0x230] sm:$0xff]
        %v1438 = vld [vmem:[#allocation2 + $0x238] sm:$0xff]
        %v1439 = vld [vmem:[#allocation2 + $0x240] sm:$0xff]
        %v1440 = vld [vmem:[#allocation2 + $0x248] sm:$0xff]
        %v1441 = vld [vmem:[#allocation2 + $0x250] sm:$0xff]
        %v1442 = vld [vmem:[#allocation2 + $0x258] sm:$0xff]
        %v1443 = vld [vmem:[#allocation2 + $0x260] sm:$0xff]
        %v1444 = vld [vmem:[#allocation2 + $0x268] sm:$0xff]
        %v1445 = vld [vmem:[#allocation2 + $0x270] sm:$0xff]
        %v1446 = vld [vmem:[#allocation2 + $0x278] sm:$0xff]
        %v1447 = vld [vmem:[#allocation2 + $0x280] sm:$0xff]
        %v1448 = vld [vmem:[#allocation2 + $0x288] sm:$0xff]
        %v1449 = vld [vmem:[#allocation2 + $0x290] sm:$0xff]
        %v1450 = vld [vmem:[#allocation2 + $0x298] sm:$0xff]
        %v1451 = vld [vmem:[#allocation2 + $0x2a0] sm:$0xff]
        %v1452 = vld [vmem:[#allocation2 + $0x2a8] sm:$0xff]
        %v1453 = vld [vmem:[#allocation2 + $0x2b0] sm:$0xff]
        %v1454 = vld [vmem:[#allocation2 + $0x2b8] sm:$0xff]
        %v1455 = vld [vmem:[#allocation2 + $0x2c0] sm:$0xff]
        %v1456 = vld [vmem:[#allocation2 + $0x2c8] sm:$0xff]
        %v1457 = vld [vmem:[#allocation2 + $0x2d0] sm:$0xff]
        %v1458 = vld [vmem:[#allocation2 + $0x2d8] sm:$0xff]
        %v1459 = vld [vmem:[#allocation2 + $0x2e0] sm:$0xff]
        %v1460 = vld [vmem:[#allocation2 + $0x2e8] sm:$0xff]
        %v1461 = vld [vmem:[#allocation2 + $0x2f0] sm:$0xff]
        %v1462 = vld [vmem:[#allocation2 + $0x2f8] sm:$0xff]
        %v1463 = vld [vmem:[#allocation2 + $0x300] sm:$0xff]
        %v1464 = vld [vmem:[#allocation2 + $0x308] sm:$0xff]
        %v1465 = vld [vmem:[#allocation2 + $0x310] sm:$0xff]
        %v1466 = vld [vmem:[#allocation2 + $0x318] sm:$0xff]
        %v1467 = vld [vmem:[#allocation2 + $0x320] sm:$0xff]
        %v1468 = vld [vmem:[#allocation2 + $0x328] sm:$0xff]
        %v1469 = vld [vmem:[#allocation2 + $0x330] sm:$0xff]
        %v1470 = vld [vmem:[#allocation2 + $0x338] sm:$0xff]
        %v1471 = vld [vmem:[#allocation2 + $0x340] sm:$0xff]
        %v1472 = vld [vmem:[#allocation2 + $0x348] sm:$0xff]
        %v1473 = vld [vmem:[#allocation2 + $0x350] sm:$0xff]
        %v1474 = vld [vmem:[#allocation2 + $0x358] sm:$0xff]
        %v1475 = vld [vmem:[#allocation2 + $0x360] sm:$0xff]
        %v1476 = vld [vmem:[#allocation2 + $0x368] sm:$0xff]
        %v1477 = vld [vmem:[#allocation2 + $0x370] sm:$0xff]
        %v1478 = vld [vmem:[#allocation2 + $0x378] sm:$0xff]
        %v1479 = vld [vmem:[#allocation2 + $0x380] sm:$0xff]
        %v1480 = vld [vmem:[#allocation2 + $0x388] sm:$0xff]
        %v1481 = vld [vmem:[#allocation2 + $0x390] sm:$0xff]
        %v1482 = vld [vmem:[#allocation2 + $0x398] sm:$0xff]
        %v1483 = vld [vmem:[#allocation2 + $0x3a0] sm:$0xff]
        %v1484 = vld [vmem:[#allocation2 + $0x3a8] sm:$0xff]
        %v1485 = vld [vmem:[#allocation2 + $0x3b0] sm:$0xff]
        %v1486 = vld [vmem:[#allocation2 + $0x3b8] sm:$0xff]
        %v1487 = vld [vmem:[#allocation2 + $0x3c0] sm:$0xff]
        %v1488 = vld [vmem:[#allocation2 + $0x3c8] sm:$0xff]
        %v1489 = vld [vmem:[#allocation2 + $0x3d0] sm:$0xff]
        %v1490 = vld [vmem:[#allocation2 + $0x3d8] sm:$0xff]
        %v1491 = vld [vmem:[#allocation2 + $0x3e0] sm:$0xff]
        %v1492 = vld [vmem:[#allocation2 + $0x3e8] sm:$0xff]
        %v1493 = vld [vmem:[#allocation2 + $0x3f0] sm:$0xff]
        %v1494 = vld [vmem:[#allocation2 + $0x3f8] sm:$0xff]
        %v1495 = vld [vmem:[%s8] sm:$0xf]
        %v1497 = vlaneseq
        %v1498 = vshrl.u32 %v1497, 7
        %v1499 = vsub.s32 0, %v1498
        %v1500 = vrot.slane %v1495, %v1499
        %v1501 = vlaneseq
        %v1502 = vshrl.u32 %v1501, 7
        %v1503 = vsub.s32 1, %v1502
        %v1504 = vrot.slane %v1495, %v1503
        %v1505 = vlaneseq
        %v1506 = vshrl.u32 %v1505, 7
        %v1507 = vsub.s32 2, %v1506
        %v1508 = vrot.slane %v1495, %v1507
        %v1509 = vlaneseq
        %v1510 = vshrl.u32 %v1509, 7
        %v1511 = vsub.s32 3, %v1510
        %v1512 = vrot.slane %v1495, %v1511
        %v1645 = vunpack.c.l.b16 %v1367
        %v1646 = vunpack.c.h.b16 %v1367
        %v1647 = vunpack.c.l.b16 %v1368
        %v1648 = vunpack.c.h.b16 %v1368
        %v1649 = vunpack.c.l.b16 %v1369
        %v1650 = vunpack.c.h.b16 %v1369
        %v1651 = vunpack.c.l.b16 %v1370
        %v1652 = vunpack.c.h.b16 %v1370
        %v1653 = vunpack.c.l.b16 %v1371
        %v1654 = vunpack.c.h.b16 %v1371
        %v1655 = vunpack.c.l.b16 %v1372
        %v1656 = vunpack.c.h.b16 %v1372
        %v1657 = vunpack.c.l.b16 %v1373
        %v1658 = vunpack.c.h.b16 %v1373
        %v1659 = vunpack.c.l.b16 %v1374
        %v1660 = vunpack.c.h.b16 %v1374
        %v1661 = vunpack.c.l.b16 %v1375
        %v1662 = vunpack.c.h.b16 %v1375
        %v1663 = vunpack.c.l.b16 %v1376
        %v1664 = vunpack.c.h.b16 %v1376
        %v1665 = vunpack.c.l.b16 %v1377
        %v1666 = vunpack.c.h.b16 %v1377
        %v1667 = vunpack.c.l.b16 %v1378
        %v1668 = vunpack.c.h.b16 %v1378
        %v1669 = vunpack.c.l.b16 %v1379
        %v1670 = vunpack.c.h.b16 %v1379
        %v1671 = vunpack.c.l.b16 %v1380
        %v1672 = vunpack.c.h.b16 %v1380
        %v1673 = vunpack.c.l.b16 %v1381
        %v1674 = vunpack.c.h.b16 %v1381
        %v1675 = vunpack.c.l.b16 %v1382
        %v1676 = vunpack.c.h.b16 %v1382
        %v1677 = vunpack.c.l.b16 %v1383
        %v1678 = vunpack.c.h.b16 %v1383
        %v1679 = vunpack.c.l.b16 %v1384
        %v1680 = vunpack.c.h.b16 %v1384
        %v1681 = vunpack.c.l.b16 %v1385
        %v1682 = vunpack.c.h.b16 %v1385
        %v1683 = vunpack.c.l.b16 %v1386
        %v1684 = vunpack.c.h.b16 %v1386
        %v1685 = vunpack.c.l.b16 %v1387
        %v1686 = vunpack.c.h.b16 %v1387
        %v1687 = vunpack.c.l.b16 %v1388
        %v1688 = vunpack.c.h.b16 %v1388
        %v1689 = vunpack.c.l.b16 %v1389
        %v1690 = vunpack.c.h.b16 %v1389
        %v1691 = vunpack.c.l.b16 %v1390
        %v1692 = vunpack.c.h.b16 %v1390
        %v1693 = vunpack.c.l.b16 %v1391
        %v1694 = vunpack.c.h.b16 %v1391
        %v1695 = vunpack.c.l.b16 %v1392
        %v1696 = vunpack.c.h.b16 %v1392
        %v1697 = vunpack.c.l.b16 %v1393
        %v1698 = vunpack.c.h.b16 %v1393
        %v1699 = vunpack.c.l.b16 %v1394
        %v1700 = vunpack.c.h.b16 %v1394
        %v1701 = vunpack.c.l.b16 %v1395
        %v1702 = vunpack.c.h.b16 %v1395
        %v1703 = vunpack.c.l.b16 %v1396
        %v1704 = vunpack.c.h.b16 %v1396
        %v1705 = vunpack.c.l.b16 %v1397
        %v1706 = vunpack.c.h.b16 %v1397
        %v1707 = vunpack.c.l.b16 %v1398
        %v1708 = vunpack.c.h.b16 %v1398
        %v1709 = vunpack.c.l.b16 %v1399
        %v1710 = vunpack.c.h.b16 %v1399
        %v1711 = vunpack.c.l.b16 %v1400
        %v1712 = vunpack.c.h.b16 %v1400
        %v1713 = vunpack.c.l.b16 %v1401
        %v1714 = vunpack.c.h.b16 %v1401
        %v1715 = vunpack.c.l.b16 %v1402
        %v1716 = vunpack.c.h.b16 %v1402
        %v1717 = vunpack.c.l.b16 %v1403
        %v1718 = vunpack.c.h.b16 %v1403
        %v1719 = vunpack.c.l.b16 %v1404
        %v1720 = vunpack.c.h.b16 %v1404
        %v1721 = vunpack.c.l.b16 %v1405
        %v1722 = vunpack.c.h.b16 %v1405
        %v1723 = vunpack.c.l.b16 %v1406
        %v1724 = vunpack.c.h.b16 %v1406
        %v1725 = vunpack.c.l.b16 %v1407
        %v1726 = vunpack.c.h.b16 %v1407
        %v1727 = vunpack.c.l.b16 %v1408
        %v1728 = vunpack.c.h.b16 %v1408
        %v1729 = vunpack.c.l.b16 %v1409
        %v1730 = vunpack.c.h.b16 %v1409
        %v1731 = vunpack.c.l.b16 %v1410
        %v1732 = vunpack.c.h.b16 %v1410
        %v1733 = vunpack.c.l.b16 %v1411
        %v1734 = vunpack.c.h.b16 %v1411
        %v1735 = vunpack.c.l.b16 %v1412
        %v1736 = vunpack.c.h.b16 %v1412
        %v1737 = vunpack.c.l.b16 %v1413
        %v1738 = vunpack.c.h.b16 %v1413
        %v1739 = vunpack.c.l.b16 %v1414
        %v1740 = vunpack.c.h.b16 %v1414
        %v1741 = vunpack.c.l.b16 %v1415
        %v1742 = vunpack.c.h.b16 %v1415
        %v1743 = vunpack.c.l.b16 %v1416
        %v1744 = vunpack.c.h.b16 %v1416
        %v1745 = vunpack.c.l.b16 %v1417
        %v1746 = vunpack.c.h.b16 %v1417
        %v1747 = vunpack.c.l.b16 %v1418
        %v1748 = vunpack.c.h.b16 %v1418
        %v1749 = vunpack.c.l.b16 %v1419
        %v1750 = vunpack.c.h.b16 %v1419
        %v1751 = vunpack.c.l.b16 %v1420
        %v1752 = vunpack.c.h.b16 %v1420
        %v1753 = vunpack.c.l.b16 %v1421
        %v1754 = vunpack.c.h.b16 %v1421
        %v1755 = vunpack.c.l.b16 %v1422
        %v1756 = vunpack.c.h.b16 %v1422
        %v1757 = vunpack.c.l.b16 %v1423
        %v1758 = vunpack.c.h.b16 %v1423
        %v1759 = vunpack.c.l.b16 %v1424
        %v1760 = vunpack.c.h.b16 %v1424
        %v1761 = vunpack.c.l.b16 %v1425
        %v1762 = vunpack.c.h.b16 %v1425
        %v1763 = vunpack.c.l.b16 %v1426
        %v1764 = vunpack.c.h.b16 %v1426
        %v1765 = vunpack.c.l.b16 %v1427
        %v1766 = vunpack.c.h.b16 %v1427
        %v1767 = vunpack.c.l.b16 %v1428
        %v1768 = vunpack.c.h.b16 %v1428
        %v1769 = vunpack.c.l.b16 %v1429
        %v1770 = vunpack.c.h.b16 %v1429
        %v1771 = vunpack.c.l.b16 %v1430
        %v1772 = vunpack.c.h.b16 %v1430
        %v1773 = vunpack.c.l.b16 %v1431
        %v1774 = vunpack.c.h.b16 %v1431
        %v1775 = vunpack.c.l.b16 %v1432
        %v1776 = vunpack.c.h.b16 %v1432
        %v1777 = vunpack.c.l.b16 %v1433
        %v1778 = vunpack.c.h.b16 %v1433
        %v1779 = vunpack.c.l.b16 %v1434
        %v1780 = vunpack.c.h.b16 %v1434
        %v1781 = vunpack.c.l.b16 %v1435
        %v1782 = vunpack.c.h.b16 %v1435
        %v1783 = vunpack.c.l.b16 %v1436
        %v1784 = vunpack.c.h.b16 %v1436
        %v1785 = vunpack.c.l.b16 %v1437
        %v1786 = vunpack.c.h.b16 %v1437
        %v1787 = vunpack.c.l.b16 %v1438
        %v1788 = vunpack.c.h.b16 %v1438
        %v1789 = vunpack.c.l.b16 %v1439
        %v1790 = vunpack.c.h.b16 %v1439
        %v1791 = vunpack.c.l.b16 %v1440
        %v1792 = vunpack.c.h.b16 %v1440
        %v1793 = vunpack.c.l.b16 %v1441
        %v1794 = vunpack.c.h.b16 %v1441
        %v1795 = vunpack.c.l.b16 %v1442
        %v1796 = vunpack.c.h.b16 %v1442
        %v1797 = vunpack.c.l.b16 %v1443
        %v1798 = vunpack.c.h.b16 %v1443
        %v1799 = vunpack.c.l.b16 %v1444
        %v1800 = vunpack.c.h.b16 %v1444
        %v1801 = vunpack.c.l.b16 %v1445
        %v1802 = vunpack.c.h.b16 %v1445
        %v1803 = vunpack.c.l.b16 %v1446
        %v1804 = vunpack.c.h.b16 %v1446
        %v1805 = vunpack.c.l.b16 %v1447
        %v1806 = vunpack.c.h.b16 %v1447
        %v1807 = vunpack.c.l.b16 %v1448
        %v1808 = vunpack.c.h.b16 %v1448
        %v1809 = vunpack.c.l.b16 %v1449
        %v1810 = vunpack.c.h.b16 %v1449
        %v1811 = vunpack.c.l.b16 %v1450
        %v1812 = vunpack.c.h.b16 %v1450
        %v1813 = vunpack.c.l.b16 %v1451
        %v1814 = vunpack.c.h.b16 %v1451
        %v1815 = vunpack.c.l.b16 %v1452
        %v1816 = vunpack.c.h.b16 %v1452
        %v1817 = vunpack.c.l.b16 %v1453
        %v1818 = vunpack.c.h.b16 %v1453
        %v1819 = vunpack.c.l.b16 %v1454
        %v1820 = vunpack.c.h.b16 %v1454
        %v1821 = vunpack.c.l.b16 %v1455
        %v1822 = vunpack.c.h.b16 %v1455
        %v1823 = vunpack.c.l.b16 %v1456
        %v1824 = vunpack.c.h.b16 %v1456
        %v1825 = vunpack.c.l.b16 %v1457
        %v1826 = vunpack.c.h.b16 %v1457
        %v1827 = vunpack.c.l.b16 %v1458
        %v1828 = vunpack.c.h.b16 %v1458
        %v1829 = vunpack.c.l.b16 %v1459
        %v1830 = vunpack.c.h.b16 %v1459
        %v1831 = vunpack.c.l.b16 %v1460
        %v1832 = vunpack.c.h.b16 %v1460
        %v1833 = vunpack.c.l.b16 %v1461
        %v1834 = vunpack.c.h.b16 %v1461
        %v1835 = vunpack.c.l.b16 %v1462
        %v1836 = vunpack.c.h.b16 %v1462
        %v1837 = vunpack.c.l.b16 %v1463
        %v1838 = vunpack.c.h.b16 %v1463
        %v1839 = vunpack.c.l.b16 %v1464
        %v1840 = vunpack.c.h.b16 %v1464
        %v1841 = vunpack.c.l.b16 %v1465
        %v1842 = vunpack.c.h.b16 %v1465
        %v1843 = vunpack.c.l.b16 %v1466
        %v1844 = vunpack.c.h.b16 %v1466
        %v1845 = vunpack.c.l.b16 %v1467
        %v1846 = vunpack.c.h.b16 %v1467
        %v1847 = vunpack.c.l.b16 %v1468
        %v1848 = vunpack.c.h.b16 %v1468
        %v1849 = vunpack.c.l.b16 %v1469
        %v1850 = vunpack.c.h.b16 %v1469
        %v1851 = vunpack.c.l.b16 %v1470
        %v1852 = vunpack.c.h.b16 %v1470
        %v1853 = vunpack.c.l.b16 %v1471
        %v1854 = vunpack.c.h.b16 %v1471
        %v1855 = vunpack.c.l.b16 %v1472
        %v1856 = vunpack.c.h.b16 %v1472
        %v1857 = vunpack.c.l.b16 %v1473
        %v1858 = vunpack.c.h.b16 %v1473
        %v1859 = vunpack.c.l.b16 %v1474
        %v1860 = vunpack.c.h.b16 %v1474
        %v1861 = vunpack.c.l.b16 %v1475
        %v1862 = vunpack.c.h.b16 %v1475
        %v1863 = vunpack.c.l.b16 %v1476
        %v1864 = vunpack.c.h.b16 %v1476
        %v1865 = vunpack.c.l.b16 %v1477
        %v1866 = vunpack.c.h.b16 %v1477
        %v1867 = vunpack.c.l.b16 %v1478
        %v1868 = vunpack.c.h.b16 %v1478
        %v1869 = vunpack.c.l.b16 %v1479
        %v1870 = vunpack.c.h.b16 %v1479
        %v1871 = vunpack.c.l.b16 %v1480
        %v1872 = vunpack.c.h.b16 %v1480
        %v1873 = vunpack.c.l.b16 %v1481
        %v1874 = vunpack.c.h.b16 %v1481
        %v1875 = vunpack.c.l.b16 %v1482
        %v1876 = vunpack.c.h.b16 %v1482
        %v1877 = vunpack.c.l.b16 %v1483
        %v1878 = vunpack.c.h.b16 %v1483
        %v1879 = vunpack.c.l.b16 %v1484
        %v1880 = vunpack.c.h.b16 %v1484
        %v1881 = vunpack.c.l.b16 %v1485
        %v1882 = vunpack.c.h.b16 %v1485
        %v1883 = vunpack.c.l.b16 %v1486
        %v1884 = vunpack.c.h.b16 %v1486
        %v1885 = vunpack.c.l.b16 %v1487
        %v1886 = vunpack.c.h.b16 %v1487
        %v1887 = vunpack.c.l.b16 %v1488
        %v1888 = vunpack.c.h.b16 %v1488
        %v1889 = vunpack.c.l.b16 %v1489
        %v1890 = vunpack.c.h.b16 %v1489
        %v1891 = vunpack.c.l.b16 %v1490
        %v1892 = vunpack.c.h.b16 %v1490
        %v1893 = vunpack.c.l.b16 %v1491
        %v1894 = vunpack.c.h.b16 %v1491
        %v1895 = vunpack.c.l.b16 %v1492
        %v1896 = vunpack.c.h.b16 %v1492
        %v1897 = vunpack.c.l.b16 %v1493
        %v1898 = vunpack.c.h.b16 %v1493
        %v1899 = vunpack.c.l.b16 %v1494
        %v1900 = vunpack.c.h.b16 %v1494
        %v1901 = vpack.c.b16 %v1649, %v1645
        %v1902 = vpack.c.b16 %v1650, %v1646
        %v1903 = vpack.c.b16 %v1651, %v1647
        %v1904 = vpack.c.b16 %v1652, %v1648
        %v1905 = vpack.c.b16 %v1657, %v1653
        %v1906 = vpack.c.b16 %v1658, %v1654
        %v1907 = vpack.c.b16 %v1659, %v1655
        %v1908 = vpack.c.b16 %v1660, %v1656
        %v1909 = vpack.c.b16 %v1665, %v1661
        %v1910 = vpack.c.b16 %v1666, %v1662
        %v1911 = vpack.c.b16 %v1667, %v1663
        %v1912 = vpack.c.b16 %v1668, %v1664
        %v1913 = vpack.c.b16 %v1673, %v1669
        %v1914 = vpack.c.b16 %v1674, %v1670
        %v1915 = vpack.c.b16 %v1675, %v1671
        %v1916 = vpack.c.b16 %v1676, %v1672
        %v1917 = vpack.c.b16 %v1681, %v1677
        %v1918 = vpack.c.b16 %v1682, %v1678
        %v1919 = vpack.c.b16 %v1683, %v1679
        %v1920 = vpack.c.b16 %v1684, %v1680
        %v1921 = vpack.c.b16 %v1689, %v1685
        %v1922 = vpack.c.b16 %v1690, %v1686
        %v1923 = vpack.c.b16 %v1691, %v1687
        %v1924 = vpack.c.b16 %v1692, %v1688
        %v1925 = vpack.c.b16 %v1697, %v1693
        %v1926 = vpack.c.b16 %v1698, %v1694
        %v1927 = vpack.c.b16 %v1699, %v1695
        %v1928 = vpack.c.b16 %v1700, %v1696
        %v1929 = vpack.c.b16 %v1705, %v1701
        %v1930 = vpack.c.b16 %v1706, %v1702
        %v1931 = vpack.c.b16 %v1707, %v1703
        %v1932 = vpack.c.b16 %v1708, %v1704
        %v1933 = vpack.c.b16 %v1713, %v1709
        %v1934 = vpack.c.b16 %v1714, %v1710
        %v1935 = vpack.c.b16 %v1715, %v1711
        %v1936 = vpack.c.b16 %v1716, %v1712
        %v1937 = vpack.c.b16 %v1721, %v1717
        %v1938 = vpack.c.b16 %v1722, %v1718
        %v1939 = vpack.c.b16 %v1723, %v1719
        %v1940 = vpack.c.b16 %v1724, %v1720
        %v1941 = vpack.c.b16 %v1729, %v1725
        %v1942 = vpack.c.b16 %v1730, %v1726
        %v1943 = vpack.c.b16 %v1731, %v1727
        %v1944 = vpack.c.b16 %v1732, %v1728
        %v1945 = vpack.c.b16 %v1737, %v1733
        %v1946 = vpack.c.b16 %v1738, %v1734
        %v1947 = vpack.c.b16 %v1739, %v1735
        %v1948 = vpack.c.b16 %v1740, %v1736
        %v1949 = vpack.c.b16 %v1745, %v1741
        %v1950 = vpack.c.b16 %v1746, %v1742
        %v1951 = vpack.c.b16 %v1747, %v1743
        %v1952 = vpack.c.b16 %v1748, %v1744
        %v1953 = vpack.c.b16 %v1753, %v1749
        %v1954 = vpack.c.b16 %v1754, %v1750
        %v1955 = vpack.c.b16 %v1755, %v1751
        %v1956 = vpack.c.b16 %v1756, %v1752
        %v1957 = vpack.c.b16 %v1761, %v1757
        %v1958 = vpack.c.b16 %v1762, %v1758
        %v1959 = vpack.c.b16 %v1763, %v1759
        %v1960 = vpack.c.b16 %v1764, %v1760
        %v1961 = vpack.c.b16 %v1769, %v1765
        %v1962 = vpack.c.b16 %v1770, %v1766
        %v1963 = vpack.c.b16 %v1771, %v1767
        %v1964 = vpack.c.b16 %v1772, %v1768
        %v1965 = vpack.c.b16 %v1777, %v1773
        %v1966 = vpack.c.b16 %v1778, %v1774
        %v1967 = vpack.c.b16 %v1779, %v1775
        %v1968 = vpack.c.b16 %v1780, %v1776
        %v1969 = vpack.c.b16 %v1785, %v1781
        %v1970 = vpack.c.b16 %v1786, %v1782
        %v1971 = vpack.c.b16 %v1787, %v1783
        %v1972 = vpack.c.b16 %v1788, %v1784
        %v1973 = vpack.c.b16 %v1793, %v1789
        %v1974 = vpack.c.b16 %v1794, %v1790
        %v1975 = vpack.c.b16 %v1795, %v1791
        %v1976 = vpack.c.b16 %v1796, %v1792
        %v1977 = vpack.c.b16 %v1801, %v1797
        %v1978 = vpack.c.b16 %v1802, %v1798
        %v1979 = vpack.c.b16 %v1803, %v1799
        %v1980 = vpack.c.b16 %v1804, %v1800
        %v1981 = vpack.c.b16 %v1809, %v1805
        %v1982 = vpack.c.b16 %v1810, %v1806
        %v1983 = vpack.c.b16 %v1811, %v1807
        %v1984 = vpack.c.b16 %v1812, %v1808
        %v1985 = vpack.c.b16 %v1817, %v1813
        %v1986 = vpack.c.b16 %v1818, %v1814
        %v1987 = vpack.c.b16 %v1819, %v1815
        %v1988 = vpack.c.b16 %v1820, %v1816
        %v1989 = vpack.c.b16 %v1825, %v1821
        %v1990 = vpack.c.b16 %v1826, %v1822
        %v1991 = vpack.c.b16 %v1827, %v1823
        %v1992 = vpack.c.b16 %v1828, %v1824
        %v1993 = vpack.c.b16 %v1833, %v1829
        %v1994 = vpack.c.b16 %v1834, %v1830
        %v1995 = vpack.c.b16 %v1835, %v1831
        %v1996 = vpack.c.b16 %v1836, %v1832
        %v1997 = vpack.c.b16 %v1841, %v1837
        %v1998 = vpack.c.b16 %v1842, %v1838
        %v1999 = vpack.c.b16 %v1843, %v1839
        %v2000 = vpack.c.b16 %v1844, %v1840
        %v2001 = vpack.c.b16 %v1849, %v1845
        %v2002 = vpack.c.b16 %v1850, %v1846
        %v2003 = vpack.c.b16 %v1851, %v1847
        %v2004 = vpack.c.b16 %v1852, %v1848
        %v2005 = vpack.c.b16 %v1857, %v1853
        %v2006 = vpack.c.b16 %v1858, %v1854
        %v2007 = vpack.c.b16 %v1859, %v1855
        %v2008 = vpack.c.b16 %v1860, %v1856
        %v2009 = vpack.c.b16 %v1865, %v1861
        %v2010 = vpack.c.b16 %v1866, %v1862
        %v2011 = vpack.c.b16 %v1867, %v1863
        %v2012 = vpack.c.b16 %v1868, %v1864
        %v2013 = vpack.c.b16 %v1873, %v1869
        %v2014 = vpack.c.b16 %v1874, %v1870
        %v2015 = vpack.c.b16 %v1875, %v1871
        %v2016 = vpack.c.b16 %v1876, %v1872
        %v2017 = vpack.c.b16 %v1881, %v1877
        %v2018 = vpack.c.b16 %v1882, %v1878
        %v2019 = vpack.c.b16 %v1883, %v1879
        %v2020 = vpack.c.b16 %v1884, %v1880
        %v2021 = vpack.c.b16 %v1889, %v1885
        %v2022 = vpack.c.b16 %v1890, %v1886
        %v2023 = vpack.c.b16 %v1891, %v1887
        %v2024 = vpack.c.b16 %v1892, %v1888
        %v2025 = vpack.c.b16 %v1897, %v1893
        %v2026 = vpack.c.b16 %v1898, %v1894
        %v2027 = vpack.c.b16 %v1899, %v1895
        %v2028 = vpack.c.b16 %v1900, %v1896
        %2157 = vmatprep.subr.bf16.mxu0 %v1902
        %2158 = vmatpush1.bf16.msra.mxu0 %v1901
        %2159 = vmatprep.subr.bf16.mxu0 %v1906
        %2160 = vmatpush1.bf16.msra.mxu0 %v1905
        %2161 = vmatprep.subr.bf16.mxu0 %v1910
        %2162 = vmatpush1.bf16.msra.mxu0 %v1909
        %2163 = vmatprep.subr.bf16.mxu0 %v1914
        %2164 = vmatpush1.bf16.msra.mxu0 %v1913
        %2165 = vmatprep.subr.bf16.mxu0 %v1918
        %2166 = vmatpush1.bf16.msra.mxu0 %v1917
        %2167 = vmatprep.subr.bf16.mxu0 %v1922
        %2168 = vmatpush1.bf16.msra.mxu0 %v1921
        %2169 = vmatprep.subr.bf16.mxu0 %v1926
        %2170 = vmatpush1.bf16.msra.mxu0 %v1925
        %2171 = vmatprep.subr.bf16.mxu0 %v1930
        %2172 = vmatpush1.bf16.msra.mxu0 %v1929
        %2173 = vmatprep.subr.bf16.mxu0 %v1934
        %2174 = vmatpush1.bf16.msra.mxu0 %v1933
        %2175 = vmatprep.subr.bf16.mxu0 %v1938
        %2176 = vmatpush1.bf16.msra.mxu0 %v1937
        %2177 = vmatprep.subr.bf16.mxu0 %v1942
        %2178 = vmatpush1.bf16.msra.mxu0 %v1941
        %2179 = vmatprep.subr.bf16.mxu0 %v1946
        %2180 = vmatpush1.bf16.msra.mxu0 %v1945
        %2181 = vmatprep.subr.bf16.mxu0 %v1950
        %2182 = vmatpush1.bf16.msra.mxu0 %v1949
        %2183 = vmatprep.subr.bf16.mxu0 %v1954
        %2184 = vmatpush1.bf16.msra.mxu0 %v1953
        %2185 = vmatprep.subr.bf16.mxu0 %v1958
        %2186 = vmatpush1.bf16.msra.mxu0 %v1957
        %2187 = vmatprep.subr.bf16.mxu0 %v1962
        %2188 = vmatpush1.bf16.msra.mxu0 %v1961
        %2189 = vmatprep.mubr.bf16.mxu0 %v1336
        %2190 = vmatmul.mubr.bf16.gmra.mrb[0].mxu0 %v1335
        %v2191 = vpop.f32.mrb[0].mxu0
        %v2192 = vadd.f32 %v1500, %v2191
        %v2193 = vpop.f32.mrb[0].mxu0
        %v2194 = vadd.f32 %v1504, %v2193
        %v2195 = vpop.f32.mrb[0].mxu0
        %v2196 = vadd.f32 %v1500, %v2195
        %v2197 = vpop.f32.mrb[0].mxu0
        %v2198 = vadd.f32 %v1504, %v2197
        %2199 = vmatprep.mubr.bf16.mxu0 %v1340
        %2200 = vmatmul.mubr.bf16.gmra.mrb[0].mxu0 %v1339
        %v2201 = vpop.f32.mrb[0].mxu0
        %v2202 = vadd.f32 %v1500, %v2201
        %v2203 = vpop.f32.mrb[0].mxu0
        %v2204 = vadd.f32 %v1504, %v2203
        %v2205 = vpop.f32.mrb[0].mxu0
        %v2206 = vadd.f32 %v1500, %v2205
        %v2207 = vpop.f32.mrb[0].mxu0
        %v2208 = vadd.f32 %v1504, %v2207
        %2209 = vmatprep.mubr.bf16.mxu0 %v1344
        %2210 = vmatmul.mubr.bf16.gmra.mrb[0].mxu0 %v1343
        %v2211 = vpop.f32.mrb[0].mxu0
        %v2212 = vadd.f32 %v1500, %v2211
        %v2213 = vpop.f32.mrb[0].mxu0
        %v2214 = vadd.f32 %v1504, %v2213
        %v2215 = vpop.f32.mrb[0].mxu0
        %v2216 = vadd.f32 %v1500, %v2215
        %v2217 = vpop.f32.mrb[0].mxu0
        %v2218 = vadd.f32 %v1504, %v2217
        %2219 = vmatprep.mubr.bf16.mxu0 %v1348
        %2220 = vmatmul.mubr.bf16.gmra.mrb[0].mxu0 %v1347
        %v2221 = vpop.f32.mrb[0].mxu0
        %v2222 = vadd.f32 %v1500, %v2221
        %v2223 = vpop.f32.mrb[0].mxu0
        %v2224 = vadd.f32 %v1504, %v2223
        %v2225 = vpop.f32.mrb[0].mxu0
        %v2226 = vadd.f32 %v1500, %v2225
        %v2227 = vpop.f32.mrb[0].mxu0
        %v2228 = vadd.f32 %v1504, %v2227
        %2229 = vmatprep.mubr.bf16.mxu0 %v1352
        %2230 = vmatmul.mubr.bf16.gmra.mrb[0].mxu0 %v1351
        %v2231 = vpop.f32.mrb[0].mxu0
        %v2232 = vadd.f32 %v1500, %v2231
        %v2233 = vpop.f32.mrb[0].mxu0
        %v2234 = vadd.f32 %v1504, %v2233
        %v2235 = vpop.f32.mrb[0].mxu0
        %v2236 = vadd.f32 %v1500, %v2235
        %v2237 = vpop.f32.mrb[0].mxu0
        %v2238 = vadd.f32 %v1504, %v2237
        %2239 = vmatprep.mubr.bf16.mxu0 %v1356
        %2240 = vmatmul.mubr.bf16.gmra.mrb[0].mxu0 %v1355
        %v2241 = vpop.f32.mrb[0].mxu0
        %v2242 = vadd.f32 %v1500, %v2241
        %v2243 = vpop.f32.mrb[0].mxu0
        %v2244 = vadd.f32 %v1504, %v2243
        %v2245 = vpop.f32.mrb[0].mxu0
        %v2246 = vadd.f32 %v1500, %v2245
        %v2247 = vpop.f32.mrb[0].mxu0
        %v2248 = vadd.f32 %v1504, %v2247
        %2249 = vmatprep.mubr.bf16.mxu0 %v1360
        %2250 = vmatmul.mubr.bf16.gmra.mrb[0].mxu0 %v1359
        %v2251 = vpop.f32.mrb[0].mxu0
        %v2252 = vadd.f32 %v1500, %v2251
        %v2253 = vpop.f32.mrb[0].mxu0
        %v2254 = vadd.f32 %v1504, %v2253
        %v2255 = vpop.f32.mrb[0].mxu0
        %v2256 = vadd.f32 %v1500, %v2255
        %v2257 = vpop.f32.mrb[0].mxu0
        %v2258 = vadd.f32 %v1504, %v2257
        %2259 = vmatprep.mubr.bf16.mxu0 %v1364
        %2260 = vmatmul.mubr.bf16.gmra.mrb[0].mxu0 %v1363
        %v2261 = vpop.f32.mrb[0].mxu0
        %v2262 = vadd.f32 %v1500, %v2261
        %v2263 = vpop.f32.mrb[0].mxu0
        %v2264 = vadd.f32 %v1504, %v2263
        %v2265 = vpop.f32.mrb[0].mxu0
        %v2266 = vadd.f32 %v1500, %v2265
        %v2267 = vpop.f32.mrb[0].mxu0
        %v2268 = vadd.f32 %v1504, %v2267
        %2269 = vdwg.mxu0
        %2270 = vmatprep.subr.bf16.mxu0 %v1966
        %2271 = vmatpush1.bf16.msra.mxu0 %v1965
        %2272 = vmatprep.subr.bf16.mxu0 %v1970
        %2273 = vmatpush1.bf16.msra.mxu0 %v1969
        %2274 = vmatprep.subr.bf16.mxu0 %v1974
        %2275 = vmatpush1.bf16.msra.mxu0 %v1973
        %2276 = vmatprep.subr.bf16.mxu0 %v1978
        %2277 = vmatpush1.bf16.msra.mxu0 %v1977
        %2278 = vmatprep.subr.bf16.mxu0 %v1982
        %2279 = vmatpush1.bf16.msra.mxu0 %v1981
        %2280 = vmatprep.subr.bf16.mxu0 %v1986
        %2281 = vmatpush1.bf16.msra.mxu0 %v1985
        %2282 = vmatprep.subr.bf16.mxu0 %v1990
        %2283 = vmatpush1.bf16.msra.mxu0 %v1989
        %2284 = vmatprep.subr.bf16.mxu0 %v1994
        %2285 = vmatpush1.bf16.msra.mxu0 %v1993
        %2286 = vmatprep.subr.bf16.mxu0 %v1998
        %2287 = vmatpush1.bf16.msra.mxu0 %v1997
        %2288 = vmatprep.subr.bf16.mxu0 %v2002
        %2289 = vmatpush1.bf16.msra.mxu0 %v2001
        %2290 = vmatprep.subr.bf16.mxu0 %v2006
        %2291 = vmatpush1.bf16.msra.mxu0 %v2005
        %2292 = vmatprep.subr.bf16.mxu0 %v2010
        %2293 = vmatpush1.bf16.msra.mxu0 %v2009
        %2294 = vmatprep.subr.bf16.mxu0 %v2014
        %2295 = vmatpush1.bf16.msra.mxu0 %v2013
        %2296 = vmatprep.subr.bf16.mxu0 %v2018
        %2297 = vmatpush1.bf16.msra.mxu0 %v2017
        %2298 = vmatprep.subr.bf16.mxu0 %v2022
        %2299 = vmatpush1.bf16.msra.mxu0 %v2021
        %2300 = vmatprep.subr.bf16.mxu0 %v2026
        %2301 = vmatpush1.bf16.msra.mxu0 %v2025
        %2302 = vmatprep.mubr.bf16.mxu0 %v1338
        %2303 = vmatmul.mubr.bf16.gmra.mrb[0].mxu0 %v1337
        %v2304 = vpop.f32.mrb[0].mxu0
        %v2305 = vadd.f32 %v2192, %v2304
        %v2306 = vpop.f32.mrb[0].mxu0
        %v2307 = vadd.f32 %v2194, %v2306
        %v2308 = vpop.f32.mrb[0].mxu0
        %v2309 = vadd.f32 %v2196, %v2308
        %v2310 = vpop.f32.mrb[0].mxu0
        %v2311 = vadd.f32 %v2198, %v2310
        %2312 = vmatprep.mubr.bf16.mxu0 %v1342
        %2313 = vmatmul.mubr.bf16.gmra.mrb[0].mxu0 %v1341
        %v2314 = vpop.f32.mrb[0].mxu0
        %v2315 = vadd.f32 %v2202, %v2314
        %v2316 = vpop.f32.mrb[0].mxu0
        %v2317 = vadd.f32 %v2204, %v2316
        %v2318 = vpop.f32.mrb[0].mxu0
        %v2319 = vadd.f32 %v2206, %v2318
        %v2320 = vpop.f32.mrb[0].mxu0
        %v2321 = vadd.f32 %v2208, %v2320
        %2322 = vmatprep.mubr.bf16.mxu0 %v1346
        %2323 = vmatmul.mubr.bf16.gmra.mrb[0].mxu0 %v1345
        %v2324 = vpop.f32.mrb[0].mxu0
        %v2325 = vadd.f32 %v2212, %v2324
        %v2326 = vpop.f32.mrb[0].mxu0
        %v2327 = vadd.f32 %v2214, %v2326
        %v2328 = vpop.f32.mrb[0].mxu0
        %v2329 = vadd.f32 %v2216, %v2328
        %v2330 = vpop.f32.mrb[0].mxu0
        %v2331 = vadd.f32 %v2218, %v2330
        %2332 = vmatprep.mubr.bf16.mxu0 %v1350
        %2333 = vmatmul.mubr.bf16.gmra.mrb[0].mxu0 %v1349
        %v2334 = vpop.f32.mrb[0].mxu0
        %v2335 = vadd.f32 %v2222, %v2334
        %v2336 = vpop.f32.mrb[0].mxu0
        %v2337 = vadd.f32 %v2224, %v2336
        %v2338 = vpop.f32.mrb[0].mxu0
        %v2339 = vadd.f32 %v2226, %v2338
        %v2340 = vpop.f32.mrb[0].mxu0
        %v2341 = vadd.f32 %v2228, %v2340
        %2342 = vmatprep.mubr.bf16.mxu0 %v1354
        %2343 = vmatmul.mubr.bf16.gmra.mrb[0].mxu0 %v1353
        %v2344 = vpop.f32.mrb[0].mxu0
        %v2345 = vadd.f32 %v2232, %v2344
        %v2346 = vpop.f32.mrb[0].mxu0
        %v2347 = vadd.f32 %v2234, %v2346
        %v2348 = vpop.f32.mrb[0].mxu0
        %v2349 = vadd.f32 %v2236, %v2348
        %v2350 = vpop.f32.mrb[0].mxu0
        %v2351 = vadd.f32 %v2238, %v2350
        %2352 = vmatprep.mubr.bf16.mxu0 %v1358
        %2353 = vmatmul.mubr.bf16.gmra.mrb[0].mxu0 %v1357
        %v2354 = vpop.f32.mrb[0].mxu0
        %v2355 = vadd.f32 %v2242, %v2354
        %v2356 = vpop.f32.mrb[0].mxu0
        %v2357 = vadd.f32 %v2244, %v2356
        %v2358 = vpop.f32.mrb[0].mxu0
        %v2359 = vadd.f32 %v2246, %v2358
        %v2360 = vpop.f32.mrb[0].mxu0
        %v2361 = vadd.f32 %v2248, %v2360
        %2362 = vmatprep.mubr.bf16.mxu0 %v1362
        %2363 = vmatmul.mubr.bf16.gmra.mrb[0].mxu0 %v1361
        %v2364 = vpop.f32.mrb[0].mxu0
        %v2365 = vadd.f32 %v2252, %v2364
        %v2366 = vpop.f32.mrb[0].mxu0
        %v2367 = vadd.f32 %v2254, %v2366
        %v2368 = vpop.f32.mrb[0].mxu0
        %v2369 = vadd.f32 %v2256, %v2368
        %v2370 = vpop.f32.mrb[0].mxu0
        %v2371 = vadd.f32 %v2258, %v2370
        %2372 = vmatprep.mubr.bf16.mxu0 %v1366
        %2373 = vmatmul.mubr.bf16.gmra.mrb[0].mxu0 %v1365
        %v2374 = vpop.f32.mrb[0].mxu0
        %v2375 = vadd.f32 %v2262, %v2374
        %v2376 = vpop.f32.mrb[0].mxu0
        %v2377 = vadd.f32 %v2264, %v2376
        %v2378 = vpop.f32.mrb[0].mxu0
        %v2379 = vadd.f32 %v2266, %v2378
        %v2380 = vpop.f32.mrb[0].mxu0
        %v2381 = vadd.f32 %v2268, %v2380
        %2382 = vdwg.mxu0
        %2383 = vmatprep.subr.bf16.mxu0 %v1904
        %2384 = vmatpush1.bf16.msra.mxu0 %v1903
        %2385 = vmatprep.subr.bf16.mxu0 %v1908
        %2386 = vmatpush1.bf16.msra.mxu0 %v1907
        %2387 = vmatprep.subr.bf16.mxu0 %v1912
        %2388 = vmatpush1.bf16.msra.mxu0 %v1911
        %2389 = vmatprep.subr.bf16.mxu0 %v1916
        %2390 = vmatpush1.bf16.msra.mxu0 %v1915
        %2391 = vmatprep.subr.bf16.mxu0 %v1920
        %2392 = vmatpush1.bf16.msra.mxu0 %v1919
        %2393 = vmatprep.subr.bf16.mxu0 %v1924
        %2394 = vmatpush1.bf16.msra.mxu0 %v1923
        %2395 = vmatprep.subr.bf16.mxu0 %v1928
        %2396 = vmatpush1.bf16.msra.mxu0 %v1927
        %2397 = vmatprep.subr.bf16.mxu0 %v1932
        %2398 = vmatpush1.bf16.msra.mxu0 %v1931
        %2399 = vmatprep.subr.bf16.mxu0 %v1936
        %2400 = vmatpush1.bf16.msra.mxu0 %v1935
        %2401 = vmatprep.subr.bf16.mxu0 %v1940
        %2402 = vmatpush1.bf16.msra.mxu0 %v1939
        %2403 = vmatprep.subr.bf16.mxu0 %v1944
        %2404 = vmatpush1.bf16.msra.mxu0 %v1943
        %2405 = vmatprep.subr.bf16.mxu0 %v1948
        %2406 = vmatpush1.bf16.msra.mxu0 %v1947
        %2407 = vmatprep.subr.bf16.mxu0 %v1952
        %2408 = vmatpush1.bf16.msra.mxu0 %v1951
        %2409 = vmatprep.subr.bf16.mxu0 %v1956
        %2410 = vmatpush1.bf16.msra.mxu0 %v1955
        %2411 = vmatprep.subr.bf16.mxu0 %v1960
        %2412 = vmatpush1.bf16.msra.mxu0 %v1959
        %2413 = vmatprep.subr.bf16.mxu0 %v1964
        %2414 = vmatpush1.bf16.msra.mxu0 %v1963
        %2415 = vmatprep.mubr.bf16.mxu0 %v1336
        %2416 = vmatmul.mubr.bf16.gmra.mrb[0].mxu0 %v1335
        %v2417 = vpop.f32.mrb[0].mxu0
        %v2418 = vadd.f32 %v1508, %v2417
        %v2419 = vpop.f32.mrb[0].mxu0
        %v2420 = vadd.f32 %v1512, %v2419
        %v2421 = vpop.f32.mrb[0].mxu0
        %v2422 = vadd.f32 %v1508, %v2421
        %v2423 = vpop.f32.mrb[0].mxu0
        %v2424 = vadd.f32 %v1512, %v2423
        %2425 = vmatprep.mubr.bf16.mxu0 %v1340
        %2426 = vmatmul.mubr.bf16.gmra.mrb[0].mxu0 %v1339
        %v2427 = vpop.f32.mrb[0].mxu0
        %v2428 = vadd.f32 %v1508, %v2427
        %v2429 = vpop.f32.mrb[0].mxu0
        %v2430 = vadd.f32 %v1512, %v2429
        %v2431 = vpop.f32.mrb[0].mxu0
        %v2432 = vadd.f32 %v1508, %v2431
        %v2433 = vpop.f32.mrb[0].mxu0
        %v2434 = vadd.f32 %v1512, %v2433
        %2435 = vmatprep.mubr.bf16.mxu0 %v1344
        %2436 = vmatmul.mubr.bf16.gmra.mrb[0].mxu0 %v1343
        %v2437 = vpop.f32.mrb[0].mxu0
        %v2438 = vadd.f32 %v1508, %v2437
        %v2439 = vpop.f32.mrb[0].mxu0
        %v2440 = vadd.f32 %v1512, %v2439
        %v2441 = vpop.f32.mrb[0].mxu0
        %v2442 = vadd.f32 %v1508, %v2441
        %v2443 = vpop.f32.mrb[0].mxu0
        %v2444 = vadd.f32 %v1512, %v2443
        %2445 = vmatprep.mubr.bf16.mxu0 %v1348
        %2446 = vmatmul.mubr.bf16.gmra.mrb[0].mxu0 %v1347
        %v2447 = vpop.f32.mrb[0].mxu0
        %v2448 = vadd.f32 %v1508, %v2447
        %v2449 = vpop.f32.mrb[0].mxu0
        %v2450 = vadd.f32 %v1512, %v2449
        %v2451 = vpop.f32.mrb[0].mxu0
        %v2452 = vadd.f32 %v1508, %v2451
        %v2453 = vpop.f32.mrb[0].mxu0
        %v2454 = vadd.f32 %v1512, %v2453
        %2455 = vmatprep.mubr.bf16.mxu0 %v1352
        %2456 = vmatmul.mubr.bf16.gmra.mrb[0].mxu0 %v1351
        %v2457 = vpop.f32.mrb[0].mxu0
        %v2458 = vadd.f32 %v1508, %v2457
        %v2459 = vpop.f32.mrb[0].mxu0
        %v2460 = vadd.f32 %v1512, %v2459
        %v2461 = vpop.f32.mrb[0].mxu0
        %v2462 = vadd.f32 %v1508, %v2461
        %v2463 = vpop.f32.mrb[0].mxu0
        %v2464 = vadd.f32 %v1512, %v2463
        %2465 = vmatprep.mubr.bf16.mxu0 %v1356
        %2466 = vmatmul.mubr.bf16.gmra.mrb[0].mxu0 %v1355
        %v2467 = vpop.f32.mrb[0].mxu0
        %v2468 = vadd.f32 %v1508, %v2467
        %v2469 = vpop.f32.mrb[0].mxu0
        %v2470 = vadd.f32 %v1512, %v2469
        %v2471 = vpop.f32.mrb[0].mxu0
        %v2472 = vadd.f32 %v1508, %v2471
        %v2473 = vpop.f32.mrb[0].mxu0
        %v2474 = vadd.f32 %v1512, %v2473
        %2475 = vmatprep.mubr.bf16.mxu0 %v1360
        %2476 = vmatmul.mubr.bf16.gmra.mrb[0].mxu0 %v1359
        %v2477 = vpop.f32.mrb[0].mxu0
        %v2478 = vadd.f32 %v1508, %v2477
        %v2479 = vpop.f32.mrb[0].mxu0
        %v2480 = vadd.f32 %v1512, %v2479
        %v2481 = vpop.f32.mrb[0].mxu0
        %v2482 = vadd.f32 %v1508, %v2481
        %v2483 = vpop.f32.mrb[0].mxu0
        %v2484 = vadd.f32 %v1512, %v2483
        %2485 = vmatprep.mubr.bf16.mxu0 %v1364
        %2486 = vmatmul.mubr.bf16.gmra.mrb[0].mxu0 %v1363
        %v2487 = vpop.f32.mrb[0].mxu0
        %v2488 = vadd.f32 %v1508, %v2487
        %v2489 = vpop.f32.mrb[0].mxu0
        %v2490 = vadd.f32 %v1512, %v2489
        %v2491 = vpop.f32.mrb[0].mxu0
        %v2492 = vadd.f32 %v1508, %v2491
        %v2493 = vpop.f32.mrb[0].mxu0
        %v2494 = vadd.f32 %v1512, %v2493
        %2495 = vdwg.mxu0
        %2496 = vmatprep.subr.bf16.mxu0 %v1968
        %2497 = vmatpush1.bf16.msra.mxu0 %v1967
        %2498 = vmatprep.subr.bf16.mxu0 %v1972
        %2499 = vmatpush1.bf16.msra.mxu0 %v1971
        %2500 = vmatprep.subr.bf16.mxu0 %v1976
        %2501 = vmatpush1.bf16.msra.mxu0 %v1975
        %2502 = vmatprep.subr.bf16.mxu0 %v1980
        %2503 = vmatpush1.bf16.msra.mxu0 %v1979
        %2504 = vmatprep.subr.bf16.mxu0 %v1984
        %2505 = vmatpush1.bf16.msra.mxu0 %v1983
        %2506 = vmatprep.subr.bf16.mxu0 %v1988
        %2507 = vmatpush1.bf16.msra.mxu0 %v1987
        %2508 = vmatprep.subr.bf16.mxu0 %v1992
        %2509 = vmatpush1.bf16.msra.mxu0 %v1991
        %2510 = vmatprep.subr.bf16.mxu0 %v1996
        %2511 = vmatpush1.bf16.msra.mxu0 %v1995
        %2512 = vmatprep.subr.bf16.mxu0 %v2000
        %2513 = vmatpush1.bf16.msra.mxu0 %v1999
        %2514 = vmatprep.subr.bf16.mxu0 %v2004
        %2515 = vmatpush1.bf16.msra.mxu0 %v2003
        %2516 = vmatprep.subr.bf16.mxu0 %v2008
        %2517 = vmatpush1.bf16.msra.mxu0 %v2007
        %2518 = vmatprep.subr.bf16.mxu0 %v2012
        %2519 = vmatpush1.bf16.msra.mxu0 %v2011
        %2520 = vmatprep.subr.bf16.mxu0 %v2016
        %2521 = vmatpush1.bf16.msra.mxu0 %v2015
        %2522 = vmatprep.subr.bf16.mxu0 %v2020
        %2523 = vmatpush1.bf16.msra.mxu0 %v2019
        %2524 = vmatprep.subr.bf16.mxu0 %v2024
        %2525 = vmatpush1.bf16.msra.mxu0 %v2023
        %2526 = vmatprep.subr.bf16.mxu0 %v2028
        %2527 = vmatpush1.bf16.msra.mxu0 %v2027
        %2528 = vmatprep.mubr.bf16.mxu0 %v1338
        %2529 = vmatmul.mubr.bf16.gmra.mrb[0].mxu0 %v1337
        %v2530 = vpop.f32.mrb[0].mxu0
        %v2531 = vadd.f32 %v2418, %v2530
        %v2532 = vpop.f32.mrb[0].mxu0
        %v2533 = vadd.f32 %v2420, %v2532
        %v2534 = vpop.f32.mrb[0].mxu0
        %v2535 = vadd.f32 %v2422, %v2534
        %v2536 = vpop.f32.mrb[0].mxu0
        %v2537 = vadd.f32 %v2424, %v2536
        %2538 = vmatprep.mubr.bf16.mxu0 %v1342
        %2539 = vmatmul.mubr.bf16.gmra.mrb[0].mxu0 %v1341
        %v2540 = vpop.f32.mrb[0].mxu0
        %v2541 = vadd.f32 %v2428, %v2540
        %v2542 = vpop.f32.mrb[0].mxu0
        %v2543 = vadd.f32 %v2430, %v2542
        %v2544 = vpop.f32.mrb[0].mxu0
        %v2545 = vadd.f32 %v2432, %v2544
        %v2546 = vpop.f32.mrb[0].mxu0
        %v2547 = vadd.f32 %v2434, %v2546
        %2548 = vmatprep.mubr.bf16.mxu0 %v1346
        %2549 = vmatmul.mubr.bf16.gmra.mrb[0].mxu0 %v1345
        %v2550 = vpop.f32.mrb[0].mxu0
        %v2551 = vadd.f32 %v2438, %v2550
        %v2552 = vpop.f32.mrb[0].mxu0
        %v2553 = vadd.f32 %v2440, %v2552
        %v2554 = vpop.f32.mrb[0].mxu0
        %v2555 = vadd.f32 %v2442, %v2554
        %v2556 = vpop.f32.mrb[0].mxu0
        %v2557 = vadd.f32 %v2444, %v2556
        %2558 = vmatprep.mubr.bf16.mxu0 %v1350
        %2559 = vmatmul.mubr.bf16.gmra.mrb[0].mxu0 %v1349
        %v2560 = vpop.f32.mrb[0].mxu0
        %v2561 = vadd.f32 %v2448, %v2560
        %v2562 = vpop.f32.mrb[0].mxu0
        %v2563 = vadd.f32 %v2450, %v2562
        %v2564 = vpop.f32.mrb[0].mxu0
        %v2565 = vadd.f32 %v2452, %v2564
        %v2566 = vpop.f32.mrb[0].mxu0
        %v2567 = vadd.f32 %v2454, %v2566
        %2568 = vmatprep.mubr.bf16.mxu0 %v1354
        %2569 = vmatmul.mubr.bf16.gmra.mrb[0].mxu0 %v1353
        %v2570 = vpop.f32.mrb[0].mxu0
        %v2571 = vadd.f32 %v2458, %v2570
        %v2572 = vpop.f32.mrb[0].mxu0
        %v2573 = vadd.f32 %v2460, %v2572
        %v2574 = vpop.f32.mrb[0].mxu0
        %v2575 = vadd.f32 %v2462, %v2574
        %v2576 = vpop.f32.mrb[0].mxu0
        %v2577 = vadd.f32 %v2464, %v2576
        %2578 = vmatprep.mubr.bf16.mxu0 %v1358
        %2579 = vmatmul.mubr.bf16.gmra.mrb[0].mxu0 %v1357
        %v2580 = vpop.f32.mrb[0].mxu0
        %v2581 = vadd.f32 %v2468, %v2580
        %v2582 = vpop.f32.mrb[0].mxu0
        %v2583 = vadd.f32 %v2470, %v2582
        %v2584 = vpop.f32.mrb[0].mxu0
        %v2585 = vadd.f32 %v2472, %v2584
        %v2586 = vpop.f32.mrb[0].mxu0
        %v2587 = vadd.f32 %v2474, %v2586
        %2588 = vmatprep.mubr.bf16.mxu0 %v1362
        %2589 = vmatmul.mubr.bf16.gmra.mrb[0].mxu0 %v1361
        %v2590 = vpop.f32.mrb[0].mxu0
        %v2591 = vadd.f32 %v2478, %v2590
        %v2592 = vpop.f32.mrb[0].mxu0
        %v2593 = vadd.f32 %v2480, %v2592
        %v2594 = vpop.f32.mrb[0].mxu0
        %v2595 = vadd.f32 %v2482, %v2594
        %v2596 = vpop.f32.mrb[0].mxu0
        %v2597 = vadd.f32 %v2484, %v2596
        %2598 = vmatprep.mubr.bf16.mxu0 %v1366
        %2599 = vmatmul.mubr.bf16.gmra.mrb[0].mxu0 %v1365
        %v2600 = vpop.f32.mrb[0].mxu0
        %v2601 = vadd.f32 %v2488, %v2600
        %v2602 = vpop.f32.mrb[0].mxu0
        %v2603 = vadd.f32 %v2490, %v2602
        %v2604 = vpop.f32.mrb[0].mxu0
        %v2605 = vadd.f32 %v2492, %v2604
        %v2606 = vpop.f32.mrb[0].mxu0
        %v2607 = vadd.f32 %v2494, %v2606
        %2608 = vdwg.mxu0
        %v2609 = vpack.c.bf16 %v2309, %v2305
        %v2610 = vpack.c.bf16 %v2311, %v2307
        %v2611 = vpack.c.bf16 %v2535, %v2531
        %v2612 = vpack.c.bf16 %v2537, %v2533
        %v2613 = vpack.c.bf16 %v2319, %v2315
        %v2614 = vpack.c.bf16 %v2321, %v2317
        %v2615 = vpack.c.bf16 %v2545, %v2541
        %v2616 = vpack.c.bf16 %v2547, %v2543
        %v2617 = vpack.c.bf16 %v2329, %v2325
        %v2618 = vpack.c.bf16 %v2331, %v2327
        %v2619 = vpack.c.bf16 %v2555, %v2551
        %v2620 = vpack.c.bf16 %v2557, %v2553
        %v2621 = vpack.c.bf16 %v2339, %v2335
        %v2622 = vpack.c.bf16 %v2341, %v2337
        %v2623 = vpack.c.bf16 %v2565, %v2561
        %v2624 = vpack.c.bf16 %v2567, %v2563
        %v2625 = vpack.c.bf16 %v2349, %v2345
        %v2626 = vpack.c.bf16 %v2351, %v2347
        %v2627 = vpack.c.bf16 %v2575, %v2571
        %v2628 = vpack.c.bf16 %v2577, %v2573
        %v2629 = vpack.c.bf16 %v2359, %v2355
        %v2630 = vpack.c.bf16 %v2361, %v2357
        %v2631 = vpack.c.bf16 %v2585, %v2581
        %v2632 = vpack.c.bf16 %v2587, %v2583
        %v2633 = vpack.c.bf16 %v2369, %v2365
        %v2634 = vpack.c.bf16 %v2371, %v2367
        %v2635 = vpack.c.bf16 %v2595, %v2591
        %v2636 = vpack.c.bf16 %v2597, %v2593
        %v2637 = vpack.c.bf16 %v2379, %v2375
        %v2638 = vpack.c.bf16 %v2381, %v2377
        %v2639 = vpack.c.bf16 %v2605, %v2601
        %v2640 = vpack.c.bf16 %v2607, %v2603
        %v2641 = vmax.bf16 %v2609, 0
        %v2642 = vmax.bf16 %v2610, 0
        %v2643 = vmax.bf16 %v2611, 0
        %v2644 = vmax.bf16 %v2612, 0
        %v2645 = vmax.bf16 %v2613, 0
        %v2646 = vmax.bf16 %v2614, 0
        %v2647 = vmax.bf16 %v2615, 0
        %v2648 = vmax.bf16 %v2616, 0
        %v2649 = vmax.bf16 %v2617, 0
        %v2650 = vmax.bf16 %v2618, 0
        %v2651 = vmax.bf16 %v2619, 0
        %v2652 = vmax.bf16 %v2620, 0
        %v2653 = vmax.bf16 %v2621, 0
        %v2654 = vmax.bf16 %v2622, 0
        %v2655 = vmax.bf16 %v2623, 0
        %v2656 = vmax.bf16 %v2624, 0
        %v2657 = vmax.bf16 %v2625, 0
        %v2658 = vmax.bf16 %v2626, 0
        %v2659 = vmax.bf16 %v2627, 0
        %v2660 = vmax.bf16 %v2628, 0
        %v2661 = vmax.bf16 %v2629, 0
        %v2662 = vmax.bf16 %v2630, 0
        %v2663 = vmax.bf16 %v2631, 0
        %v2664 = vmax.bf16 %v2632, 0
        %v2665 = vmax.bf16 %v2633, 0
        %v2666 = vmax.bf16 %v2634, 0
        %v2667 = vmax.bf16 %v2635, 0
        %v2668 = vmax.bf16 %v2636, 0
        %v2669 = vmax.bf16 %v2637, 0
        %v2670 = vmax.bf16 %v2638, 0
        %v2671 = vmax.bf16 %v2639, 0
        %v2672 = vmax.bf16 %v2640, 0
        %v2673 = vld [vmem:[#allocation4] sm:$0xff]
        %v2674 = vld [vmem:[#allocation4 + $0x8] sm:$0xff]
        %v2675 = vld [vmem:[#allocation4 + $0x10] sm:$0xff]
        %v2676 = vld [vmem:[#allocation4 + $0x18] sm:$0xff]
        %v2677 = vld [vmem:[#allocation4 + $0x20] sm:$0xff]
        %v2678 = vld [vmem:[#allocation4 + $0x28] sm:$0xff]
        %v2679 = vld [vmem:[#allocation4 + $0x30] sm:$0xff]
        %v2680 = vld [vmem:[#allocation4 + $0x38] sm:$0xff]
        %v2681 = vld [vmem:[#allocation4 + $0x40] sm:$0xff]
        %v2682 = vld [vmem:[#allocation4 + $0x48] sm:$0xff]
        %v2683 = vld [vmem:[#allocation4 + $0x50] sm:$0xff]
        %v2684 = vld [vmem:[#allocation4 + $0x58] sm:$0xff]
        %v2685 = vld [vmem:[#allocation4 + $0x60] sm:$0xff]
        %v2686 = vld [vmem:[#allocation4 + $0x68] sm:$0xff]
        %v2687 = vld [vmem:[#allocation4 + $0x70] sm:$0xff]
        %v2688 = vld [vmem:[#allocation4 + $0x78] sm:$0xff]
        %v2689 = vld [vmem:[#allocation4 + $0x80] sm:$0xff]
        %v2690 = vld [vmem:[#allocation4 + $0x88] sm:$0xff]
        %v2691 = vld [vmem:[#allocation4 + $0x90] sm:$0xff]
        %v2692 = vld [vmem:[#allocation4 + $0x98] sm:$0xff]
        %v2693 = vld [vmem:[#allocation4 + $0xa0] sm:$0xff]
        %v2694 = vld [vmem:[#allocation4 + $0xa8] sm:$0xff]
        %v2695 = vld [vmem:[#allocation4 + $0xb0] sm:$0xff]
        %v2696 = vld [vmem:[#allocation4 + $0xb8] sm:$0xff]
        %v2697 = vld [vmem:[#allocation4 + $0xc0] sm:$0xff]
        %v2698 = vld [vmem:[#allocation4 + $0xc8] sm:$0xff]
        %v2699 = vld [vmem:[#allocation4 + $0xd0] sm:$0xff]
        %v2700 = vld [vmem:[#allocation4 + $0xd8] sm:$0xff]
        %v2701 = vld [vmem:[#allocation4 + $0xe0] sm:$0xff]
        %v2702 = vld [vmem:[#allocation4 + $0xe8] sm:$0xff]
        %v2703 = vld [vmem:[#allocation4 + $0xf0] sm:$0xff]
        %v2704 = vld [vmem:[#allocation4 + $0xf8] sm:$0xff]
        %v2705 = vld [vmem:[#allocation4 + $0x100] sm:$0xff]
        %v2706 = vld [vmem:[#allocation4 + $0x108] sm:$0xff]
        %v2707 = vld [vmem:[#allocation4 + $0x110] sm:$0xff]
        %v2708 = vld [vmem:[#allocation4 + $0x118] sm:$0xff]
        %v2709 = vld [vmem:[#allocation4 + $0x120] sm:$0xff]
        %v2710 = vld [vmem:[#allocation4 + $0x128] sm:$0xff]
        %v2711 = vld [vmem:[#allocation4 + $0x130] sm:$0xff]
        %v2712 = vld [vmem:[#allocation4 + $0x138] sm:$0xff]
        %v2713 = vld [vmem:[#allocation4 + $0x140] sm:$0xff]
        %v2714 = vld [vmem:[#allocation4 + $0x148] sm:$0xff]
        %v2715 = vld [vmem:[#allocation4 + $0x150] sm:$0xff]
        %v2716 = vld [vmem:[#allocation4 + $0x158] sm:$0xff]
        %v2717 = vld [vmem:[#allocation4 + $0x160] sm:$0xff]
        %v2718 = vld [vmem:[#allocation4 + $0x168] sm:$0xff]
        %v2719 = vld [vmem:[#allocation4 + $0x170] sm:$0xff]
        %v2720 = vld [vmem:[#allocation4 + $0x178] sm:$0xff]
        %v2721 = vld [vmem:[#allocation4 + $0x180] sm:$0xff]
        %v2722 = vld [vmem:[#allocation4 + $0x188] sm:$0xff]
        %v2723 = vld [vmem:[#allocation4 + $0x190] sm:$0xff]
        %v2724 = vld [vmem:[#allocation4 + $0x198] sm:$0xff]
        %v2725 = vld [vmem:[#allocation4 + $0x1a0] sm:$0xff]
        %v2726 = vld [vmem:[#allocation4 + $0x1a8] sm:$0xff]
        %v2727 = vld [vmem:[#allocation4 + $0x1b0] sm:$0xff]
        %v2728 = vld [vmem:[#allocation4 + $0x1b8] sm:$0xff]
        %v2729 = vld [vmem:[#allocation4 + $0x1c0] sm:$0xff]
        %v2730 = vld [vmem:[#allocation4 + $0x1c8] sm:$0xff]
        %v2731 = vld [vmem:[#allocation4 + $0x1d0] sm:$0xff]
        %v2732 = vld [vmem:[#allocation4 + $0x1d8] sm:$0xff]
        %v2733 = vld [vmem:[#allocation4 + $0x1e0] sm:$0xff]
        %v2734 = vld [vmem:[#allocation4 + $0x1e8] sm:$0xff]
        %v2735 = vld [vmem:[#allocation4 + $0x1f0] sm:$0xff]
        %v2736 = vld [vmem:[#allocation4 + $0x1f8] sm:$0xff]
        %v2737 = vld [vmem:[#allocation4 + $0x200] sm:$0xff]
        %v2738 = vld [vmem:[#allocation4 + $0x208] sm:$0xff]
        %v2739 = vld [vmem:[#allocation4 + $0x210] sm:$0xff]
        %v2740 = vld [vmem:[#allocation4 + $0x218] sm:$0xff]
        %v2741 = vld [vmem:[#allocation4 + $0x220] sm:$0xff]
        %v2742 = vld [vmem:[#allocation4 + $0x228] sm:$0xff]
        %v2743 = vld [vmem:[#allocation4 + $0x230] sm:$0xff]
        %v2744 = vld [vmem:[#allocation4 + $0x238] sm:$0xff]
        %v2745 = vld [vmem:[#allocation4 + $0x240] sm:$0xff]
        %v2746 = vld [vmem:[#allocation4 + $0x248] sm:$0xff]
        %v2747 = vld [vmem:[#allocation4 + $0x250] sm:$0xff]
        %v2748 = vld [vmem:[#allocation4 + $0x258] sm:$0xff]
        %v2749 = vld [vmem:[#allocation4 + $0x260] sm:$0xff]
        %v2750 = vld [vmem:[#allocation4 + $0x268] sm:$0xff]
        %v2751 = vld [vmem:[#allocation4 + $0x270] sm:$0xff]
        %v2752 = vld [vmem:[#allocation4 + $0x278] sm:$0xff]
        %v2753 = vld [vmem:[#allocation4 + $0x280] sm:$0xff]
        %v2754 = vld [vmem:[#allocation4 + $0x288] sm:$0xff]
        %v2755 = vld [vmem:[#allocation4 + $0x290] sm:$0xff]
        %v2756 = vld [vmem:[#allocation4 + $0x298] sm:$0xff]
        %v2757 = vld [vmem:[#allocation4 + $0x2a0] sm:$0xff]
        %v2758 = vld [vmem:[#allocation4 + $0x2a8] sm:$0xff]
        %v2759 = vld [vmem:[#allocation4 + $0x2b0] sm:$0xff]
        %v2760 = vld [vmem:[#allocation4 + $0x2b8] sm:$0xff]
        %v2761 = vld [vmem:[#allocation4 + $0x2c0] sm:$0xff]
        %v2762 = vld [vmem:[#allocation4 + $0x2c8] sm:$0xff]
        %v2763 = vld [vmem:[#allocation4 + $0x2d0] sm:$0xff]
        %v2764 = vld [vmem:[#allocation4 + $0x2d8] sm:$0xff]
        %v2765 = vld [vmem:[#allocation4 + $0x2e0] sm:$0xff]
        %v2766 = vld [vmem:[#allocation4 + $0x2e8] sm:$0xff]
        %v2767 = vld [vmem:[#allocation4 + $0x2f0] sm:$0xff]
        %v2768 = vld [vmem:[#allocation4 + $0x2f8] sm:$0xff]
        %v2769 = vld [vmem:[#allocation4 + $0x300] sm:$0xff]
        %v2770 = vld [vmem:[#allocation4 + $0x308] sm:$0xff]
        %v2771 = vld [vmem:[#allocation4 + $0x310] sm:$0xff]
        %v2772 = vld [vmem:[#allocation4 + $0x318] sm:$0xff]
        %v2773 = vld [vmem:[#allocation4 + $0x320] sm:$0xff]
        %v2774 = vld [vmem:[#allocation4 + $0x328] sm:$0xff]
        %v2775 = vld [vmem:[#allocation4 + $0x330] sm:$0xff]
        %v2776 = vld [vmem:[#allocation4 + $0x338] sm:$0xff]
        %v2777 = vld [vmem:[#allocation4 + $0x340] sm:$0xff]
        %v2778 = vld [vmem:[#allocation4 + $0x348] sm:$0xff]
        %v2779 = vld [vmem:[#allocation4 + $0x350] sm:$0xff]
        %v2780 = vld [vmem:[#allocation4 + $0x358] sm:$0xff]
        %v2781 = vld [vmem:[#allocation4 + $0x360] sm:$0xff]
        %v2782 = vld [vmem:[#allocation4 + $0x368] sm:$0xff]
        %v2783 = vld [vmem:[#allocation4 + $0x370] sm:$0xff]
        %v2784 = vld [vmem:[#allocation4 + $0x378] sm:$0xff]
        %v2785 = vld [vmem:[#allocation4 + $0x380] sm:$0xff]
        %v2786 = vld [vmem:[#allocation4 + $0x388] sm:$0xff]
        %v2787 = vld [vmem:[#allocation4 + $0x390] sm:$0xff]
        %v2788 = vld [vmem:[#allocation4 + $0x398] sm:$0xff]
        %v2789 = vld [vmem:[#allocation4 + $0x3a0] sm:$0xff]
        %v2790 = vld [vmem:[#allocation4 + $0x3a8] sm:$0xff]
        %v2791 = vld [vmem:[#allocation4 + $0x3b0] sm:$0xff]
        %v2792 = vld [vmem:[#allocation4 + $0x3b8] sm:$0xff]
        %v2793 = vld [vmem:[#allocation4 + $0x3c0] sm:$0xff]
        %v2794 = vld [vmem:[#allocation4 + $0x3c8] sm:$0xff]
        %v2795 = vld [vmem:[#allocation4 + $0x3d0] sm:$0xff]
        %v2796 = vld [vmem:[#allocation4 + $0x3d8] sm:$0xff]
        %v2797 = vld [vmem:[#allocation4 + $0x3e0] sm:$0xff]
        %v2798 = vld [vmem:[#allocation4 + $0x3e8] sm:$0xff]
        %v2799 = vld [vmem:[#allocation4 + $0x3f0] sm:$0xff]
        %v2800 = vld [vmem:[#allocation4 + $0x3f8] sm:$0xff]
        %v2801 = vld [vmem:[%s10] sm:$0xf]
        %v2803 = vlaneseq
        %v2804 = vshrl.u32 %v2803, 7
        %v2805 = vsub.s32 0, %v2804
        %v2806 = vrot.slane %v2801, %v2805
        %v2807 = vlaneseq
        %v2808 = vshrl.u32 %v2807, 7
        %v2809 = vsub.s32 1, %v2808
        %v2810 = vrot.slane %v2801, %v2809
        %v2811 = vlaneseq
        %v2812 = vshrl.u32 %v2811, 7
        %v2813 = vsub.s32 2, %v2812
        %v2814 = vrot.slane %v2801, %v2813
        %v2815 = vlaneseq
        %v2816 = vshrl.u32 %v2815, 7
        %v2817 = vsub.s32 3, %v2816
        %v2818 = vrot.slane %v2801, %v2817
        %v2951 = vunpack.c.l.b16 %v2673
        %v2952 = vunpack.c.h.b16 %v2673
        %v2953 = vunpack.c.l.b16 %v2674
        %v2954 = vunpack.c.h.b16 %v2674
        %v2955 = vunpack.c.l.b16 %v2675
        %v2956 = vunpack.c.h.b16 %v2675
        %v2957 = vunpack.c.l.b16 %v2676
        %v2958 = vunpack.c.h.b16 %v2676
        %v2959 = vunpack.c.l.b16 %v2677
        %v2960 = vunpack.c.h.b16 %v2677
        %v2961 = vunpack.c.l.b16 %v2678
        %v2962 = vunpack.c.h.b16 %v2678
        %v2963 = vunpack.c.l.b16 %v2679
        %v2964 = vunpack.c.h.b16 %v2679
        %v2965 = vunpack.c.l.b16 %v2680
        %v2966 = vunpack.c.h.b16 %v2680
        %v2967 = vunpack.c.l.b16 %v2681
        %v2968 = vunpack.c.h.b16 %v2681
        %v2969 = vunpack.c.l.b16 %v2682
        %v2970 = vunpack.c.h.b16 %v2682
        %v2971 = vunpack.c.l.b16 %v2683
        %v2972 = vunpack.c.h.b16 %v2683
        %v2973 = vunpack.c.l.b16 %v2684
        %v2974 = vunpack.c.h.b16 %v2684
        %v2975 = vunpack.c.l.b16 %v2685
        %v2976 = vunpack.c.h.b16 %v2685
        %v2977 = vunpack.c.l.b16 %v2686
        %v2978 = vunpack.c.h.b16 %v2686
        %v2979 = vunpack.c.l.b16 %v2687
        %v2980 = vunpack.c.h.b16 %v2687
        %v2981 = vunpack.c.l.b16 %v2688
        %v2982 = vunpack.c.h.b16 %v2688
        %v2983 = vunpack.c.l.b16 %v2689
        %v2984 = vunpack.c.h.b16 %v2689
        %v2985 = vunpack.c.l.b16 %v2690
        %v2986 = vunpack.c.h.b16 %v2690
        %v2987 = vunpack.c.l.b16 %v2691
        %v2988 = vunpack.c.h.b16 %v2691
        %v2989 = vunpack.c.l.b16 %v2692
        %v2990 = vunpack.c.h.b16 %v2692
        %v2991 = vunpack.c.l.b16 %v2693
        %v2992 = vunpack.c.h.b16 %v2693
        %v2993 = vunpack.c.l.b16 %v2694
        %v2994 = vunpack.c.h.b16 %v2694
        %v2995 = vunpack.c.l.b16 %v2695
        %v2996 = vunpack.c.h.b16 %v2695
        %v2997 = vunpack.c.l.b16 %v2696
        %v2998 = vunpack.c.h.b16 %v2696
        %v2999 = vunpack.c.l.b16 %v2697
        %v3000 = vunpack.c.h.b16 %v2697
        %v3001 = vunpack.c.l.b16 %v2698
        %v3002 = vunpack.c.h.b16 %v2698
        %v3003 = vunpack.c.l.b16 %v2699
        %v3004 = vunpack.c.h.b16 %v2699
        %v3005 = vunpack.c.l.b16 %v2700
        %v3006 = vunpack.c.h.b16 %v2700
        %v3007 = vunpack.c.l.b16 %v2701
        %v3008 = vunpack.c.h.b16 %v2701
        %v3009 = vunpack.c.l.b16 %v2702
        %v3010 = vunpack.c.h.b16 %v2702
        %v3011 = vunpack.c.l.b16 %v2703
        %v3012 = vunpack.c.h.b16 %v2703
        %v3013 = vunpack.c.l.b16 %v2704
        %v3014 = vunpack.c.h.b16 %v2704
        %v3015 = vunpack.c.l.b16 %v2705
        %v3016 = vunpack.c.h.b16 %v2705
        %v3017 = vunpack.c.l.b16 %v2706
        %v3018 = vunpack.c.h.b16 %v2706
        %v3019 = vunpack.c.l.b16 %v2707
        %v3020 = vunpack.c.h.b16 %v2707
        %v3021 = vunpack.c.l.b16 %v2708
        %v3022 = vunpack.c.h.b16 %v2708
        %v3023 = vunpack.c.l.b16 %v2709
        %v3024 = vunpack.c.h.b16 %v2709
        %v3025 = vunpack.c.l.b16 %v2710
        %v3026 = vunpack.c.h.b16 %v2710
        %v3027 = vunpack.c.l.b16 %v2711
        %v3028 = vunpack.c.h.b16 %v2711
        %v3029 = vunpack.c.l.b16 %v2712
        %v3030 = vunpack.c.h.b16 %v2712
        %v3031 = vunpack.c.l.b16 %v2713
        %v3032 = vunpack.c.h.b16 %v2713
        %v3033 = vunpack.c.l.b16 %v2714
        %v3034 = vunpack.c.h.b16 %v2714
        %v3035 = vunpack.c.l.b16 %v2715
        %v3036 = vunpack.c.h.b16 %v2715
        %v3037 = vunpack.c.l.b16 %v2716
        %v3038 = vunpack.c.h.b16 %v2716
        %v3039 = vunpack.c.l.b16 %v2717
        %v3040 = vunpack.c.h.b16 %v2717
        %v3041 = vunpack.c.l.b16 %v2718
        %v3042 = vunpack.c.h.b16 %v2718
        %v3043 = vunpack.c.l.b16 %v2719
        %v3044 = vunpack.c.h.b16 %v2719
        %v3045 = vunpack.c.l.b16 %v2720
        %v3046 = vunpack.c.h.b16 %v2720
        %v3047 = vunpack.c.l.b16 %v2721
        %v3048 = vunpack.c.h.b16 %v2721
        %v3049 = vunpack.c.l.b16 %v2722
        %v3050 = vunpack.c.h.b16 %v2722
        %v3051 = vunpack.c.l.b16 %v2723
        %v3052 = vunpack.c.h.b16 %v2723
        %v3053 = vunpack.c.l.b16 %v2724
        %v3054 = vunpack.c.h.b16 %v2724
        %v3055 = vunpack.c.l.b16 %v2725
        %v3056 = vunpack.c.h.b16 %v2725
        %v3057 = vunpack.c.l.b16 %v2726
        %v3058 = vunpack.c.h.b16 %v2726
        %v3059 = vunpack.c.l.b16 %v2727
        %v3060 = vunpack.c.h.b16 %v2727
        %v3061 = vunpack.c.l.b16 %v2728
        %v3062 = vunpack.c.h.b16 %v2728
        %v3063 = vunpack.c.l.b16 %v2729
        %v3064 = vunpack.c.h.b16 %v2729
        %v3065 = vunpack.c.l.b16 %v2730
        %v3066 = vunpack.c.h.b16 %v2730
        %v3067 = vunpack.c.l.b16 %v2731
        %v3068 = vunpack.c.h.b16 %v2731
        %v3069 = vunpack.c.l.b16 %v2732
        %v3070 = vunpack.c.h.b16 %v2732
        %v3071 = vunpack.c.l.b16 %v2733
        %v3072 = vunpack.c.h.b16 %v2733
        %v3073 = vunpack.c.l.b16 %v2734
        %v3074 = vunpack.c.h.b16 %v2734
        %v3075 = vunpack.c.l.b16 %v2735
        %v3076 = vunpack.c.h.b16 %v2735
        %v3077 = vunpack.c.l.b16 %v2736
        %v3078 = vunpack.c.h.b16 %v2736
        %v3079 = vunpack.c.l.b16 %v2737
        %v3080 = vunpack.c.h.b16 %v2737
        %v3081 = vunpack.c.l.b16 %v2738
        %v3082 = vunpack.c.h.b16 %v2738
        %v3083 = vunpack.c.l.b16 %v2739
        %v3084 = vunpack.c.h.b16 %v2739
        %v3085 = vunpack.c.l.b16 %v2740
        %v3086 = vunpack.c.h.b16 %v2740
        %v3087 = vunpack.c.l.b16 %v2741
        %v3088 = vunpack.c.h.b16 %v2741
        %v3089 = vunpack.c.l.b16 %v2742
        %v3090 = vunpack.c.h.b16 %v2742
        %v3091 = vunpack.c.l.b16 %v2743
        %v3092 = vunpack.c.h.b16 %v2743
        %v3093 = vunpack.c.l.b16 %v2744
        %v3094 = vunpack.c.h.b16 %v2744
        %v3095 = vunpack.c.l.b16 %v2745
        %v3096 = vunpack.c.h.b16 %v2745
        %v3097 = vunpack.c.l.b16 %v2746
        %v3098 = vunpack.c.h.b16 %v2746
        %v3099 = vunpack.c.l.b16 %v2747
        %v3100 = vunpack.c.h.b16 %v2747
        %v3101 = vunpack.c.l.b16 %v2748
        %v3102 = vunpack.c.h.b16 %v2748
        %v3103 = vunpack.c.l.b16 %v2749
        %v3104 = vunpack.c.h.b16 %v2749
        %v3105 = vunpack.c.l.b16 %v2750
        %v3106 = vunpack.c.h.b16 %v2750
        %v3107 = vunpack.c.l.b16 %v2751
        %v3108 = vunpack.c.h.b16 %v2751
        %v3109 = vunpack.c.l.b16 %v2752
        %v3110 = vunpack.c.h.b16 %v2752
        %v3111 = vunpack.c.l.b16 %v2753
        %v3112 = vunpack.c.h.b16 %v2753
        %v3113 = vunpack.c.l.b16 %v2754
        %v3114 = vunpack.c.h.b16 %v2754
        %v3115 = vunpack.c.l.b16 %v2755
        %v3116 = vunpack.c.h.b16 %v2755
        %v3117 = vunpack.c.l.b16 %v2756
        %v3118 = vunpack.c.h.b16 %v2756
        %v3119 = vunpack.c.l.b16 %v2757
        %v3120 = vunpack.c.h.b16 %v2757
        %v3121 = vunpack.c.l.b16 %v2758
        %v3122 = vunpack.c.h.b16 %v2758
        %v3123 = vunpack.c.l.b16 %v2759
        %v3124 = vunpack.c.h.b16 %v2759
        %v3125 = vunpack.c.l.b16 %v2760
        %v3126 = vunpack.c.h.b16 %v2760
        %v3127 = vunpack.c.l.b16 %v2761
        %v3128 = vunpack.c.h.b16 %v2761
        %v3129 = vunpack.c.l.b16 %v2762
        %v3130 = vunpack.c.h.b16 %v2762
        %v3131 = vunpack.c.l.b16 %v2763
        %v3132 = vunpack.c.h.b16 %v2763
        %v3133 = vunpack.c.l.b16 %v2764
        %v3134 = vunpack.c.h.b16 %v2764
        %v3135 = vunpack.c.l.b16 %v2765
        %v3136 = vunpack.c.h.b16 %v2765
        %v3137 = vunpack.c.l.b16 %v2766
        %v3138 = vunpack.c.h.b16 %v2766
        %v3139 = vunpack.c.l.b16 %v2767
        %v3140 = vunpack.c.h.b16 %v2767
        %v3141 = vunpack.c.l.b16 %v2768
        %v3142 = vunpack.c.h.b16 %v2768
        %v3143 = vunpack.c.l.b16 %v2769
        %v3144 = vunpack.c.h.b16 %v2769
        %v3145 = vunpack.c.l.b16 %v2770
        %v3146 = vunpack.c.h.b16 %v2770
        %v3147 = vunpack.c.l.b16 %v2771
        %v3148 = vunpack.c.h.b16 %v2771
        %v3149 = vunpack.c.l.b16 %v2772
        %v3150 = vunpack.c.h.b16 %v2772
        %v3151 = vunpack.c.l.b16 %v2773
        %v3152 = vunpack.c.h.b16 %v2773
        %v3153 = vunpack.c.l.b16 %v2774
        %v3154 = vunpack.c.h.b16 %v2774
        %v3155 = vunpack.c.l.b16 %v2775
        %v3156 = vunpack.c.h.b16 %v2775
        %v3157 = vunpack.c.l.b16 %v2776
        %v3158 = vunpack.c.h.b16 %v2776
        %v3159 = vunpack.c.l.b16 %v2777
        %v3160 = vunpack.c.h.b16 %v2777
        %v3161 = vunpack.c.l.b16 %v2778
        %v3162 = vunpack.c.h.b16 %v2778
        %v3163 = vunpack.c.l.b16 %v2779
        %v3164 = vunpack.c.h.b16 %v2779
        %v3165 = vunpack.c.l.b16 %v2780
        %v3166 = vunpack.c.h.b16 %v2780
        %v3167 = vunpack.c.l.b16 %v2781
        %v3168 = vunpack.c.h.b16 %v2781
        %v3169 = vunpack.c.l.b16 %v2782
        %v3170 = vunpack.c.h.b16 %v2782
        %v3171 = vunpack.c.l.b16 %v2783
        %v3172 = vunpack.c.h.b16 %v2783
        %v3173 = vunpack.c.l.b16 %v2784
        %v3174 = vunpack.c.h.b16 %v2784
        %v3175 = vunpack.c.l.b16 %v2785
        %v3176 = vunpack.c.h.b16 %v2785
        %v3177 = vunpack.c.l.b16 %v2786
        %v3178 = vunpack.c.h.b16 %v2786
        %v3179 = vunpack.c.l.b16 %v2787
        %v3180 = vunpack.c.h.b16 %v2787
        %v3181 = vunpack.c.l.b16 %v2788
        %v3182 = vunpack.c.h.b16 %v2788
        %v3183 = vunpack.c.l.b16 %v2789
        %v3184 = vunpack.c.h.b16 %v2789
        %v3185 = vunpack.c.l.b16 %v2790
        %v3186 = vunpack.c.h.b16 %v2790
        %v3187 = vunpack.c.l.b16 %v2791
        %v3188 = vunpack.c.h.b16 %v2791
        %v3189 = vunpack.c.l.b16 %v2792
        %v3190 = vunpack.c.h.b16 %v2792
        %v3191 = vunpack.c.l.b16 %v2793
        %v3192 = vunpack.c.h.b16 %v2793
        %v3193 = vunpack.c.l.b16 %v2794
        %v3194 = vunpack.c.h.b16 %v2794
        %v3195 = vunpack.c.l.b16 %v2795
        %v3196 = vunpack.c.h.b16 %v2795
        %v3197 = vunpack.c.l.b16 %v2796
        %v3198 = vunpack.c.h.b16 %v2796
        %v3199 = vunpack.c.l.b16 %v2797
        %v3200 = vunpack.c.h.b16 %v2797
        %v3201 = vunpack.c.l.b16 %v2798
        %v3202 = vunpack.c.h.b16 %v2798
        %v3203 = vunpack.c.l.b16 %v2799
        %v3204 = vunpack.c.h.b16 %v2799
        %v3205 = vunpack.c.l.b16 %v2800
        %v3206 = vunpack.c.h.b16 %v2800
        %v3207 = vpack.c.b16 %v2955, %v2951
        %v3208 = vpack.c.b16 %v2956, %v2952
        %v3209 = vpack.c.b16 %v2957, %v2953
        %v3210 = vpack.c.b16 %v2958, %v2954
        %v3211 = vpack.c.b16 %v2963, %v2959
        %v3212 = vpack.c.b16 %v2964, %v2960
        %v3213 = vpack.c.b16 %v2965, %v2961
        %v3214 = vpack.c.b16 %v2966, %v2962
        %v3215 = vpack.c.b16 %v2971, %v2967
        %v3216 = vpack.c.b16 %v2972, %v2968
        %v3217 = vpack.c.b16 %v2973, %v2969
        %v3218 = vpack.c.b16 %v2974, %v2970
        %v3219 = vpack.c.b16 %v2979, %v2975
        %v3220 = vpack.c.b16 %v2980, %v2976
        %v3221 = vpack.c.b16 %v2981, %v2977
        %v3222 = vpack.c.b16 %v2982, %v2978
        %v3223 = vpack.c.b16 %v2987, %v2983
        %v3224 = vpack.c.b16 %v2988, %v2984
        %v3225 = vpack.c.b16 %v2989, %v2985
        %v3226 = vpack.c.b16 %v2990, %v2986
        %v3227 = vpack.c.b16 %v2995, %v2991
        %v3228 = vpack.c.b16 %v2996, %v2992
        %v3229 = vpack.c.b16 %v2997, %v2993
        %v3230 = vpack.c.b16 %v2998, %v2994
        %v3231 = vpack.c.b16 %v3003, %v2999
        %v3232 = vpack.c.b16 %v3004, %v3000
        %v3233 = vpack.c.b16 %v3005, %v3001
        %v3234 = vpack.c.b16 %v3006, %v3002
        %v3235 = vpack.c.b16 %v3011, %v3007
        %v3236 = vpack.c.b16 %v3012, %v3008
        %v3237 = vpack.c.b16 %v3013, %v3009
        %v3238 = vpack.c.b16 %v3014, %v3010
        %v3239 = vpack.c.b16 %v3019, %v3015
        %v3240 = vpack.c.b16 %v3020, %v3016
        %v3241 = vpack.c.b16 %v3021, %v3017
        %v3242 = vpack.c.b16 %v3022, %v3018
        %v3243 = vpack.c.b16 %v3027, %v3023
        %v3244 = vpack.c.b16 %v3028, %v3024
        %v3245 = vpack.c.b16 %v3029, %v3025
        %v3246 = vpack.c.b16 %v3030, %v3026
        %v3247 = vpack.c.b16 %v3035, %v3031
        %v3248 = vpack.c.b16 %v3036, %v3032
        %v3249 = vpack.c.b16 %v3037, %v3033
        %v3250 = vpack.c.b16 %v3038, %v3034
        %v3251 = vpack.c.b16 %v3043, %v3039
        %v3252 = vpack.c.b16 %v3044, %v3040
        %v3253 = vpack.c.b16 %v3045, %v3041
        %v3254 = vpack.c.b16 %v3046, %v3042
        %v3255 = vpack.c.b16 %v3051, %v3047
        %v3256 = vpack.c.b16 %v3052, %v3048
        %v3257 = vpack.c.b16 %v3053, %v3049
        %v3258 = vpack.c.b16 %v3054, %v3050
        %v3259 = vpack.c.b16 %v3059, %v3055
        %v3260 = vpack.c.b16 %v3060, %v3056
        %v3261 = vpack.c.b16 %v3061, %v3057
        %v3262 = vpack.c.b16 %v3062, %v3058
        %v3263 = vpack.c.b16 %v3067, %v3063
        %v3264 = vpack.c.b16 %v3068, %v3064
        %v3265 = vpack.c.b16 %v3069, %v3065
        %v3266 = vpack.c.b16 %v3070, %v3066
        %v3267 = vpack.c.b16 %v3075, %v3071
        %v3268 = vpack.c.b16 %v3076, %v3072
        %v3269 = vpack.c.b16 %v3077, %v3073
        %v3270 = vpack.c.b16 %v3078, %v3074
        %v3271 = vpack.c.b16 %v3083, %v3079
        %v3272 = vpack.c.b16 %v3084, %v3080
        %v3273 = vpack.c.b16 %v3085, %v3081
        %v3274 = vpack.c.b16 %v3086, %v3082
        %v3275 = vpack.c.b16 %v3091, %v3087
        %v3276 = vpack.c.b16 %v3092, %v3088
        %v3277 = vpack.c.b16 %v3093, %v3089
        %v3278 = vpack.c.b16 %v3094, %v3090
        %v3279 = vpack.c.b16 %v3099, %v3095
        %v3280 = vpack.c.b16 %v3100, %v3096
        %v3281 = vpack.c.b16 %v3101, %v3097
        %v3282 = vpack.c.b16 %v3102, %v3098
        %v3283 = vpack.c.b16 %v3107, %v3103
        %v3284 = vpack.c.b16 %v3108, %v3104
        %v3285 = vpack.c.b16 %v3109, %v3105
        %v3286 = vpack.c.b16 %v3110, %v3106
        %v3287 = vpack.c.b16 %v3115, %v3111
        %v3288 = vpack.c.b16 %v3116, %v3112
        %v3289 = vpack.c.b16 %v3117, %v3113
        %v3290 = vpack.c.b16 %v3118, %v3114
        %v3291 = vpack.c.b16 %v3123, %v3119
        %v3292 = vpack.c.b16 %v3124, %v3120
        %v3293 = vpack.c.b16 %v3125, %v3121
        %v3294 = vpack.c.b16 %v3126, %v3122
        %v3295 = vpack.c.b16 %v3131, %v3127
        %v3296 = vpack.c.b16 %v3132, %v3128
        %v3297 = vpack.c.b16 %v3133, %v3129
        %v3298 = vpack.c.b16 %v3134, %v3130
        %v3299 = vpack.c.b16 %v3139, %v3135
        %v3300 = vpack.c.b16 %v3140, %v3136
        %v3301 = vpack.c.b16 %v3141, %v3137
        %v3302 = vpack.c.b16 %v3142, %v3138
        %v3303 = vpack.c.b16 %v3147, %v3143
        %v3304 = vpack.c.b16 %v3148, %v3144
        %v3305 = vpack.c.b16 %v3149, %v3145
        %v3306 = vpack.c.b16 %v3150, %v3146
        %v3307 = vpack.c.b16 %v3155, %v3151
        %v3308 = vpack.c.b16 %v3156, %v3152
        %v3309 = vpack.c.b16 %v3157, %v3153
        %v3310 = vpack.c.b16 %v3158, %v3154
        %v3311 = vpack.c.b16 %v3163, %v3159
        %v3312 = vpack.c.b16 %v3164, %v3160
        %v3313 = vpack.c.b16 %v3165, %v3161
        %v3314 = vpack.c.b16 %v3166, %v3162
        %v3315 = vpack.c.b16 %v3171, %v3167
        %v3316 = vpack.c.b16 %v3172, %v3168
        %v3317 = vpack.c.b16 %v3173, %v3169
        %v3318 = vpack.c.b16 %v3174, %v3170
        %v3319 = vpack.c.b16 %v3179, %v3175
        %v3320 = vpack.c.b16 %v3180, %v3176
        %v3321 = vpack.c.b16 %v3181, %v3177
        %v3322 = vpack.c.b16 %v3182, %v3178
        %v3323 = vpack.c.b16 %v3187, %v3183
        %v3324 = vpack.c.b16 %v3188, %v3184
        %v3325 = vpack.c.b16 %v3189, %v3185
        %v3326 = vpack.c.b16 %v3190, %v3186
        %v3327 = vpack.c.b16 %v3195, %v3191
        %v3328 = vpack.c.b16 %v3196, %v3192
        %v3329 = vpack.c.b16 %v3197, %v3193
        %v3330 = vpack.c.b16 %v3198, %v3194
        %v3331 = vpack.c.b16 %v3203, %v3199
        %v3332 = vpack.c.b16 %v3204, %v3200
        %v3333 = vpack.c.b16 %v3205, %v3201
        %v3334 = vpack.c.b16 %v3206, %v3202
        %3463 = vmatprep.subr.bf16.mxu0 %v3208
        %3464 = vmatpush1.bf16.msra.mxu0 %v3207
        %3465 = vmatprep.subr.bf16.mxu0 %v3212
        %3466 = vmatpush1.bf16.msra.mxu0 %v3211
        %3467 = vmatprep.subr.bf16.mxu0 %v3216
        %3468 = vmatpush1.bf16.msra.mxu0 %v3215
        %3469 = vmatprep.subr.bf16.mxu0 %v3220
        %3470 = vmatpush1.bf16.msra.mxu0 %v3219
        %3471 = vmatprep.subr.bf16.mxu0 %v3224
        %3472 = vmatpush1.bf16.msra.mxu0 %v3223
        %3473 = vmatprep.subr.bf16.mxu0 %v3228
        %3474 = vmatpush1.bf16.msra.mxu0 %v3227
        %3475 = vmatprep.subr.bf16.mxu0 %v3232
        %3476 = vmatpush1.bf16.msra.mxu0 %v3231
        %3477 = vmatprep.subr.bf16.mxu0 %v3236
        %3478 = vmatpush1.bf16.msra.mxu0 %v3235
        %3479 = vmatprep.subr.bf16.mxu0 %v3240
        %3480 = vmatpush1.bf16.msra.mxu0 %v3239
        %3481 = vmatprep.subr.bf16.mxu0 %v3244
        %3482 = vmatpush1.bf16.msra.mxu0 %v3243
        %3483 = vmatprep.subr.bf16.mxu0 %v3248
        %3484 = vmatpush1.bf16.msra.mxu0 %v3247
        %3485 = vmatprep.subr.bf16.mxu0 %v3252
        %3486 = vmatpush1.bf16.msra.mxu0 %v3251
        %3487 = vmatprep.subr.bf16.mxu0 %v3256
        %3488 = vmatpush1.bf16.msra.mxu0 %v3255
        %3489 = vmatprep.subr.bf16.mxu0 %v3260
        %3490 = vmatpush1.bf16.msra.mxu0 %v3259
        %3491 = vmatprep.subr.bf16.mxu0 %v3264
        %3492 = vmatpush1.bf16.msra.mxu0 %v3263
        %3493 = vmatprep.subr.bf16.mxu0 %v3268
        %3494 = vmatpush1.bf16.msra.mxu0 %v3267
        %3495 = vmatprep.mubr.bf16.mxu0 %v2642
        %3496 = vmatmul.mubr.bf16.gmra.mrb[0].mxu0 %v2641
        %v3497 = vpop.f32.mrb[0].mxu0
        %v3498 = vadd.f32 %v2806, %v3497
        %v3499 = vpop.f32.mrb[0].mxu0
        %v3500 = vadd.f32 %v2810, %v3499
        %v3501 = vpop.f32.mrb[0].mxu0
        %v3502 = vadd.f32 %v2806, %v3501
        %v3503 = vpop.f32.mrb[0].mxu0
        %v3504 = vadd.f32 %v2810, %v3503
        %3505 = vmatprep.mubr.bf16.mxu0 %v2646
        %3506 = vmatmul.mubr.bf16.gmra.mrb[0].mxu0 %v2645
        %v3507 = vpop.f32.mrb[0].mxu0
        %v3508 = vadd.f32 %v2806, %v3507
        %v3509 = vpop.f32.mrb[0].mxu0
        %v3510 = vadd.f32 %v2810, %v3509
        %v3511 = vpop.f32.mrb[0].mxu0
        %v3512 = vadd.f32 %v2806, %v3511
        %v3513 = vpop.f32.mrb[0].mxu0
        %v3514 = vadd.f32 %v2810, %v3513
        %3515 = vmatprep.mubr.bf16.mxu0 %v2650
        %3516 = vmatmul.mubr.bf16.gmra.mrb[0].mxu0 %v2649
        %v3517 = vpop.f32.mrb[0].mxu0
        %v3518 = vadd.f32 %v2806, %v3517
        %v3519 = vpop.f32.mrb[0].mxu0
        %v3520 = vadd.f32 %v2810, %v3519
        %v3521 = vpop.f32.mrb[0].mxu0
        %v3522 = vadd.f32 %v2806, %v3521
        %v3523 = vpop.f32.mrb[0].mxu0
        %v3524 = vadd.f32 %v2810, %v3523
        %3525 = vmatprep.mubr.bf16.mxu0 %v2654
        %3526 = vmatmul.mubr.bf16.gmra.mrb[0].mxu0 %v2653
        %v3527 = vpop.f32.mrb[0].mxu0
        %v3528 = vadd.f32 %v2806, %v3527
        %v3529 = vpop.f32.mrb[0].mxu0
        %v3530 = vadd.f32 %v2810, %v3529
        %v3531 = vpop.f32.mrb[0].mxu0
        %v3532 = vadd.f32 %v2806, %v3531
        %v3533 = vpop.f32.mrb[0].mxu0
        %v3534 = vadd.f32 %v2810, %v3533
        %3535 = vmatprep.mubr.bf16.mxu0 %v2658
        %3536 = vmatmul.mubr.bf16.gmra.mrb[0].mxu0 %v2657
        %v3537 = vpop.f32.mrb[0].mxu0
        %v3538 = vadd.f32 %v2806, %v3537
        %v3539 = vpop.f32.mrb[0].mxu0
        %v3540 = vadd.f32 %v2810, %v3539
        %v3541 = vpop.f32.mrb[0].mxu0
        %v3542 = vadd.f32 %v2806, %v3541
        %v3543 = vpop.f32.mrb[0].mxu0
        %v3544 = vadd.f32 %v2810, %v3543
        %3545 = vmatprep.mubr.bf16.mxu0 %v2662
        %3546 = vmatmul.mubr.bf16.gmra.mrb[0].mxu0 %v2661
        %v3547 = vpop.f32.mrb[0].mxu0
        %v3548 = vadd.f32 %v2806, %v3547
        %v3549 = vpop.f32.mrb[0].mxu0
        %v3550 = vadd.f32 %v2810, %v3549
        %v3551 = vpop.f32.mrb[0].mxu0
        %v3552 = vadd.f32 %v2806, %v3551
        %v3553 = vpop.f32.mrb[0].mxu0
        %v3554 = vadd.f32 %v2810, %v3553
        %3555 = vmatprep.mubr.bf16.mxu0 %v2666
        %3556 = vmatmul.mubr.bf16.gmra.mrb[0].mxu0 %v2665
        %v3557 = vpop.f32.mrb[0].mxu0
        %v3558 = vadd.f32 %v2806, %v3557
        %v3559 = vpop.f32.mrb[0].mxu0
        %v3560 = vadd.f32 %v2810, %v3559
        %v3561 = vpop.f32.mrb[0].mxu0
        %v3562 = vadd.f32 %v2806, %v3561
        %v3563 = vpop.f32.mrb[0].mxu0
        %v3564 = vadd.f32 %v2810, %v3563
        %3565 = vmatprep.mubr.bf16.mxu0 %v2670
        %3566 = vmatmul.mubr.bf16.gmra.mrb[0].mxu0 %v2669
        %v3567 = vpop.f32.mrb[0].mxu0
        %v3568 = vadd.f32 %v2806, %v3567
        %v3569 = vpop.f32.mrb[0].mxu0
        %v3570 = vadd.f32 %v2810, %v3569
        %v3571 = vpop.f32.mrb[0].mxu0
        %v3572 = vadd.f32 %v2806, %v3571
        %v3573 = vpop.f32.mrb[0].mxu0
        %v3574 = vadd.f32 %v2810, %v3573
        %3575 = vdwg.mxu0
        %3576 = vmatprep.subr.bf16.mxu0 %v3272
        %3577 = vmatpush1.bf16.msra.mxu0 %v3271
        %3578 = vmatprep.subr.bf16.mxu0 %v3276
        %3579 = vmatpush1.bf16.msra.mxu0 %v3275
        %3580 = vmatprep.subr.bf16.mxu0 %v3280
        %3581 = vmatpush1.bf16.msra.mxu0 %v3279
        %3582 = vmatprep.subr.bf16.mxu0 %v3284
        %3583 = vmatpush1.bf16.msra.mxu0 %v3283
        %3584 = vmatprep.subr.bf16.mxu0 %v3288
        %3585 = vmatpush1.bf16.msra.mxu0 %v3287
        %3586 = vmatprep.subr.bf16.mxu0 %v3292
        %3587 = vmatpush1.bf16.msra.mxu0 %v3291
        %3588 = vmatprep.subr.bf16.mxu0 %v3296
        %3589 = vmatpush1.bf16.msra.mxu0 %v3295
        %3590 = vmatprep.subr.bf16.mxu0 %v3300
        %3591 = vmatpush1.bf16.msra.mxu0 %v3299
        %3592 = vmatprep.subr.bf16.mxu0 %v3304
        %3593 = vmatpush1.bf16.msra.mxu0 %v3303
        %3594 = vmatprep.subr.bf16.mxu0 %v3308
        %3595 = vmatpush1.bf16.msra.mxu0 %v3307
        %3596 = vmatprep.subr.bf16.mxu0 %v3312
        %3597 = vmatpush1.bf16.msra.mxu0 %v3311
        %3598 = vmatprep.subr.bf16.mxu0 %v3316
        %3599 = vmatpush1.bf16.msra.mxu0 %v3315
        %3600 = vmatprep.subr.bf16.mxu0 %v3320
        %3601 = vmatpush1.bf16.msra.mxu0 %v3319
        %3602 = vmatprep.subr.bf16.mxu0 %v3324
        %3603 = vmatpush1.bf16.msra.mxu0 %v3323
        %3604 = vmatprep.subr.bf16.mxu0 %v3328
        %3605 = vmatpush1.bf16.msra.mxu0 %v3327
        %3606 = vmatprep.subr.bf16.mxu0 %v3332
        %3607 = vmatpush1.bf16.msra.mxu0 %v3331
        %3608 = vmatprep.mubr.bf16.mxu0 %v2644
        %3609 = vmatmul.mubr.bf16.gmra.mrb[0].mxu0 %v2643
        %v3610 = vpop.f32.mrb[0].mxu0
        %v3611 = vadd.f32 %v3498, %v3610
        %v3612 = vpop.f32.mrb[0].mxu0
        %v3613 = vadd.f32 %v3500, %v3612
        %v3614 = vpop.f32.mrb[0].mxu0
        %v3615 = vadd.f32 %v3502, %v3614
        %v3616 = vpop.f32.mrb[0].mxu0
        %v3617 = vadd.f32 %v3504, %v3616
        %3618 = vmatprep.mubr.bf16.mxu0 %v2648
        %3619 = vmatmul.mubr.bf16.gmra.mrb[0].mxu0 %v2647
        %v3620 = vpop.f32.mrb[0].mxu0
        %v3621 = vadd.f32 %v3508, %v3620
        %v3622 = vpop.f32.mrb[0].mxu0
        %v3623 = vadd.f32 %v3510, %v3622
        %v3624 = vpop.f32.mrb[0].mxu0
        %v3625 = vadd.f32 %v3512, %v3624
        %v3626 = vpop.f32.mrb[0].mxu0
        %v3627 = vadd.f32 %v3514, %v3626
        %3628 = vmatprep.mubr.bf16.mxu0 %v2652
        %3629 = vmatmul.mubr.bf16.gmra.mrb[0].mxu0 %v2651
        %v3630 = vpop.f32.mrb[0].mxu0
        %v3631 = vadd.f32 %v3518, %v3630
        %v3632 = vpop.f32.mrb[0].mxu0
        %v3633 = vadd.f32 %v3520, %v3632
        %v3634 = vpop.f32.mrb[0].mxu0
        %v3635 = vadd.f32 %v3522, %v3634
        %v3636 = vpop.f32.mrb[0].mxu0
        %v3637 = vadd.f32 %v3524, %v3636
        %3638 = vmatprep.mubr.bf16.mxu0 %v2656
        %3639 = vmatmul.mubr.bf16.gmra.mrb[0].mxu0 %v2655
        %v3640 = vpop.f32.mrb[0].mxu0
        %v3641 = vadd.f32 %v3528, %v3640
        %v3642 = vpop.f32.mrb[0].mxu0
        %v3643 = vadd.f32 %v3530, %v3642
        %v3644 = vpop.f32.mrb[0].mxu0
        %v3645 = vadd.f32 %v3532, %v3644
        %v3646 = vpop.f32.mrb[0].mxu0
        %v3647 = vadd.f32 %v3534, %v3646
        %3648 = vmatprep.mubr.bf16.mxu0 %v2660
        %3649 = vmatmul.mubr.bf16.gmra.mrb[0].mxu0 %v2659
        %v3650 = vpop.f32.mrb[0].mxu0
        %v3651 = vadd.f32 %v3538, %v3650
        %v3652 = vpop.f32.mrb[0].mxu0
        %v3653 = vadd.f32 %v3540, %v3652
        %v3654 = vpop.f32.mrb[0].mxu0
        %v3655 = vadd.f32 %v3542, %v3654
        %v3656 = vpop.f32.mrb[0].mxu0
        %v3657 = vadd.f32 %v3544, %v3656
        %3658 = vmatprep.mubr.bf16.mxu0 %v2664
        %3659 = vmatmul.mubr.bf16.gmra.mrb[0].mxu0 %v2663
        %v3660 = vpop.f32.mrb[0].mxu0
        %v3661 = vadd.f32 %v3548, %v3660
        %v3662 = vpop.f32.mrb[0].mxu0
        %v3663 = vadd.f32 %v3550, %v3662
        %v3664 = vpop.f32.mrb[0].mxu0
        %v3665 = vadd.f32 %v3552, %v3664
        %v3666 = vpop.f32.mrb[0].mxu0
        %v3667 = vadd.f32 %v3554, %v3666
        %3668 = vmatprep.mubr.bf16.mxu0 %v2668
        %3669 = vmatmul.mubr.bf16.gmra.mrb[0].mxu0 %v2667
        %v3670 = vpop.f32.mrb[0].mxu0
        %v3671 = vadd.f32 %v3558, %v3670
        %v3672 = vpop.f32.mrb[0].mxu0
        %v3673 = vadd.f32 %v3560, %v3672
        %v3674 = vpop.f32.mrb[0].mxu0
        %v3675 = vadd.f32 %v3562, %v3674
        %v3676 = vpop.f32.mrb[0].mxu0
        %v3677 = vadd.f32 %v3564, %v3676
        %3678 = vmatprep.mubr.bf16.mxu0 %v2672
        %3679 = vmatmul.mubr.bf16.gmra.mrb[0].mxu0 %v2671
        %v3680 = vpop.f32.mrb[0].mxu0
        %v3681 = vadd.f32 %v3568, %v3680
        %v3682 = vpop.f32.mrb[0].mxu0
        %v3683 = vadd.f32 %v3570, %v3682
        %v3684 = vpop.f32.mrb[0].mxu0
        %v3685 = vadd.f32 %v3572, %v3684
        %v3686 = vpop.f32.mrb[0].mxu0
        %v3687 = vadd.f32 %v3574, %v3686
        %3688 = vdwg.mxu0
        %3689 = vmatprep.subr.bf16.mxu0 %v3210
        %3690 = vmatpush1.bf16.msra.mxu0 %v3209
        %3691 = vmatprep.subr.bf16.mxu0 %v3214
        %3692 = vmatpush1.bf16.msra.mxu0 %v3213
        %3693 = vmatprep.subr.bf16.mxu0 %v3218
        %3694 = vmatpush1.bf16.msra.mxu0 %v3217
        %3695 = vmatprep.subr.bf16.mxu0 %v3222
        %3696 = vmatpush1.bf16.msra.mxu0 %v3221
        %3697 = vmatprep.subr.bf16.mxu0 %v3226
        %3698 = vmatpush1.bf16.msra.mxu0 %v3225
        %3699 = vmatprep.subr.bf16.mxu0 %v3230
        %3700 = vmatpush1.bf16.msra.mxu0 %v3229
        %3701 = vmatprep.subr.bf16.mxu0 %v3234
        %3702 = vmatpush1.bf16.msra.mxu0 %v3233
        %3703 = vmatprep.subr.bf16.mxu0 %v3238
        %3704 = vmatpush1.bf16.msra.mxu0 %v3237
        %3705 = vmatprep.subr.bf16.mxu0 %v3242
        %3706 = vmatpush1.bf16.msra.mxu0 %v3241
        %3707 = vmatprep.subr.bf16.mxu0 %v3246
        %3708 = vmatpush1.bf16.msra.mxu0 %v3245
        %3709 = vmatprep.subr.bf16.mxu0 %v3250
        %3710 = vmatpush1.bf16.msra.mxu0 %v3249
        %3711 = vmatprep.subr.bf16.mxu0 %v3254
        %3712 = vmatpush1.bf16.msra.mxu0 %v3253
        %3713 = vmatprep.subr.bf16.mxu0 %v3258
        %3714 = vmatpush1.bf16.msra.mxu0 %v3257
        %3715 = vmatprep.subr.bf16.mxu0 %v3262
        %3716 = vmatpush1.bf16.msra.mxu0 %v3261
        %3717 = vmatprep.subr.bf16.mxu0 %v3266
        %3718 = vmatpush1.bf16.msra.mxu0 %v3265
        %3719 = vmatprep.subr.bf16.mxu0 %v3270
        %3720 = vmatpush1.bf16.msra.mxu0 %v3269
        %3721 = vmatprep.mubr.bf16.mxu0 %v2642
        %3722 = vmatmul.mubr.bf16.gmra.mrb[0].mxu0 %v2641
        %v3723 = vpop.f32.mrb[0].mxu0
        %v3724 = vadd.f32 %v2814, %v3723
        %v3725 = vpop.f32.mrb[0].mxu0
        %v3726 = vadd.f32 %v2818, %v3725
        %v3727 = vpop.f32.mrb[0].mxu0
        %v3728 = vadd.f32 %v2814, %v3727
        %v3729 = vpop.f32.mrb[0].mxu0
        %v3730 = vadd.f32 %v2818, %v3729
        %3731 = vmatprep.mubr.bf16.mxu0 %v2646
        %3732 = vmatmul.mubr.bf16.gmra.mrb[0].mxu0 %v2645
        %v3733 = vpop.f32.mrb[0].mxu0
        %v3734 = vadd.f32 %v2814, %v3733
        %v3735 = vpop.f32.mrb[0].mxu0
        %v3736 = vadd.f32 %v2818, %v3735
        %v3737 = vpop.f32.mrb[0].mxu0
        %v3738 = vadd.f32 %v2814, %v3737
        %v3739 = vpop.f32.mrb[0].mxu0
        %v3740 = vadd.f32 %v2818, %v3739
        %3741 = vmatprep.mubr.bf16.mxu0 %v2650
        %3742 = vmatmul.mubr.bf16.gmra.mrb[0].mxu0 %v2649
        %v3743 = vpop.f32.mrb[0].mxu0
        %v3744 = vadd.f32 %v2814, %v3743
        %v3745 = vpop.f32.mrb[0].mxu0
        %v3746 = vadd.f32 %v2818, %v3745
        %v3747 = vpop.f32.mrb[0].mxu0
        %v3748 = vadd.f32 %v2814, %v3747
        %v3749 = vpop.f32.mrb[0].mxu0
        %v3750 = vadd.f32 %v2818, %v3749
        %3751 = vmatprep.mubr.bf16.mxu0 %v2654
        %3752 = vmatmul.mubr.bf16.gmra.mrb[0].mxu0 %v2653
        %v3753 = vpop.f32.mrb[0].mxu0
        %v3754 = vadd.f32 %v2814, %v3753
        %v3755 = vpop.f32.mrb[0].mxu0
        %v3756 = vadd.f32 %v2818, %v3755
        %v3757 = vpop.f32.mrb[0].mxu0
        %v3758 = vadd.f32 %v2814, %v3757
        %v3759 = vpop.f32.mrb[0].mxu0
        %v3760 = vadd.f32 %v2818, %v3759
        %3761 = vmatprep.mubr.bf16.mxu0 %v2658
        %3762 = vmatmul.mubr.bf16.gmra.mrb[0].mxu0 %v2657
        %v3763 = vpop.f32.mrb[0].mxu0
        %v3764 = vadd.f32 %v2814, %v3763
        %v3765 = vpop.f32.mrb[0].mxu0
        %v3766 = vadd.f32 %v2818, %v3765
        %v3767 = vpop.f32.mrb[0].mxu0
        %v3768 = vadd.f32 %v2814, %v3767
        %v3769 = vpop.f32.mrb[0].mxu0
        %v3770 = vadd.f32 %v2818, %v3769
        %3771 = vmatprep.mubr.bf16.mxu0 %v2662
        %3772 = vmatmul.mubr.bf16.gmra.mrb[0].mxu0 %v2661
        %v3773 = vpop.f32.mrb[0].mxu0
        %v3774 = vadd.f32 %v2814, %v3773
        %v3775 = vpop.f32.mrb[0].mxu0
        %v3776 = vadd.f32 %v2818, %v3775
        %v3777 = vpop.f32.mrb[0].mxu0
        %v3778 = vadd.f32 %v2814, %v3777
        %v3779 = vpop.f32.mrb[0].mxu0
        %v3780 = vadd.f32 %v2818, %v3779
        %3781 = vmatprep.mubr.bf16.mxu0 %v2666
        %3782 = vmatmul.mubr.bf16.gmra.mrb[0].mxu0 %v2665
        %v3783 = vpop.f32.mrb[0].mxu0
        %v3784 = vadd.f32 %v2814, %v3783
        %v3785 = vpop.f32.mrb[0].mxu0
        %v3786 = vadd.f32 %v2818, %v3785
        %v3787 = vpop.f32.mrb[0].mxu0
        %v3788 = vadd.f32 %v2814, %v3787
        %v3789 = vpop.f32.mrb[0].mxu0
        %v3790 = vadd.f32 %v2818, %v3789
        %3791 = vmatprep.mubr.bf16.mxu0 %v2670
        %3792 = vmatmul.mubr.bf16.gmra.mrb[0].mxu0 %v2669
        %v3793 = vpop.f32.mrb[0].mxu0
        %v3794 = vadd.f32 %v2814, %v3793
        %v3795 = vpop.f32.mrb[0].mxu0
        %v3796 = vadd.f32 %v2818, %v3795
        %v3797 = vpop.f32.mrb[0].mxu0
        %v3798 = vadd.f32 %v2814, %v3797
        %v3799 = vpop.f32.mrb[0].mxu0
        %v3800 = vadd.f32 %v2818, %v3799
        %3801 = vdwg.mxu0
        %3802 = vmatprep.subr.bf16.mxu0 %v3274
        %3803 = vmatpush1.bf16.msra.mxu0 %v3273
        %3804 = vmatprep.subr.bf16.mxu0 %v3278
        %3805 = vmatpush1.bf16.msra.mxu0 %v3277
        %3806 = vmatprep.subr.bf16.mxu0 %v3282
        %3807 = vmatpush1.bf16.msra.mxu0 %v3281
        %3808 = vmatprep.subr.bf16.mxu0 %v3286
        %3809 = vmatpush1.bf16.msra.mxu0 %v3285
        %3810 = vmatprep.subr.bf16.mxu0 %v3290
        %3811 = vmatpush1.bf16.msra.mxu0 %v3289
        %3812 = vmatprep.subr.bf16.mxu0 %v3294
        %3813 = vmatpush1.bf16.msra.mxu0 %v3293
        %3814 = vmatprep.subr.bf16.mxu0 %v3298
        %3815 = vmatpush1.bf16.msra.mxu0 %v3297
        %3816 = vmatprep.subr.bf16.mxu0 %v3302
        %3817 = vmatpush1.bf16.msra.mxu0 %v3301
        %3818 = vmatprep.subr.bf16.mxu0 %v3306
        %3819 = vmatpush1.bf16.msra.mxu0 %v3305
        %3820 = vmatprep.subr.bf16.mxu0 %v3310
        %3821 = vmatpush1.bf16.msra.mxu0 %v3309
        %3822 = vmatprep.subr.bf16.mxu0 %v3314
        %3823 = vmatpush1.bf16.msra.mxu0 %v3313
        %3824 = vmatprep.subr.bf16.mxu0 %v3318
        %3825 = vmatpush1.bf16.msra.mxu0 %v3317
        %3826 = vmatprep.subr.bf16.mxu0 %v3322
        %3827 = vmatpush1.bf16.msra.mxu0 %v3321
        %3828 = vmatprep.subr.bf16.mxu0 %v3326
        %3829 = vmatpush1.bf16.msra.mxu0 %v3325
        %3830 = vmatprep.subr.bf16.mxu0 %v3330
        %3831 = vmatpush1.bf16.msra.mxu0 %v3329
        %3832 = vmatprep.subr.bf16.mxu0 %v3334
        %3833 = vmatpush1.bf16.msra.mxu0 %v3333
        %3834 = vmatprep.mubr.bf16.mxu0 %v2644
        %3835 = vmatmul.mubr.bf16.gmra.mrb[0].mxu0 %v2643
        %v3836 = vpop.f32.mrb[0].mxu0
        %v3837 = vadd.f32 %v3724, %v3836
        %v3838 = vpop.f32.mrb[0].mxu0
        %v3839 = vadd.f32 %v3726, %v3838
        %v3840 = vpop.f32.mrb[0].mxu0
        %v3841 = vadd.f32 %v3728, %v3840
        %v3842 = vpop.f32.mrb[0].mxu0
        %v3843 = vadd.f32 %v3730, %v3842
        %3844 = vmatprep.mubr.bf16.mxu0 %v2648
        %3845 = vmatmul.mubr.bf16.gmra.mrb[0].mxu0 %v2647
        %v3846 = vpop.f32.mrb[0].mxu0
        %v3847 = vadd.f32 %v3734, %v3846
        %v3848 = vpop.f32.mrb[0].mxu0
        %v3849 = vadd.f32 %v3736, %v3848
        %v3850 = vpop.f32.mrb[0].mxu0
        %v3851 = vadd.f32 %v3738, %v3850
        %v3852 = vpop.f32.mrb[0].mxu0
        %v3853 = vadd.f32 %v3740, %v3852
        %3854 = vmatprep.mubr.bf16.mxu0 %v2652
        %3855 = vmatmul.mubr.bf16.gmra.mrb[0].mxu0 %v2651
        %v3856 = vpop.f32.mrb[0].mxu0
        %v3857 = vadd.f32 %v3744, %v3856
        %v3858 = vpop.f32.mrb[0].mxu0
        %v3859 = vadd.f32 %v3746, %v3858
        %v3860 = vpop.f32.mrb[0].mxu0
        %v3861 = vadd.f32 %v3748, %v3860
        %v3862 = vpop.f32.mrb[0].mxu0
        %v3863 = vadd.f32 %v3750, %v3862
        %3864 = vmatprep.mubr.bf16.mxu0 %v2656
        %3865 = vmatmul.mubr.bf16.gmra.mrb[0].mxu0 %v2655
        %v3866 = vpop.f32.mrb[0].mxu0
        %v3867 = vadd.f32 %v3754, %v3866
        %v3868 = vpop.f32.mrb[0].mxu0
        %v3869 = vadd.f32 %v3756, %v3868
        %v3870 = vpop.f32.mrb[0].mxu0
        %v3871 = vadd.f32 %v3758, %v3870
        %v3872 = vpop.f32.mrb[0].mxu0
        %v3873 = vadd.f32 %v3760, %v3872
        %3874 = vmatprep.mubr.bf16.mxu0 %v2660
        %3875 = vmatmul.mubr.bf16.gmra.mrb[0].mxu0 %v2659
        %v3876 = vpop.f32.mrb[0].mxu0
        %v3877 = vadd.f32 %v3764, %v3876
        %v3878 = vpop.f32.mrb[0].mxu0
        %v3879 = vadd.f32 %v3766, %v3878
        %v3880 = vpop.f32.mrb[0].mxu0
        %v3881 = vadd.f32 %v3768, %v3880
        %v3882 = vpop.f32.mrb[0].mxu0
        %v3883 = vadd.f32 %v3770, %v3882
        %3884 = vmatprep.mubr.bf16.mxu0 %v2664
        %3885 = vmatmul.mubr.bf16.gmra.mrb[0].mxu0 %v2663
        %v3886 = vpop.f32.mrb[0].mxu0
        %v3887 = vadd.f32 %v3774, %v3886
        %v3888 = vpop.f32.mrb[0].mxu0
        %v3889 = vadd.f32 %v3776, %v3888
        %v3890 = vpop.f32.mrb[0].mxu0
        %v3891 = vadd.f32 %v3778, %v3890
        %v3892 = vpop.f32.mrb[0].mxu0
        %v3893 = vadd.f32 %v3780, %v3892
        %3894 = vmatprep.mubr.bf16.mxu0 %v2668
        %3895 = vmatmul.mubr.bf16.gmra.mrb[0].mxu0 %v2667
        %v3896 = vpop.f32.mrb[0].mxu0
        %v3897 = vadd.f32 %v3784, %v3896
        %v3898 = vpop.f32.mrb[0].mxu0
        %v3899 = vadd.f32 %v3786, %v3898
        %v3900 = vpop.f32.mrb[0].mxu0
        %v3901 = vadd.f32 %v3788, %v3900
        %v3902 = vpop.f32.mrb[0].mxu0
        %v3903 = vadd.f32 %v3790, %v3902
        %3904 = vmatprep.mubr.bf16.mxu0 %v2672
        %3905 = vmatmul.mubr.bf16.gmra.mrb[0].mxu0 %v2671
        %v3906 = vpop.f32.mrb[0].mxu0
        %v3907 = vadd.f32 %v3794, %v3906
        %v3908 = vpop.f32.mrb[0].mxu0
        %v3909 = vadd.f32 %v3796, %v3908
        %v3910 = vpop.f32.mrb[0].mxu0
        %v3911 = vadd.f32 %v3798, %v3910
        %v3912 = vpop.f32.mrb[0].mxu0
        %v3913 = vadd.f32 %v3800, %v3912
        %3914 = vdwg.mxu0
        %v3915 = vpack.c.bf16 %v3615, %v3611
        %v3916 = vpack.c.bf16 %v3617, %v3613
        %v3917 = vpack.c.bf16 %v3841, %v3837
        %v3918 = vpack.c.bf16 %v3843, %v3839
        %v3919 = vpack.c.bf16 %v3625, %v3621
        %v3920 = vpack.c.bf16 %v3627, %v3623
        %v3921 = vpack.c.bf16 %v3851, %v3847
        %v3922 = vpack.c.bf16 %v3853, %v3849
        %v3923 = vpack.c.bf16 %v3635, %v3631
        %v3924 = vpack.c.bf16 %v3637, %v3633
        %v3925 = vpack.c.bf16 %v3861, %v3857
        %v3926 = vpack.c.bf16 %v3863, %v3859
        %v3927 = vpack.c.bf16 %v3645, %v3641
        %v3928 = vpack.c.bf16 %v3647, %v3643
        %v3929 = vpack.c.bf16 %v3871, %v3867
        %v3930 = vpack.c.bf16 %v3873, %v3869
        %v3931 = vpack.c.bf16 %v3655, %v3651
        %v3932 = vpack.c.bf16 %v3657, %v3653
        %v3933 = vpack.c.bf16 %v3881, %v3877
        %v3934 = vpack.c.bf16 %v3883, %v3879
        %v3935 = vpack.c.bf16 %v3665, %v3661
        %v3936 = vpack.c.bf16 %v3667, %v3663
        %v3937 = vpack.c.bf16 %v3891, %v3887
        %v3938 = vpack.c.bf16 %v3893, %v3889
        %v3939 = vpack.c.bf16 %v3675, %v3671
        %v3940 = vpack.c.bf16 %v3677, %v3673
        %v3941 = vpack.c.bf16 %v3901, %v3897
        %v3942 = vpack.c.bf16 %v3903, %v3899
        %v3943 = vpack.c.bf16 %v3685, %v3681
        %v3944 = vpack.c.bf16 %v3687, %v3683
        %v3945 = vpack.c.bf16 %v3911, %v3907
        %v3946 = vpack.c.bf16 %v3913, %v3909
        %v3947 = vmax.bf16 %v3915, 0
        %v3948 = vmax.bf16 %v3916, 0
        %v3949 = vmax.bf16 %v3917, 0
        %v3950 = vmax.bf16 %v3918, 0
        %v3951 = vmax.bf16 %v3919, 0
        %v3952 = vmax.bf16 %v3920, 0
        %v3953 = vmax.bf16 %v3921, 0
        %v3954 = vmax.bf16 %v3922, 0
        %v3955 = vmax.bf16 %v3923, 0
        %v3956 = vmax.bf16 %v3924, 0
        %v3957 = vmax.bf16 %v3925, 0
        %v3958 = vmax.bf16 %v3926, 0
        %v3959 = vmax.bf16 %v3927, 0
        %v3960 = vmax.bf16 %v3928, 0
        %v3961 = vmax.bf16 %v3929, 0
        %v3962 = vmax.bf16 %v3930, 0
        %v3963 = vmax.bf16 %v3931, 0
        %v3964 = vmax.bf16 %v3932, 0
        %v3965 = vmax.bf16 %v3933, 0
        %v3966 = vmax.bf16 %v3934, 0
        %v3967 = vmax.bf16 %v3935, 0
        %v3968 = vmax.bf16 %v3936, 0
        %v3969 = vmax.bf16 %v3937, 0
        %v3970 = vmax.bf16 %v3938, 0
        %v3971 = vmax.bf16 %v3939, 0
        %v3972 = vmax.bf16 %v3940, 0
        %v3973 = vmax.bf16 %v3941, 0
        %v3974 = vmax.bf16 %v3942, 0
        %v3975 = vmax.bf16 %v3943, 0
        %v3976 = vmax.bf16 %v3944, 0
        %v3977 = vmax.bf16 %v3945, 0
        %v3978 = vmax.bf16 %v3946, 0
        %v3979 = vld [vmem:[%s11] sm:$0xf]
        %v3980 = vld [vmem:[%s11 + $0x4] sm:$0xf]
        %v3981 = vld [vmem:[%s11 + $0x8] sm:$0xf]
        %v3982 = vld [vmem:[%s11 + $0xc] sm:$0xf]
        %v3983 = vld [vmem:[%s11 + $0x10] sm:$0xf]
        %v3984 = vld [vmem:[%s11 + $0x14] sm:$0xf]
        %v3985 = vld [vmem:[%s11 + $0x18] sm:$0xf]
        %v3986 = vld [vmem:[%s11 + $0x1c] sm:$0xf]
        %v3987 = vld [vmem:[%s11 + $0x20] sm:$0xf]
        %v3988 = vld [vmem:[%s11 + $0x24] sm:$0xf]
        %v3989 = vld [vmem:[%s11 + $0x28] sm:$0xf]
        %v3990 = vld [vmem:[%s11 + $0x2c] sm:$0xf]
        %v3991 = vld [vmem:[%s11 + $0x30] sm:$0xf]
        %v3992 = vld [vmem:[%s11 + $0x34] sm:$0xf]
        %v3993 = vld [vmem:[%s11 + $0x38] sm:$0xf]
        %v3994 = vld [vmem:[%s11 + $0x3c] sm:$0xf]
        %v3995 = vld [vmem:[%s11 + $0x40] sm:$0xf]
        %v3996 = vld [vmem:[%s11 + $0x44] sm:$0xf]
        %v3997 = vld [vmem:[%s11 + $0x48] sm:$0xf]
        %v3998 = vld [vmem:[%s11 + $0x4c] sm:$0xf]
        %v3999 = vld [vmem:[%s11 + $0x50] sm:$0xf]
        %v4000 = vld [vmem:[%s11 + $0x54] sm:$0xf]
        %v4001 = vld [vmem:[%s11 + $0x58] sm:$0xf]
        %v4002 = vld [vmem:[%s11 + $0x5c] sm:$0xf]
        %v4003 = vld [vmem:[%s11 + $0x60] sm:$0xf]
        %v4004 = vld [vmem:[%s11 + $0x64] sm:$0xf]
        %v4005 = vld [vmem:[%s11 + $0x68] sm:$0xf]
        %v4006 = vld [vmem:[%s11 + $0x6c] sm:$0xf]
        %v4007 = vld [vmem:[%s11 + $0x70] sm:$0xf]
        %v4008 = vld [vmem:[%s11 + $0x74] sm:$0xf]
        %v4009 = vld [vmem:[%s11 + $0x78] sm:$0xf]
        %v4010 = vld [vmem:[%s11 + $0x7c] sm:$0xf]
        %v4011 = vld [vmem:[%s11 + $0x80] sm:$0xf]
        %v4012 = vld [vmem:[%s11 + $0x84] sm:$0xf]
        %v4013 = vld [vmem:[%s11 + $0x88] sm:$0xf]
        %v4014 = vld [vmem:[%s11 + $0x8c] sm:$0xf]
        %v4015 = vld [vmem:[%s11 + $0x90] sm:$0xf]
        %v4016 = vld [vmem:[%s11 + $0x94] sm:$0xf]
        %v4017 = vld [vmem:[%s11 + $0x98] sm:$0xf]
        %v4018 = vld [vmem:[%s11 + $0x9c] sm:$0xf]
        %v4019 = vld [vmem:[%s11 + $0xa0] sm:$0xf]
        %v4020 = vld [vmem:[%s11 + $0xa4] sm:$0xf]
        %v4021 = vld [vmem:[%s11 + $0xa8] sm:$0xf]
        %v4022 = vld [vmem:[%s11 + $0xac] sm:$0xf]
        %v4023 = vld [vmem:[%s11 + $0xb0] sm:$0xf]
        %v4024 = vld [vmem:[%s11 + $0xb4] sm:$0xf]
        %v4025 = vld [vmem:[%s11 + $0xb8] sm:$0xf]
        %v4026 = vld [vmem:[%s11 + $0xbc] sm:$0xf]
        %v4027 = vld [vmem:[%s11 + $0xc0] sm:$0xf]
        %v4028 = vld [vmem:[%s11 + $0xc4] sm:$0xf]
        %v4029 = vld [vmem:[%s11 + $0xc8] sm:$0xf]
        %v4030 = vld [vmem:[%s11 + $0xcc] sm:$0xf]
        %v4031 = vld [vmem:[%s11 + $0xd0] sm:$0xf]
        %v4032 = vld [vmem:[%s11 + $0xd4] sm:$0xf]
        %v4033 = vld [vmem:[%s11 + $0xd8] sm:$0xf]
        %v4034 = vld [vmem:[%s11 + $0xdc] sm:$0xf]
        %v4035 = vld [vmem:[%s11 + $0xe0] sm:$0xf]
        %v4036 = vld [vmem:[%s11 + $0xe4] sm:$0xf]
        %v4037 = vld [vmem:[%s11 + $0xe8] sm:$0xf]
        %v4038 = vld [vmem:[%s11 + $0xec] sm:$0xf]
        %v4039 = vld [vmem:[%s11 + $0xf0] sm:$0xf]
        %v4040 = vld [vmem:[%s11 + $0xf4] sm:$0xf]
        %v4041 = vld [vmem:[%s11 + $0xf8] sm:$0xf]
        %v4042 = vld [vmem:[%s11 + $0xfc] sm:$0xf]
        %v4043 = vld [vmem:[%s12] sm:$0x1]
        %v4045 = vlaneseq
        %v4046 = vshrl.u32 %v4045, 7
        %v4047 = vsub.s32 0, %v4046
        %v4048 = vrot.slane %v4043, %v4047
        %v4114 = vunpack.c.l.b16 %v3979
        %v4115 = vunpack.c.l.b16 %v3980
        %v4116 = vunpack.c.l.b16 %v3981
        %v4117 = vunpack.c.l.b16 %v3982
        %v4118 = vunpack.c.l.b16 %v3983
        %v4119 = vunpack.c.l.b16 %v3984
        %v4120 = vunpack.c.l.b16 %v3985
        %v4121 = vunpack.c.l.b16 %v3986
        %v4122 = vunpack.c.l.b16 %v3987
        %v4123 = vunpack.c.l.b16 %v3988
        %v4124 = vunpack.c.l.b16 %v3989
        %v4125 = vunpack.c.l.b16 %v3990
        %v4126 = vunpack.c.l.b16 %v3991
        %v4127 = vunpack.c.l.b16 %v3992
        %v4128 = vunpack.c.l.b16 %v3993
        %v4129 = vunpack.c.l.b16 %v3994
        %v4130 = vunpack.c.l.b16 %v3995
        %v4131 = vunpack.c.l.b16 %v3996
        %v4132 = vunpack.c.l.b16 %v3997
        %v4133 = vunpack.c.l.b16 %v3998
        %v4134 = vunpack.c.l.b16 %v3999
        %v4135 = vunpack.c.l.b16 %v4000
        %v4136 = vunpack.c.l.b16 %v4001
        %v4137 = vunpack.c.l.b16 %v4002
        %v4138 = vunpack.c.l.b16 %v4003
        %v4139 = vunpack.c.l.b16 %v4004
        %v4140 = vunpack.c.l.b16 %v4005
        %v4141 = vunpack.c.l.b16 %v4006
        %v4142 = vunpack.c.l.b16 %v4007
        %v4143 = vunpack.c.l.b16 %v4008
        %v4144 = vunpack.c.l.b16 %v4009
        %v4145 = vunpack.c.l.b16 %v4010
        %v4146 = vunpack.c.l.b16 %v4011
        %v4147 = vunpack.c.l.b16 %v4012
        %v4148 = vunpack.c.l.b16 %v4013
        %v4149 = vunpack.c.l.b16 %v4014
        %v4150 = vunpack.c.l.b16 %v4015
        %v4151 = vunpack.c.l.b16 %v4016
        %v4152 = vunpack.c.l.b16 %v4017
        %v4153 = vunpack.c.l.b16 %v4018
        %v4154 = vunpack.c.l.b16 %v4019
        %v4155 = vunpack.c.l.b16 %v4020
        %v4156 = vunpack.c.l.b16 %v4021
        %v4157 = vunpack.c.l.b16 %v4022
        %v4158 = vunpack.c.l.b16 %v4023
        %v4159 = vunpack.c.l.b16 %v4024
        %v4160 = vunpack.c.l.b16 %v4025
        %v4161 = vunpack.c.l.b16 %v4026
        %v4162 = vunpack.c.l.b16 %v4027
        %v4163 = vunpack.c.l.b16 %v4028
        %v4164 = vunpack.c.l.b16 %v4029
        %v4165 = vunpack.c.l.b16 %v4030
        %v4166 = vunpack.c.l.b16 %v4031
        %v4167 = vunpack.c.l.b16 %v4032
        %v4168 = vunpack.c.l.b16 %v4033
        %v4169 = vunpack.c.l.b16 %v4034
        %v4170 = vunpack.c.l.b16 %v4035
        %v4171 = vunpack.c.l.b16 %v4036
        %v4172 = vunpack.c.l.b16 %v4037
        %v4173 = vunpack.c.l.b16 %v4038
        %v4174 = vunpack.c.l.b16 %v4039
        %v4175 = vunpack.c.l.b16 %v4040
        %v4176 = vunpack.c.l.b16 %v4041
        %v4177 = vunpack.c.l.b16 %v4042
        %v4178 = vpack.c.b16 %v4115, %v4114
        %v4179 = vpack.c.b16 %v4117, %v4116
        %v4180 = vpack.c.b16 %v4119, %v4118
        %v4181 = vpack.c.b16 %v4121, %v4120
        %v4182 = vpack.c.b16 %v4123, %v4122
        %v4183 = vpack.c.b16 %v4125, %v4124
        %v4184 = vpack.c.b16 %v4127, %v4126
        %v4185 = vpack.c.b16 %v4129, %v4128
        %v4186 = vpack.c.b16 %v4131, %v4130
        %v4187 = vpack.c.b16 %v4133, %v4132
        %v4188 = vpack.c.b16 %v4135, %v4134
        %v4189 = vpack.c.b16 %v4137, %v4136
        %v4190 = vpack.c.b16 %v4139, %v4138
        %v4191 = vpack.c.b16 %v4141, %v4140
        %v4192 = vpack.c.b16 %v4143, %v4142
        %v4193 = vpack.c.b16 %v4145, %v4144
        %v4194 = vpack.c.b16 %v4147, %v4146
        %v4195 = vpack.c.b16 %v4149, %v4148
        %v4196 = vpack.c.b16 %v4151, %v4150
        %v4197 = vpack.c.b16 %v4153, %v4152
        %v4198 = vpack.c.b16 %v4155, %v4154
        %v4199 = vpack.c.b16 %v4157, %v4156
        %v4200 = vpack.c.b16 %v4159, %v4158
        %v4201 = vpack.c.b16 %v4161, %v4160
        %v4202 = vpack.c.b16 %v4163, %v4162
        %v4203 = vpack.c.b16 %v4165, %v4164
        %v4204 = vpack.c.b16 %v4167, %v4166
        %v4205 = vpack.c.b16 %v4169, %v4168
        %v4206 = vpack.c.b16 %v4171, %v4170
        %v4207 = vpack.c.b16 %v4173, %v4172
        %v4208 = vpack.c.b16 %v4175, %v4174
        %v4209 = vpack.c.b16 %v4177, %v4176
        %4242 = vmatprep.subr.bf16.mxu0 0
        %4243 = vmatpush1.bf16.msra.mxu0 %v4178
        %4244 = vmatprep.subr.bf16.mxu0 0
        %4245 = vmatpush1.bf16.msra.mxu0 %v4179
        %4246 = vmatprep.subr.bf16.mxu0 0
        %4247 = vmatpush1.bf16.msra.mxu0 %v4180
        %4248 = vmatprep.subr.bf16.mxu0 0
        %4249 = vmatpush1.bf16.msra.mxu0 %v4181
        %4250 = vmatprep.subr.bf16.mxu0 0
        %4251 = vmatpush1.bf16.msra.mxu0 %v4182
        %4252 = vmatprep.subr.bf16.mxu0 0
        %4253 = vmatpush1.bf16.msra.mxu0 %v4183
        %4254 = vmatprep.subr.bf16.mxu0 0
        %4255 = vmatpush1.bf16.msra.mxu0 %v4184
        %4256 = vmatprep.subr.bf16.mxu0 0
        %4257 = vmatpush1.bf16.msra.mxu0 %v4185
        %4258 = vmatprep.subr.bf16.mxu0 0
        %4259 = vmatpush1.bf16.msra.mxu0 %v4186
        %4260 = vmatprep.subr.bf16.mxu0 0
        %4261 = vmatpush1.bf16.msra.mxu0 %v4187
        %4262 = vmatprep.subr.bf16.mxu0 0
        %4263 = vmatpush1.bf16.msra.mxu0 %v4188
        %4264 = vmatprep.subr.bf16.mxu0 0
        %4265 = vmatpush1.bf16.msra.mxu0 %v4189
        %4266 = vmatprep.subr.bf16.mxu0 0
        %4267 = vmatpush1.bf16.msra.mxu0 %v4190
        %4268 = vmatprep.subr.bf16.mxu0 0
        %4269 = vmatpush1.bf16.msra.mxu0 %v4191
        %4270 = vmatprep.subr.bf16.mxu0 0
        %4271 = vmatpush1.bf16.msra.mxu0 %v4192
        %4272 = vmatprep.subr.bf16.mxu0 0
        %4273 = vmatpush1.bf16.msra.mxu0 %v4193
        %4274 = vmatprep.mubr.bf16.mxu0 %v3948
        %4275 = vmatmul.mubr.bf16.gmra.mrb[0].mxu0 %v3947
        %v4276 = vpop.f32.mrb[0].mxu0
        %v4277 = vadd.f32 %v4048, %v4276
        %v4278 = vpop.f32.mrb[0].mxu0
        %v4279 = vpop.f32.mrb[0].mxu0
        %v4280 = vadd.f32 %v4048, %v4279
        %v4281 = vpop.f32.mrb[0].mxu0
        %4282 = vmatprep.mubr.bf16.mxu0 %v3952
        %4283 = vmatmul.mubr.bf16.gmra.mrb[0].mxu0 %v3951
        %v4284 = vpop.f32.mrb[0].mxu0
        %v4285 = vadd.f32 %v4048, %v4284
        %v4286 = vpop.f32.mrb[0].mxu0
        %v4287 = vpop.f32.mrb[0].mxu0
        %v4288 = vadd.f32 %v4048, %v4287
        %v4289 = vpop.f32.mrb[0].mxu0
        %4290 = vmatprep.mubr.bf16.mxu0 %v3956
        %4291 = vmatmul.mubr.bf16.gmra.mrb[0].mxu0 %v3955
        %v4292 = vpop.f32.mrb[0].mxu0
        %v4293 = vadd.f32 %v4048, %v4292
        %v4294 = vpop.f32.mrb[0].mxu0
        %v4295 = vpop.f32.mrb[0].mxu0
        %v4296 = vadd.f32 %v4048, %v4295
        %v4297 = vpop.f32.mrb[0].mxu0
        %4298 = vmatprep.mubr.bf16.mxu0 %v3960
        %4299 = vmatmul.mubr.bf16.gmra.mrb[0].mxu0 %v3959
        %v4300 = vpop.f32.mrb[0].mxu0
        %v4301 = vadd.f32 %v4048, %v4300
        %v4302 = vpop.f32.mrb[0].mxu0
        %v4303 = vpop.f32.mrb[0].mxu0
        %v4304 = vadd.f32 %v4048, %v4303
        %v4305 = vpop.f32.mrb[0].mxu0
        %4306 = vmatprep.mubr.bf16.mxu0 %v3964
        %4307 = vmatmul.mubr.bf16.gmra.mrb[0].mxu0 %v3963
        %v4308 = vpop.f32.mrb[0].mxu0
        %v4309 = vadd.f32 %v4048, %v4308
        %v4310 = vpop.f32.mrb[0].mxu0
        %v4311 = vpop.f32.mrb[0].mxu0
        %v4312 = vadd.f32 %v4048, %v4311
        %v4313 = vpop.f32.mrb[0].mxu0
        %4314 = vmatprep.mubr.bf16.mxu0 %v3968
        %4315 = vmatmul.mubr.bf16.gmra.mrb[0].mxu0 %v3967
        %v4316 = vpop.f32.mrb[0].mxu0
        %v4317 = vadd.f32 %v4048, %v4316
        %v4318 = vpop.f32.mrb[0].mxu0
        %v4319 = vpop.f32.mrb[0].mxu0
        %v4320 = vadd.f32 %v4048, %v4319
        %v4321 = vpop.f32.mrb[0].mxu0
        %4322 = vmatprep.mubr.bf16.mxu0 %v3972
        %4323 = vmatmul.mubr.bf16.gmra.mrb[0].mxu0 %v3971
        %v4324 = vpop.f32.mrb[0].mxu0
        %v4325 = vadd.f32 %v4048, %v4324
        %v4326 = vpop.f32.mrb[0].mxu0
        %v4327 = vpop.f32.mrb[0].mxu0
        %v4328 = vadd.f32 %v4048, %v4327
        %v4329 = vpop.f32.mrb[0].mxu0
        %4330 = vmatprep.mubr.bf16.mxu0 %v3976
        %4331 = vmatmul.mubr.bf16.gmra.mrb[0].mxu0 %v3975
        %v4332 = vpop.f32.mrb[0].mxu0
        %v4333 = vadd.f32 %v4048, %v4332
        %v4334 = vpop.f32.mrb[0].mxu0
        %v4335 = vpop.f32.mrb[0].mxu0
        %v4336 = vadd.f32 %v4048, %v4335
        %v4337 = vpop.f32.mrb[0].mxu0
        %4338 = vdwg.mxu0
        %4339 = vmatprep.subr.bf16.mxu0 0
        %4340 = vmatpush1.bf16.msra.mxu0 %v4194
        %4341 = vmatprep.subr.bf16.mxu0 0
        %4342 = vmatpush1.bf16.msra.mxu0 %v4195
        %4343 = vmatprep.subr.bf16.mxu0 0
        %4344 = vmatpush1.bf16.msra.mxu0 %v4196
        %4345 = vmatprep.subr.bf16.mxu0 0
        %4346 = vmatpush1.bf16.msra.mxu0 %v4197
        %4347 = vmatprep.subr.bf16.mxu0 0
        %4348 = vmatpush1.bf16.msra.mxu0 %v4198
        %4349 = vmatprep.subr.bf16.mxu0 0
        %4350 = vmatpush1.bf16.msra.mxu0 %v4199
        %4351 = vmatprep.subr.bf16.mxu0 0
        %4352 = vmatpush1.bf16.msra.mxu0 %v4200
        %4353 = vmatprep.subr.bf16.mxu0 0
        %4354 = vmatpush1.bf16.msra.mxu0 %v4201
        %4355 = vmatprep.subr.bf16.mxu0 0
        %4356 = vmatpush1.bf16.msra.mxu0 %v4202
        %4357 = vmatprep.subr.bf16.mxu0 0
        %4358 = vmatpush1.bf16.msra.mxu0 %v4203
        %4359 = vmatprep.subr.bf16.mxu0 0
        %4360 = vmatpush1.bf16.msra.mxu0 %v4204
        %4361 = vmatprep.subr.bf16.mxu0 0
        %4362 = vmatpush1.bf16.msra.mxu0 %v4205
        %4363 = vmatprep.subr.bf16.mxu0 0
        %4364 = vmatpush1.bf16.msra.mxu0 %v4206
        %4365 = vmatprep.subr.bf16.mxu0 0
        %4366 = vmatpush1.bf16.msra.mxu0 %v4207
        %4367 = vmatprep.subr.bf16.mxu0 0
        %4368 = vmatpush1.bf16.msra.mxu0 %v4208
        %4369 = vmatprep.subr.bf16.mxu0 0
        %4370 = vmatpush1.bf16.msra.mxu0 %v4209
        %4371 = vmatprep.mubr.bf16.mxu0 %v3950
        %4372 = vmatmul.mubr.bf16.gmra.mrb[0].mxu0 %v3949
        %v4373 = vpop.f32.mrb[0].mxu0
        %v4374 = vadd.f32 %v4277, %v4373
        %v4375 = vpop.f32.mrb[0].mxu0
        %v4376 = vpop.f32.mrb[0].mxu0
        %v4377 = vadd.f32 %v4280, %v4376
        %v4378 = vpop.f32.mrb[0].mxu0
        %4379 = vmatprep.mubr.bf16.mxu0 %v3954
        %4380 = vmatmul.mubr.bf16.gmra.mrb[0].mxu0 %v3953
        %v4381 = vpop.f32.mrb[0].mxu0
        %v4382 = vadd.f32 %v4285, %v4381
        %v4383 = vpop.f32.mrb[0].mxu0
        %v4384 = vpop.f32.mrb[0].mxu0
        %v4385 = vadd.f32 %v4288, %v4384
        %v4386 = vpop.f32.mrb[0].mxu0
        %4387 = vmatprep.mubr.bf16.mxu0 %v3958
        %4388 = vmatmul.mubr.bf16.gmra.mrb[0].mxu0 %v3957
        %v4389 = vpop.f32.mrb[0].mxu0
        %v4390 = vadd.f32 %v4293, %v4389
        %v4391 = vpop.f32.mrb[0].mxu0
        %v4392 = vpop.f32.mrb[0].mxu0
        %v4393 = vadd.f32 %v4296, %v4392
        %v4394 = vpop.f32.mrb[0].mxu0
        %4395 = vmatprep.mubr.bf16.mxu0 %v3962
        %4396 = vmatmul.mubr.bf16.gmra.mrb[0].mxu0 %v3961
        %v4397 = vpop.f32.mrb[0].mxu0
        %v4398 = vadd.f32 %v4301, %v4397
        %v4399 = vpop.f32.mrb[0].mxu0
        %v4400 = vpop.f32.mrb[0].mxu0
        %v4401 = vadd.f32 %v4304, %v4400
        %v4402 = vpop.f32.mrb[0].mxu0
        %4403 = vmatprep.mubr.bf16.mxu0 %v3966
        %4404 = vmatmul.mubr.bf16.gmra.mrb[0].mxu0 %v3965
        %v4405 = vpop.f32.mrb[0].mxu0
        %v4406 = vadd.f32 %v4309, %v4405
        %v4407 = vpop.f32.mrb[0].mxu0
        %v4408 = vpop.f32.mrb[0].mxu0
        %v4409 = vadd.f32 %v4312, %v4408
        %v4410 = vpop.f32.mrb[0].mxu0
        %4411 = vmatprep.mubr.bf16.mxu0 %v3970
        %4412 = vmatmul.mubr.bf16.gmra.mrb[0].mxu0 %v3969
        %v4413 = vpop.f32.mrb[0].mxu0
        %v4414 = vadd.f32 %v4317, %v4413
        %v4415 = vpop.f32.mrb[0].mxu0
        %v4416 = vpop.f32.mrb[0].mxu0
        %v4417 = vadd.f32 %v4320, %v4416
        %v4418 = vpop.f32.mrb[0].mxu0
        %4419 = vmatprep.mubr.bf16.mxu0 %v3974
        %4420 = vmatmul.mubr.bf16.gmra.mrb[0].mxu0 %v3973
        %v4421 = vpop.f32.mrb[0].mxu0
        %v4422 = vadd.f32 %v4325, %v4421
        %v4423 = vpop.f32.mrb[0].mxu0
        %v4424 = vpop.f32.mrb[0].mxu0
        %v4425 = vadd.f32 %v4328, %v4424
        %v4426 = vpop.f32.mrb[0].mxu0
        %4427 = vmatprep.mubr.bf16.mxu0 %v3978
        %4428 = vmatmul.mubr.bf16.gmra.mrb[0].mxu0 %v3977
        %v4429 = vpop.f32.mrb[0].mxu0
        %v4430 = vadd.f32 %v4333, %v4429
        %v4431 = vpop.f32.mrb[0].mxu0
        %v4432 = vpop.f32.mrb[0].mxu0
        %v4433 = vadd.f32 %v4336, %v4432
        %v4434 = vpop.f32.mrb[0].mxu0
        %4435 = vdwg.mxu0
        %v4436 = vtanh.pop %v4374
        %v4437 = vtanh.pop %v4377
        %v4438 = vtanh.pop %v4382
        %v4439 = vtanh.pop %v4385
        %v4440 = vtanh.pop %v4390
        %v4441 = vtanh.pop %v4393
        %v4442 = vtanh.pop %v4398
        %v4443 = vtanh.pop %v4401
        %v4444 = vtanh.pop %v4406
        %v4445 = vtanh.pop %v4409
        %v4446 = vtanh.pop %v4414
        %v4447 = vtanh.pop %v4417
        %v4448 = vtanh.pop %v4422
        %v4449 = vtanh.pop %v4425
        %v4450 = vtanh.pop %v4430
        %v4451 = vtanh.pop %v4433
        %4452 = vst [vmem:[%s494] sm:$0xff] %v4436
        %4453 = vst [vmem:[%s494 + $0x8] sm:$0xff] %v4437
        %4454 = vst [vmem:[%s494 + $0x10] sm:$0xff] %v4438
        %4455 = vst [vmem:[%s494 + $0x18] sm:$0xff] %v4439
        %4456 = vst [vmem:[%s494 + $0x20] sm:$0xff] %v4440
        %4457 = vst [vmem:[%s494 + $0x28] sm:$0xff] %v4441
        %4458 = vst [vmem:[%s494 + $0x30] sm:$0xff] %v4442
        %4459 = vst [vmem:[%s494 + $0x38] sm:$0xff] %v4443
        %4460 = vst [vmem:[%s494 + $0x40] sm:$0xff] %v4444
        %4461 = vst [vmem:[%s494 + $0x48] sm:$0xff] %v4445
        %4462 = vst [vmem:[%s494 + $0x50] sm:$0xff] %v4446
        %4463 = vst [vmem:[%s494 + $0x58] sm:$0xff] %v4447
        %4464 = vst [vmem:[%s494 + $0x60] sm:$0xff] %v4448
        %4465 = vst [vmem:[%s494 + $0x68] sm:$0xff] %v4449
        %4466 = vst [vmem:[%s494 + $0x70] sm:$0xff] %v4450
        %4467 = vst [vmem:[%s494 + $0x78] sm:$0xff] %v4451
        %s4468 = smul.u32 16, %s26
        %p4469 = scmp.lt.s32.totalorder %s4468, 31
        %s4470 = scalar_select %p4469, %s4468, 31
        %s4471 = smul.addr %s4470, 8
        %s4472 = scalar_lea.vmem %s13, %s4471
        // Predicated region
        $region81: #{_mapping_impl.1} parent=71 // pred_check
          %p4473 = pneg %p327
        $region82: #{_mapping_impl.1} parent=71 // pred_check_branch
          %4475 = sbr.rel (%p4473) target = $region84
        $region83: #{_mapping_impl.1} parent=71 // pred_region
          %s4476 = smul.u32 16, %s26
        $region84: #{_mapping_impl.1} parent=71 // pred_fallthru
          _
      $region72: #{_mapping_impl.1} parent=5 // pred_fallthru
        _
      %p4477 = scmp.le.s32.totalorder 2, %s21
      // Predicated region
      $region85: #{_mapping_impl.1} parent=5 // pred_check
        %p4478 = pneg %p4477
      $region86: #{_mapping_impl.1} parent=5 // pred_check_branch
        %4480 = sbr.rel (%p4478) target = $region88
      $region87: #{_mapping_impl.1} parent=5 // pred_region
        %s4481 = ssub.s32 %s21, 2
        // Predicated region
        $region89: #{_mapping_impl.1} parent=87 // pred_check
          %p4482 = pneg %p333
        $region90: #{_mapping_impl.1} parent=87 // pred_check_branch
          %4484 = sbr.rel (%p4482) target = $region92
        $region91: #{_mapping_impl.1} parent=87 // pred_region
          %s4485 = smul.u32 16, %s27
          %p4486 = scmp.lt.s32.totalorder %s4485, 31
          %s4487 = scalar_select %p4486, %s4485, 31
          %s4488 = smul.addr %s4487, 8
          %s4489 = scalar_lea.vmem %s13, %s4488
        $region92: #{_mapping_impl.1} parent=87 // pred_fallthru
          _
      $region88: #{_mapping_impl.1} parent=5 // pred_fallthru
        _
    $region6: #{_mapping_impl.1} parent=1 // loop_footer
      %s25 = sadd.s32 1, %s21
    $region7: #{_mapping_impl.1} parent=1 // loop_footer_branch
      %20 = sbr.rel target = $region3
    $region8: #{_mapping_impl.1} parent=1 // loop_exit
      _
    %4490 = vsyncpa [#allocation3], 1
    %s4491 = scalar_lea.sflag [#allocation3], 1
    %4492 = vsyncpa %s4491, 1
    %4493 = vsyncpa [#allocation5], 1

</llo_original>
